<compile_context>
chip_gen: v7x
topology: tpu7x:2x2x1
jax: 0.10.0
libtpu: 0.0.40
codegen_flags: <defaults>
</compile_context>

<pallas_src>
import functools

import jax
import jax.numpy as jnp
from jax.experimental import pallas as pl
from jax.experimental.pallas import tpu as pltpu

N = 2          # batch
C = 4          # state channels (ShapeData[0])
H = 16
W = 16
DIM_LSTM = 8   # hidden channels of the gradient LSTM
N_GRAD = 4     # NiterGrad


def _solver_kernel(x0_ref, yobs_ref, mask_ref,
                   mae_ref, wobs2_ref,
                   wx_ref, wh_ref, b_ref, wout_ref, bout_ref,
                   x_out_ref, h_out_ref, c_out_ref, ng_out_ref,
                   *, n_grad, dim_lstm, n_ch):
    # Feature-major: (C, P) / (D, P) / (4D, P), P on the lane axis.
    x = x0_ref[...]                     # (C, P)
    yobs = yobs_ref[...]                # (C, P)
    mask = mask_ref[...]                # (C, P)
    wobs2 = wobs2_ref[...]              # (C, 1)

    cdim = n_ch
    d = dim_lstm
    p = x.shape[1]

    # ---- loop-invariant obs-term factors (hoisted out of the NGrad loop) ----
    #   d(obs loss)/dx = wobs2 * mask^2 * (x - yobs) = obs_w * x - obs_b
    obs_w = wobs2 * mask * mask         # (C, P)
    obs_b = obs_w * yobs                # (C, P)

    # Weight columns loaded once (read-only refs; keep loads out of the loop).
    mae_cols = [mae_ref[k] for k in range(cdim)]     # each (C, 1)
    wx_cols = [wx_ref[k] for k in range(cdim)]       # each (4D, 1)
    wh_cols = [wh_ref[k] for k in range(d)]          # each (4D, 1)
    wout_cols = [wout_ref[k] for k in range(d)]      # each (C, 1)

    # Biases broadcast once (kept out of the unrolled loop).
    b_full = jnp.broadcast_to(b_ref[...], (4 * d, p))        # (4D, P)
    bout_full = jnp.broadcast_to(bout_ref[...], (cdim, p))   # (C, P)

    h = jnp.zeros((d, p), jnp.float32)
    c = jnp.zeros((d, p), jnp.float32)
    inv_ngrad = jnp.float32(1.0 / n_grad)
    msq = jnp.float32(0.0)

    # NGrad is small & static -> fully unrolled; whole state stays in VMEM/vregs.
    for _ in range(n_grad):
        # ---- closed-form gradient of the quadratic variational cost ----
        #   g = M_ae @ x + obs_w * x - obs_b   (M_ae = (Wphi-I)^T diag(wae2) (Wphi-I))
        g = obs_w * x - obs_b
        for k in range(cdim):
            g = g + mae_cols[k] * x[k:k + 1, :]          # (C,1)*(1,P) broadcast-FMA
        # normgrad: rsqrt (EUP) multiply instead of sqrt + vector divide
        msq = jnp.mean(g * g)
        gn = g * jax.lax.rsqrt(msq)
        # ---- model_Grad: 1x1 ConvLSTM gates = Wx^T gn + Wh^T h + b ----
        gates = b_full
        for k in range(cdim):
            gates = gates + wx_cols[k] * gn[k:k + 1, :]  # (4D,1)*(1,P)
        for k in range(d):
            gates = gates + wh_cols[k] * h[k:k + 1, :]   # (4D,1)*(1,P)
        # sublane-aligned gate slices (chunks of D=8 rows -> free views)
        i_g = jax.nn.sigmoid(gates[0:d, :])
        f_g = jax.nn.sigmoid(gates[d:2 * d, :])
        g_g = jnp.tanh(gates[2 * d:3 * d, :])
        o_g = jax.nn.sigmoid(gates[3 * d:4 * d, :])
        c = f_g * c + i_g * g_g
        h = o_g * jnp.tanh(c)
        # output projection: grad_out = Wout^T h + bout, then x_{k+1} = x - grad_out/NGrad
        grad_out = bout_full
        for k in range(d):
            grad_out = grad_out + wout_cols[k] * h[k:k + 1, :]
        x = x - grad_out * inv_ngrad

    x_out_ref[...] = x
    h_out_ref[...] = h
    c_out_ref[...] = c
    # Exported normgrad of the final iteration = sqrt(mean(g^2)), computed once.
    # (Kept as a (1,1) VMEM output for lowering robustness.)
    ng_out_ref[...] = jnp.reshape(jnp.sqrt(msq), (1, 1))


def solver_grad_4dvarnn(x0, yobs, mask, params, n_grad=N_GRAD):
    n, ch, hh, ww = x0.shape
    p = n * hh * ww
    d = params["Wh"].shape[0]

    def to_fm(a):
        # NCHW -> feature-major (C, N*H*W); lane axis = pixels (multiple of 128).
        return jnp.transpose(a, (1, 0, 2, 3)).reshape(a.shape[1], p)

    def from_fm(a, cdim):
        return jnp.transpose(a.reshape(cdim, n, hh, ww), (1, 0, 2, 3))

    x_fm, y_fm, m_fm = to_fm(x0), to_fm(yobs), to_fm(mask)

    # Fold alpha^2, the 1/(N*H*H) normalization (H twice, as in compute_WeightedLoss)
    # and the factor 2 from d(z^2)/dz into the weights, then fuse the whole AE
    # gradient into one CxC matrix: M_ae = (Wphi-I)^T diag(2 aAE^2/(NHH) WAE^2) (Wphi-I).
    coef_ae = 2.0 * params["alphaAE"] ** 2 / (n * hh * hh)
    coef_obs = 2.0 * params["alphaObs"] ** 2 / (n * hh * hh)
    bmat = (params["Wphi"] - jnp.eye(ch, dtype=jnp.float32)).astype(jnp.float32)
    m_ae = bmat.T @ ((coef_ae * params["WAE"] ** 2)[:, None] * bmat)
    mae_cols = m_ae.T.reshape(ch, ch, 1).astype(jnp.float32)   # mae_cols[k] = M_ae[:, k]
    wobs2 = (coef_obs * params["WObs"][0] ** 2).reshape(ch, 1).astype(jnp.float32)

    # Weight matrices pre-shaped so that ref[k] yields the k-th broadcast column.
    wx_cols = params["Wx"].reshape(ch, 4 * d, 1).astype(jnp.float32)
    wh_cols = params["Wh"].reshape(d, 4 * d, 1).astype(jnp.float32)
    wout_cols = params["Wout"].reshape(d, ch, 1).astype(jnp.float32)
    b_col = params["b"].reshape(4 * d, 1).astype(jnp.float32)
    bout_col = params["bout"].reshape(ch, 1).astype(jnp.float32)

    vmem = pl.BlockSpec(memory_space=pltpu.MemorySpace.VMEM)
    out_shape = (
        jax.ShapeDtypeStruct((ch, p), jnp.float32),   # x_k_plus_1
        jax.ShapeDtypeStruct((d, p), jnp.float32),    # hidden
        jax.ShapeDtypeStruct((d, p), jnp.float32),    # cell
        jax.ShapeDtypeStruct((1, 1), jnp.float32),    # normgrad_
    )
    kernel = functools.partial(_solver_kernel, n_grad=n_grad, dim_lstm=d, n_ch=ch)
    x_o, h_o, c_o, ng = pl.pallas_call(
        kernel,
        out_shape=out_shape,
        in_specs=[vmem] * 10,
        out_specs=(vmem, vmem, vmem, vmem),
    )(x_fm, y_fm, m_fm, mae_cols, wobs2,
      wx_cols, wh_cols, b_col, wout_cols, bout_col)

    # TODO(synk): for realistic 4DVarNet resolutions, tile the pixel axis with a
    # grid (dimension_semantics=("parallel",)) and a two-pass normgrad reduction.
    return from_fm(x_o, ch), from_fm(h_o, d), from_fm(c_o, d), ng[0, 0]


# ---------------------------------------------------------------------------
# Pure-JAX reference mirroring the PyTorch module 1:1 (NCHW, jax.grad for
# torch.autograd.grad) — used only to validate the kernel.
# ---------------------------------------------------------------------------
def reference_forward(x0, yobs, mask, params, n_grad=N_GRAD):
    wphi, wae, wobs = params["Wphi"], params["WAE"], params["WObs"]
    a_ae, a_obs = params["alphaAE"], params["alphaObs"]
    wx, wh, b = params["Wx"], params["Wh"], params["b"]
    wout, bout = params["Wout"], params["bout"]
    d = wh.shape[0]

    def weighted_loss(x2, w):
        l = jnp.sum(x2 ** 2, axis=3)
        l = jnp.sum(l, axis=2)
        l = jnp.sum(l, axis=0)
        l = jnp.sum(l * w)
        return l / (x2.shape[0] * x2.shape[2] * x2.shape[2])

    def var_cost(x):
        dy = (x - yobs) * mask
        xpred = jnp.einsum("oc,nchw->nohw", wphi, x)
        loss = a_ae ** 2 * weighted_loss(xpred - x, wae ** 2)
        loss = loss + a_obs ** 2 * weighted_loss(dy, wobs[0] ** 2)
        return loss

    grad_fn = jax.grad(var_cost)

    def model_grad(hidden, cell, grad, normgrad):
        gn = grad / normgrad
        gates = (jnp.einsum("cj,nchw->njhw", wx, gn)
                 + jnp.einsum("dj,ndhw->njhw", wh, hidden)
                 + b[None, :, None, None])
        i_g = jax.nn.sigmoid(gates[:, 0:d])
        f_g = jax.nn.sigmoid(gates[:, d:2 * d])
        g_g = jnp.tanh(gates[:, 2 * d:3 * d])
        o_g = jax.nn.sigmoid(gates[:, 3 * d:4 * d])
        cell = f_g * cell + i_g * g_g
        hidden = o_g * jnp.tanh(cell)
        gout = jnp.einsum("dc,ndhw->nchw", wout, hidden) + bout[None, :, None, None]
        return gout, hidden, cell

    nn_, _, hh_, ww_ = x0.shape
    x = x0
    hidden = jnp.zeros((nn_, d, hh_, ww_), jnp.float32)
    cell = jnp.zeros_like(hidden)
    ng = jnp.float32(0.0)
    for _ in range(n_grad):
        g = grad_fn(x)
        ng = jnp.sqrt(jnp.mean(g ** 2))
        gout, hidden, cell = model_grad(hidden, cell, g, ng)
        x = x - gout * (1.0 / n_grad)
    return x, hidden, cell, ng


if __name__ == "__main__":
    key = jax.random.PRNGKey(0)
    ks = jax.random.split(key, 11)
    x0 = jax.random.normal(ks[0], (N, C, H, W), jnp.float32)
    yobs = jax.random.normal(ks[1], (N, C, H, W), jnp.float32)
    mask = (jax.random.uniform(ks[2], (N, C, H, W)) > 0.3).astype(jnp.float32)

    params = {
        "Wphi": 0.3 * jax.random.normal(ks[3], (C, C), jnp.float32),
        "WAE": 1.0 + 0.1 * jax.random.normal(ks[4], (C,), jnp.float32),
        "WObs": 1.0 + 0.1 * jax.random.normal(ks[5], (1, C), jnp.float32),  # DimObs = 1
        "alphaAE": jnp.float32(0.7),
        "alphaObs": jnp.float32(0.9),
        "Wx": 0.2 * jax.random.normal(ks[6], (C, 4 * DIM_LSTM), jnp.float32),
        "Wh": 0.2 * jax.random.normal(ks[7], (DIM_LSTM, 4 * DIM_LSTM), jnp.float32),
        "b": 0.1 * jax.random.normal(ks[8], (4 * DIM_LSTM,), jnp.float32),
        "Wout": 0.2 * jax.random.normal(ks[9], (DIM_LSTM, C), jnp.float32),
        "bout": 0.1 * jax.random.normal(ks[10], (C,), jnp.float32),
    }

    out = jax.block_until_ready(solver_grad_4dvarnn(x0, yobs, mask, params))
    x_out, hid, cel, ng = out
    x_ref, h_ref, c_ref, ng_ref = reference_forward(x0, yobs, mask, params)

    assert bool(jnp.allclose(x_out, x_ref, rtol=1e-3, atol=1e-3)), "x mismatch"
    assert bool(jnp.allclose(hid, h_ref, rtol=1e-3, atol=1e-3)), "hidden mismatch"
    assert bool(jnp.allclose(cel, c_ref, rtol=1e-3, atol=1e-3)), "cell mismatch"
    assert bool(jnp.allclose(ng, ng_ref, rtol=1e-3, atol=1e-3)), "normgrad mismatch"
    print("KERNEL_OK")
</pallas_src>

<mosaic_0001>
module attributes {stable_mosaic.version = 11 : i64} {
  func.func @_solver_kernel(%arg0: memref<4x512xf32, #tpu.memory_space<vmem>>, %arg1: memref<4x512xf32, #tpu.memory_space<vmem>>, %arg2: memref<4x512xf32, #tpu.memory_space<vmem>>, %arg3: memref<4x4x1xf32, #tpu.memory_space<vmem>>, %arg4: memref<4x1xf32, #tpu.memory_space<vmem>>, %arg5: memref<4x32x1xf32, #tpu.memory_space<vmem>>, %arg6: memref<8x32x1xf32, #tpu.memory_space<vmem>>, %arg7: memref<32x1xf32, #tpu.memory_space<vmem>>, %arg8: memref<8x4x1xf32, #tpu.memory_space<vmem>>, %arg9: memref<4x1xf32, #tpu.memory_space<vmem>>, %arg10: memref<4x512xf32, #tpu.memory_space<vmem>>, %arg11: memref<8x512xf32, #tpu.memory_space<vmem>>, %arg12: memref<8x512xf32, #tpu.memory_space<vmem>>, %arg13: memref<1x1xf32, #tpu.memory_space<vmem>>) attributes {dimension_semantics = [], scalar_prefetch = 0 : i64, scratch_operands = 0 : i64, tpu.core_type = #tpu.core_type<tc>} {
    %c0 = arith.constant 0 : index
    %c0_0 = arith.constant 0 : index
    %0 = vector.load %arg0[%c0, %c0_0] : memref<4x512xf32, #tpu.memory_space<vmem>>, vector<4x512xf32>
    %c0_1 = arith.constant 0 : index
    %c0_2 = arith.constant 0 : index
    %1 = vector.load %arg1[%c0_1, %c0_2] : memref<4x512xf32, #tpu.memory_space<vmem>>, vector<4x512xf32>
    %c0_3 = arith.constant 0 : index
    %c0_4 = arith.constant 0 : index
    %2 = vector.load %arg2[%c0_3, %c0_4] : memref<4x512xf32, #tpu.memory_space<vmem>>, vector<4x512xf32>
    %c0_5 = arith.constant 0 : index
    %c0_6 = arith.constant 0 : index
    %3 = vector.load %arg4[%c0_5, %c0_6] : memref<4x1xf32, #tpu.memory_space<vmem>>, vector<4x1xf32>
    %4 = vector.broadcast %3 : vector<4x1xf32> to vector<4x512xf32>
    %5 = arith.mulf %4, %2 : vector<4x512xf32>
    %6 = arith.mulf %5, %2 : vector<4x512xf32>
    %7 = arith.mulf %6, %1 : vector<4x512xf32>
    %c0_7 = arith.constant 0 : index
    %c0_8 = arith.constant 0 : index
    %c0_9 = arith.constant 0 : index
    %8 = vector.load %arg3[%c0_7, %c0_8, %c0_9] : memref<4x4x1xf32, #tpu.memory_space<vmem>>, vector<1x4x1xf32>
    %9 = vector.shape_cast %8 : vector<1x4x1xf32> to vector<4x1xf32>
    %c1 = arith.constant 1 : index
    %c0_10 = arith.constant 0 : index
    %c0_11 = arith.constant 0 : index
    %10 = vector.load %arg3[%c1, %c0_10, %c0_11] : memref<4x4x1xf32, #tpu.memory_space<vmem>>, vector<1x4x1xf32>
    %11 = vector.shape_cast %10 : vector<1x4x1xf32> to vector<4x1xf32>
    %c2 = arith.constant 2 : index
    %c0_12 = arith.constant 0 : index
    %c0_13 = arith.constant 0 : index
    %12 = vector.load %arg3[%c2, %c0_12, %c0_13] : memref<4x4x1xf32, #tpu.memory_space<vmem>>, vector<1x4x1xf32>
    %13 = vector.shape_cast %12 : vector<1x4x1xf32> to vector<4x1xf32>
    %c3 = arith.constant 3 : index
    %c0_14 = arith.constant 0 : index
    %c0_15 = arith.constant 0 : index
    %14 = vector.load %arg3[%c3, %c0_14, %c0_15] : memref<4x4x1xf32, #tpu.memory_space<vmem>>, vector<1x4x1xf32>
    %15 = vector.shape_cast %14 : vector<1x4x1xf32> to vector<4x1xf32>
    %c0_16 = arith.constant 0 : index
    %c0_17 = arith.constant 0 : index
    %c0_18 = arith.constant 0 : index
    %16 = vector.load %arg5[%c0_16, %c0_17, %c0_18] : memref<4x32x1xf32, #tpu.memory_space<vmem>>, vector<1x32x1xf32>
    %17 = vector.shape_cast %16 : vector<1x32x1xf32> to vector<32x1xf32>
    %c1_19 = arith.constant 1 : index
    %c0_20 = arith.constant 0 : index
    %c0_21 = arith.constant 0 : index
    %18 = vector.load %arg5[%c1_19, %c0_20, %c0_21] : memref<4x32x1xf32, #tpu.memory_space<vmem>>, vector<1x32x1xf32>
    %19 = vector.shape_cast %18 : vector<1x32x1xf32> to vector<32x1xf32>
    %c2_22 = arith.constant 2 : index
    %c0_23 = arith.constant 0 : index
    %c0_24 = arith.constant 0 : index
    %20 = vector.load %arg5[%c2_22, %c0_23, %c0_24] : memref<4x32x1xf32, #tpu.memory_space<vmem>>, vector<1x32x1xf32>
    %21 = vector.shape_cast %20 : vector<1x32x1xf32> to vector<32x1xf32>
    %c3_25 = arith.constant 3 : index
    %c0_26 = arith.constant 0 : index
    %c0_27 = arith.constant 0 : index
    %22 = vector.load %arg5[%c3_25, %c0_26, %c0_27] : memref<4x32x1xf32, #tpu.memory_space<vmem>>, vector<1x32x1xf32>
    %23 = vector.shape_cast %22 : vector<1x32x1xf32> to vector<32x1xf32>
    %c0_28 = arith.constant 0 : index
    %c0_29 = arith.constant 0 : index
    %c0_30 = arith.constant 0 : index
    %24 = vector.load %arg6[%c0_28, %c0_29, %c0_30] : memref<8x32x1xf32, #tpu.memory_space<vmem>>, vector<1x32x1xf32>
    %25 = vector.shape_cast %24 : vector<1x32x1xf32> to vector<32x1xf32>
    %c1_31 = arith.constant 1 : index
    %c0_32 = arith.constant 0 : index
    %c0_33 = arith.constant 0 : index
    %26 = vector.load %arg6[%c1_31, %c0_32, %c0_33] : memref<8x32x1xf32, #tpu.memory_space<vmem>>, vector<1x32x1xf32>
    %27 = vector.shape_cast %26 : vector<1x32x1xf32> to vector<32x1xf32>
    %c2_34 = arith.constant 2 : index
    %c0_35 = arith.constant 0 : index
    %c0_36 = arith.constant 0 : index
    %28 = vector.load %arg6[%c2_34, %c0_35, %c0_36] : memref<8x32x1xf32, #tpu.memory_space<vmem>>, vector<1x32x1xf32>
    %29 = vector.shape_cast %28 : vector<1x32x1xf32> to vector<32x1xf32>
    %c3_37 = arith.constant 3 : index
    %c0_38 = arith.constant 0 : index
    %c0_39 = arith.constant 0 : index
    %30 = vector.load %arg6[%c3_37, %c0_38, %c0_39] : memref<8x32x1xf32, #tpu.memory_space<vmem>>, vector<1x32x1xf32>
    %31 = vector.shape_cast %30 : vector<1x32x1xf32> to vector<32x1xf32>
    %c4 = arith.constant 4 : index
    %c0_40 = arith.constant 0 : index
    %c0_41 = arith.constant 0 : index
    %32 = vector.load %arg6[%c4, %c0_40, %c0_41] : memref<8x32x1xf32, #tpu.memory_space<vmem>>, vector<1x32x1xf32>
    %33 = vector.shape_cast %32 : vector<1x32x1xf32> to vector<32x1xf32>
    %c5 = arith.constant 5 : index
    %c0_42 = arith.constant 0 : index
    %c0_43 = arith.constant 0 : index
    %34 = vector.load %arg6[%c5, %c0_42, %c0_43] : memref<8x32x1xf32, #tpu.memory_space<vmem>>, vector<1x32x1xf32>
    %35 = vector.shape_cast %34 : vector<1x32x1xf32> to vector<32x1xf32>
    %c6 = arith.constant 6 : index
    %c0_44 = arith.constant 0 : index
    %c0_45 = arith.constant 0 : index
    %36 = vector.load %arg6[%c6, %c0_44, %c0_45] : memref<8x32x1xf32, #tpu.memory_space<vmem>>, vector<1x32x1xf32>
    %37 = vector.shape_cast %36 : vector<1x32x1xf32> to vector<32x1xf32>
    %c7 = arith.constant 7 : index
    %c0_46 = arith.constant 0 : index
    %c0_47 = arith.constant 0 : index
    %38 = vector.load %arg6[%c7, %c0_46, %c0_47] : memref<8x32x1xf32, #tpu.memory_space<vmem>>, vector<1x32x1xf32>
    %39 = vector.shape_cast %38 : vector<1x32x1xf32> to vector<32x1xf32>
    %c0_48 = arith.constant 0 : index
    %c0_49 = arith.constant 0 : index
    %c0_50 = arith.constant 0 : index
    %40 = vector.load %arg8[%c0_48, %c0_49, %c0_50] : memref<8x4x1xf32, #tpu.memory_space<vmem>>, vector<1x4x1xf32>
    %41 = vector.shape_cast %40 : vector<1x4x1xf32> to vector<4x1xf32>
    %c1_51 = arith.constant 1 : index
    %c0_52 = arith.constant 0 : index
    %c0_53 = arith.constant 0 : index
    %42 = vector.load %arg8[%c1_51, %c0_52, %c0_53] : memref<8x4x1xf32, #tpu.memory_space<vmem>>, vector<1x4x1xf32>
    %43 = vector.shape_cast %42 : vector<1x4x1xf32> to vector<4x1xf32>
    %c2_54 = arith.constant 2 : index
    %c0_55 = arith.constant 0 : index
    %c0_56 = arith.constant 0 : index
    %44 = vector.load %arg8[%c2_54, %c0_55, %c0_56] : memref<8x4x1xf32, #tpu.memory_space<vmem>>, vector<1x4x1xf32>
    %45 = vector.shape_cast %44 : vector<1x4x1xf32> to vector<4x1xf32>
    %c3_57 = arith.constant 3 : index
    %c0_58 = arith.constant 0 : index
    %c0_59 = arith.constant 0 : index
    %46 = vector.load %arg8[%c3_57, %c0_58, %c0_59] : memref<8x4x1xf32, #tpu.memory_space<vmem>>, vector<1x4x1xf32>
    %47 = vector.shape_cast %46 : vector<1x4x1xf32> to vector<4x1xf32>
    %c4_60 = arith.constant 4 : index
    %c0_61 = arith.constant 0 : index
    %c0_62 = arith.constant 0 : index
    %48 = vector.load %arg8[%c4_60, %c0_61, %c0_62] : memref<8x4x1xf32, #tpu.memory_space<vmem>>, vector<1x4x1xf32>
    %49 = vector.shape_cast %48 : vector<1x4x1xf32> to vector<4x1xf32>
    %c5_63 = arith.constant 5 : index
    %c0_64 = arith.constant 0 : index
    %c0_65 = arith.constant 0 : index
    %50 = vector.load %arg8[%c5_63, %c0_64, %c0_65] : memref<8x4x1xf32, #tpu.memory_space<vmem>>, vector<1x4x1xf32>
    %51 = vector.shape_cast %50 : vector<1x4x1xf32> to vector<4x1xf32>
    %c6_66 = arith.constant 6 : index
    %c0_67 = arith.constant 0 : index
    %c0_68 = arith.constant 0 : index
    %52 = vector.load %arg8[%c6_66, %c0_67, %c0_68] : memref<8x4x1xf32, #tpu.memory_space<vmem>>, vector<1x4x1xf32>
    %53 = vector.shape_cast %52 : vector<1x4x1xf32> to vector<4x1xf32>
    %c7_69 = arith.constant 7 : index
    %c0_70 = arith.constant 0 : index
    %c0_71 = arith.constant 0 : index
    %54 = vector.load %arg8[%c7_69, %c0_70, %c0_71] : memref<8x4x1xf32, #tpu.memory_space<vmem>>, vector<1x4x1xf32>
    %55 = vector.shape_cast %54 : vector<1x4x1xf32> to vector<4x1xf32>
    %c0_72 = arith.constant 0 : index
    %c0_73 = arith.constant 0 : index
    %56 = vector.load %arg7[%c0_72, %c0_73] : memref<32x1xf32, #tpu.memory_space<vmem>>, vector<32x1xf32>
    %57 = vector.shape_cast %56 : vector<32x1xf32> to vector<32x1xf32>
    %58 = vector.broadcast %57 : vector<32x1xf32> to vector<32x512xf32>
    %c0_74 = arith.constant 0 : index
    %c0_75 = arith.constant 0 : index
    %59 = vector.load %arg9[%c0_74, %c0_75] : memref<4x1xf32, #tpu.memory_space<vmem>>, vector<4x1xf32>
    %60 = vector.shape_cast %59 : vector<4x1xf32> to vector<4x1xf32>
    %61 = vector.broadcast %60 : vector<4x1xf32> to vector<4x512xf32>
    %cst = arith.constant 0.000000e+00 : f32
    %62 = vector.broadcast %cst : f32 to vector<8x512xf32>
    %cst_76 = arith.constant 0.000000e+00 : f32
    %63 = vector.broadcast %cst_76 : f32 to vector<8x512xf32>
    %64 = arith.mulf %6, %0 : vector<4x512xf32>
    %65 = arith.subf %64, %7 : vector<4x512xf32>
    %66 = vector.extract_strided_slice %0 {offsets = [0, 0], sizes = [1, 512], strides = [1, 1]} : vector<4x512xf32> to vector<1x512xf32>
    %67 = vector.broadcast %9 : vector<4x1xf32> to vector<4x512xf32>
    %68 = vector.broadcast %66 : vector<1x512xf32> to vector<4x512xf32>
    %69 = arith.mulf %67, %68 : vector<4x512xf32>
    %70 = arith.addf %65, %69 : vector<4x512xf32>
    %71 = vector.extract_strided_slice %0 {offsets = [1, 0], sizes = [1, 512], strides = [1, 1]} : vector<4x512xf32> to vector<1x512xf32>
    %72 = vector.broadcast %11 : vector<4x1xf32> to vector<4x512xf32>
    %73 = vector.broadcast %71 : vector<1x512xf32> to vector<4x512xf32>
    %74 = arith.mulf %72, %73 : vector<4x512xf32>
    %75 = arith.addf %70, %74 : vector<4x512xf32>
    %76 = vector.extract_strided_slice %0 {offsets = [2, 0], sizes = [1, 512], strides = [1, 1]} : vector<4x512xf32> to vector<1x512xf32>
    %77 = vector.broadcast %13 : vector<4x1xf32> to vector<4x512xf32>
    %78 = vector.broadcast %76 : vector<1x512xf32> to vector<4x512xf32>
    %79 = arith.mulf %77, %78 : vector<4x512xf32>
    %80 = arith.addf %75, %79 : vector<4x512xf32>
    %81 = vector.extract_strided_slice %0 {offsets = [3, 0], sizes = [1, 512], strides = [1, 1]} : vector<4x512xf32> to vector<1x512xf32>
    %82 = vector.broadcast %15 : vector<4x1xf32> to vector<4x512xf32>
    %83 = vector.broadcast %81 : vector<1x512xf32> to vector<4x512xf32>
    %84 = arith.mulf %82, %83 : vector<4x512xf32>
    %85 = arith.addf %80, %84 : vector<4x512xf32>
    %86 = arith.mulf %85, %85 : vector<4x512xf32>
    %87 = vector.shape_cast %86 : vector<4x512xf32> to vector<1x4x512xf32>
    %cst_77 = arith.constant dense<0.000000e+00> : vector<1xf32>
    %88 = vector.multi_reduction <add>, %87, %cst_77 [1, 2] : vector<1x4x512xf32> to vector<1xf32>
    %89 = vector.shape_cast %88 : vector<1xf32> to vector<1x1x1xf32>
    %90 = vector.extract %89[0, 0, 0] : f32 from vector<1x1x1xf32>
    %cst_78 = arith.constant 2.048000e+03 : f32
    %91 = arith.divf %90, %cst_78 : f32
    %92 = math.rsqrt %91 : f32
    %93 = vector.broadcast %92 : f32 to vector<4x512xf32>
    %94 = arith.mulf %85, %93 : vector<4x512xf32>
    %95 = vector.extract_strided_slice %94 {offsets = [0, 0], sizes = [1, 512], strides = [1, 1]} : vector<4x512xf32> to vector<1x512xf32>
    %96 = vector.broadcast %17 : vector<32x1xf32> to vector<32x512xf32>
    %97 = vector.broadcast %95 : vector<1x512xf32> to vector<32x512xf32>
    %98 = arith.mulf %96, %97 : vector<32x512xf32>
    %99 = arith.addf %58, %98 : vector<32x512xf32>
    %100 = vector.extract_strided_slice %94 {offsets = [1, 0], sizes = [1, 512], strides = [1, 1]} : vector<4x512xf32> to vector<1x512xf32>
    %101 = vector.broadcast %19 : vector<32x1xf32> to vector<32x512xf32>
    %102 = vector.broadcast %100 : vector<1x512xf32> to vector<32x512xf32>
    %103 = arith.mulf %101, %102 : vector<32x512xf32>
    %104 = arith.addf %99, %103 : vector<32x512xf32>
    %105 = vector.extract_strided_slice %94 {offsets = [2, 0], sizes = [1, 512], strides = [1, 1]} : vector<4x512xf32> to vector<1x512xf32>
    %106 = vector.broadcast %21 : vector<32x1xf32> to vector<32x512xf32>
    %107 = vector.broadcast %105 : vector<1x512xf32> to vector<32x512xf32>
    %108 = arith.mulf %106, %107 : vector<32x512xf32>
    %109 = arith.addf %104, %108 : vector<32x512xf32>
    %110 = vector.extract_strided_slice %94 {offsets = [3, 0], sizes = [1, 512], strides = [1, 1]} : vector<4x512xf32> to vector<1x512xf32>
    %111 = vector.broadcast %23 : vector<32x1xf32> to vector<32x512xf32>
    %112 = vector.broadcast %110 : vector<1x512xf32> to vector<32x512xf32>
    %113 = arith.mulf %111, %112 : vector<32x512xf32>
    %114 = arith.addf %109, %113 : vector<32x512xf32>
    %115 = vector.extract_strided_slice %62 {offsets = [0, 0], sizes = [1, 512], strides = [1, 1]} : vector<8x512xf32> to vector<1x512xf32>
    %116 = vector.broadcast %25 : vector<32x1xf32> to vector<32x512xf32>
    %117 = vector.broadcast %115 : vector<1x512xf32> to vector<32x512xf32>
    %118 = arith.mulf %116, %117 : vector<32x512xf32>
    %119 = arith.addf %114, %118 : vector<32x512xf32>
    %120 = vector.extract_strided_slice %62 {offsets = [1, 0], sizes = [1, 512], strides = [1, 1]} : vector<8x512xf32> to vector<1x512xf32>
    %121 = vector.broadcast %27 : vector<32x1xf32> to vector<32x512xf32>
    %122 = vector.broadcast %120 : vector<1x512xf32> to vector<32x512xf32>
    %123 = arith.mulf %121, %122 : vector<32x512xf32>
    %124 = arith.addf %119, %123 : vector<32x512xf32>
    %125 = vector.extract_strided_slice %62 {offsets = [2, 0], sizes = [1, 512], strides = [1, 1]} : vector<8x512xf32> to vector<1x512xf32>
    %126 = vector.broadcast %29 : vector<32x1xf32> to vector<32x512xf32>
    %127 = vector.broadcast %125 : vector<1x512xf32> to vector<32x512xf32>
    %128 = arith.mulf %126, %127 : vector<32x512xf32>
    %129 = arith.addf %124, %128 : vector<32x512xf32>
    %130 = vector.extract_strided_slice %62 {offsets = [3, 0], sizes = [1, 512], strides = [1, 1]} : vector<8x512xf32> to vector<1x512xf32>
    %131 = vector.broadcast %31 : vector<32x1xf32> to vector<32x512xf32>
    %132 = vector.broadcast %130 : vector<1x512xf32> to vector<32x512xf32>
    %133 = arith.mulf %131, %132 : vector<32x512xf32>
    %134 = arith.addf %129, %133 : vector<32x512xf32>
    %135 = vector.extract_strided_slice %62 {offsets = [4, 0], sizes = [1, 512], strides = [1, 1]} : vector<8x512xf32> to vector<1x512xf32>
    %136 = vector.broadcast %33 : vector<32x1xf32> to vector<32x512xf32>
    %137 = vector.broadcast %135 : vector<1x512xf32> to vector<32x512xf32>
    %138 = arith.mulf %136, %137 : vector<32x512xf32>
    %139 = arith.addf %134, %138 : vector<32x512xf32>
    %140 = vector.extract_strided_slice %62 {offsets = [5, 0], sizes = [1, 512], strides = [1, 1]} : vector<8x512xf32> to vector<1x512xf32>
    %141 = vector.broadcast %35 : vector<32x1xf32> to vector<32x512xf32>
    %142 = vector.broadcast %140 : vector<1x512xf32> to vector<32x512xf32>
    %143 = arith.mulf %141, %142 : vector<32x512xf32>
    %144 = arith.addf %139, %143 : vector<32x512xf32>
    %145 = vector.extract_strided_slice %62 {offsets = [6, 0], sizes = [1, 512], strides = [1, 1]} : vector<8x512xf32> to vector<1x512xf32>
    %146 = vector.broadcast %37 : vector<32x1xf32> to vector<32x512xf32>
    %147 = vector.broadcast %145 : vector<1x512xf32> to vector<32x512xf32>
    %148 = arith.mulf %146, %147 : vector<32x512xf32>
    %149 = arith.addf %144, %148 : vector<32x512xf32>
    %150 = vector.extract_strided_slice %62 {offsets = [7, 0], sizes = [1, 512], strides = [1, 1]} : vector<8x512xf32> to vector<1x512xf32>
    %151 = vector.broadcast %39 : vector<32x1xf32> to vector<32x512xf32>
    %152 = vector.broadcast %150 : vector<1x512xf32> to vector<32x512xf32>
    %153 = arith.mulf %151, %152 : vector<32x512xf32>
    %154 = arith.addf %149, %153 : vector<32x512xf32>
    %155 = vector.extract_strided_slice %154 {offsets = [0, 0], sizes = [8, 512], strides = [1, 1]} : vector<32x512xf32> to vector<8x512xf32>
    %156 = arith.negf %155 : vector<8x512xf32>
    %157 = math.exp %156 : vector<8x512xf32>
    %cst_79 = arith.constant 1.000000e+00 : f32
    %158 = vector.broadcast %cst_79 : f32 to vector<8x512xf32>
    %159 = arith.addf %158, %157 : vector<8x512xf32>
    %160 = arith.divf %158, %159 : vector<8x512xf32>
    %161 = vector.extract_strided_slice %154 {offsets = [8, 0], sizes = [8, 512], strides = [1, 1]} : vector<32x512xf32> to vector<8x512xf32>
    %162 = arith.negf %161 : vector<8x512xf32>
    %163 = math.exp %162 : vector<8x512xf32>
    %cst_80 = arith.constant 1.000000e+00 : f32
    %164 = vector.broadcast %cst_80 : f32 to vector<8x512xf32>
    %165 = arith.addf %164, %163 : vector<8x512xf32>
    %166 = arith.divf %164, %165 : vector<8x512xf32>
    %167 = vector.extract_strided_slice %154 {offsets = [16, 0], sizes = [8, 512], strides = [1, 1]} : vector<32x512xf32> to vector<8x512xf32>
    %168 = math.tanh %167 : vector<8x512xf32>
    %169 = vector.extract_strided_slice %154 {offsets = [24, 0], sizes = [8, 512], strides = [1, 1]} : vector<32x512xf32> to vector<8x512xf32>
    %170 = arith.negf %169 : vector<8x512xf32>
    %171 = math.exp %170 : vector<8x512xf32>
    %cst_81 = arith.constant 1.000000e+00 : f32
    %172 = vector.broadcast %cst_81 : f32 to vector<8x512xf32>
    %173 = arith.addf %172, %171 : vector<8x512xf32>
    %174 = arith.divf %172, %173 : vector<8x512xf32>
    %175 = arith.mulf %166, %63 : vector<8x512xf32>
    %176 = arith.mulf %160, %168 : vector<8x512xf32>
    %177 = arith.addf %175, %176 : vector<8x512xf32>
    %178 = math.tanh %177 : vector<8x512xf32>
    %179 = arith.mulf %174, %178 : vector<8x512xf32>
    %180 = vector.extract_strided_slice %179 {offsets = [0, 0], sizes = [1, 512], strides = [1, 1]} : vector<8x512xf32> to vector<1x512xf32>
    %181 = vector.broadcast %41 : vector<4x1xf32> to vector<4x512xf32>
    %182 = vector.broadcast %180 : vector<1x512xf32> to vector<4x512xf32>
    %183 = arith.mulf %181, %182 : vector<4x512xf32>
    %184 = arith.addf %61, %183 : vector<4x512xf32>
    %185 = vector.extract_strided_slice %179 {offsets = [1, 0], sizes = [1, 512], strides = [1, 1]} : vector<8x512xf32> to vector<1x512xf32>
    %186 = vector.broadcast %43 : vector<4x1xf32> to vector<4x512xf32>
    %187 = vector.broadcast %185 : vector<1x512xf32> to vector<4x512xf32>
    %188 = arith.mulf %186, %187 : vector<4x512xf32>
    %189 = arith.addf %184, %188 : vector<4x512xf32>
    %190 = vector.extract_strided_slice %179 {offsets = [2, 0], sizes = [1, 512], strides = [1, 1]} : vector<8x512xf32> to vector<1x512xf32>
    %191 = vector.broadcast %45 : vector<4x1xf32> to vector<4x512xf32>
    %192 = vector.broadcast %190 : vector<1x512xf32> to vector<4x512xf32>
    %193 = arith.mulf %191, %192 : vector<4x512xf32>
    %194 = arith.addf %189, %193 : vector<4x512xf32>
    %195 = vector.extract_strided_slice %179 {offsets = [3, 0], sizes = [1, 512], strides = [1, 1]} : vector<8x512xf32> to vector<1x512xf32>
    %196 = vector.broadcast %47 : vector<4x1xf32> to vector<4x512xf32>
    %197 = vector.broadcast %195 : vector<1x512xf32> to vector<4x512xf32>
    %198 = arith.mulf %196, %197 : vector<4x512xf32>
    %199 = arith.addf %194, %198 : vector<4x512xf32>
    %200 = vector.extract_strided_slice %179 {offsets = [4, 0], sizes = [1, 512], strides = [1, 1]} : vector<8x512xf32> to vector<1x512xf32>
    %201 = vector.broadcast %49 : vector<4x1xf32> to vector<4x512xf32>
    %202 = vector.broadcast %200 : vector<1x512xf32> to vector<4x512xf32>
    %203 = arith.mulf %201, %202 : vector<4x512xf32>
    %204 = arith.addf %199, %203 : vector<4x512xf32>
    %205 = vector.extract_strided_slice %179 {offsets = [5, 0], sizes = [1, 512], strides = [1, 1]} : vector<8x512xf32> to vector<1x512xf32>
    %206 = vector.broadcast %51 : vector<4x1xf32> to vector<4x512xf32>
    %207 = vector.broadcast %205 : vector<1x512xf32> to vector<4x512xf32>
    %208 = arith.mulf %206, %207 : vector<4x512xf32>
    %209 = arith.addf %204, %208 : vector<4x512xf32>
    %210 = vector.extract_strided_slice %179 {offsets = [6, 0], sizes = [1, 512], strides = [1, 1]} : vector<8x512xf32> to vector<1x512xf32>
    %211 = vector.broadcast %53 : vector<4x1xf32> to vector<4x512xf32>
    %212 = vector.broadcast %210 : vector<1x512xf32> to vector<4x512xf32>
    %213 = arith.mulf %211, %212 : vector<4x512xf32>
    %214 = arith.addf %209, %213 : vector<4x512xf32>
    %215 = vector.extract_strided_slice %179 {offsets = [7, 0], sizes = [1, 512], strides = [1, 1]} : vector<8x512xf32> to vector<1x512xf32>
    %216 = vector.broadcast %55 : vector<4x1xf32> to vector<4x512xf32>
    %217 = vector.broadcast %215 : vector<1x512xf32> to vector<4x512xf32>
    %218 = arith.mulf %216, %217 : vector<4x512xf32>
    %219 = arith.addf %214, %218 : vector<4x512xf32>
    %cst_82 = arith.constant 2.500000e-01 : f32
    %220 = vector.broadcast %cst_82 : f32 to vector<4x512xf32>
    %221 = arith.mulf %219, %220 : vector<4x512xf32>
    %222 = arith.subf %0, %221 : vector<4x512xf32>
    %223 = arith.mulf %6, %222 : vector<4x512xf32>
    %224 = arith.subf %223, %7 : vector<4x512xf32>
    %225 = vector.extract_strided_slice %222 {offsets = [0, 0], sizes = [1, 512], strides = [1, 1]} : vector<4x512xf32> to vector<1x512xf32>
    %226 = vector.broadcast %9 : vector<4x1xf32> to vector<4x512xf32>
    %227 = vector.broadcast %225 : vector<1x512xf32> to vector<4x512xf32>
    %228 = arith.mulf %226, %227 : vector<4x512xf32>
    %229 = arith.addf %224, %228 : vector<4x512xf32>
    %230 = vector.extract_strided_slice %222 {offsets = [1, 0], sizes = [1, 512], strides = [1, 1]} : vector<4x512xf32> to vector<1x512xf32>
    %231 = vector.broadcast %11 : vector<4x1xf32> to vector<4x512xf32>
    %232 = vector.broadcast %230 : vector<1x512xf32> to vector<4x512xf32>
    %233 = arith.mulf %231, %232 : vector<4x512xf32>
    %234 = arith.addf %229, %233 : vector<4x512xf32>
    %235 = vector.extract_strided_slice %222 {offsets = [2, 0], sizes = [1, 512], strides = [1, 1]} : vector<4x512xf32> to vector<1x512xf32>
    %236 = vector.broadcast %13 : vector<4x1xf32> to vector<4x512xf32>
    %237 = vector.broadcast %235 : vector<1x512xf32> to vector<4x512xf32>
    %238 = arith.mulf %236, %237 : vector<4x512xf32>
    %239 = arith.addf %234, %238 : vector<4x512xf32>
    %240 = vector.extract_strided_slice %222 {offsets = [3, 0], sizes = [1, 512], strides = [1, 1]} : vector<4x512xf32> to vector<1x512xf32>
    %241 = vector.broadcast %15 : vector<4x1xf32> to vector<4x512xf32>
    %242 = vector.broadcast %240 : vector<1x512xf32> to vector<4x512xf32>
    %243 = arith.mulf %241, %242 : vector<4x512xf32>
    %244 = arith.addf %239, %243 : vector<4x512xf32>
    %245 = arith.mulf %244, %244 : vector<4x512xf32>
    %246 = vector.shape_cast %245 : vector<4x512xf32> to vector<1x4x512xf32>
    %cst_83 = arith.constant dense<0.000000e+00> : vector<1xf32>
    %247 = vector.multi_reduction <add>, %246, %cst_83 [1, 2] : vector<1x4x512xf32> to vector<1xf32>
    %248 = vector.shape_cast %247 : vector<1xf32> to vector<1x1x1xf32>
    %249 = vector.extract %248[0, 0, 0] : f32 from vector<1x1x1xf32>
    %cst_84 = arith.constant 2.048000e+03 : f32
    %250 = arith.divf %249, %cst_84 : f32
    %251 = math.rsqrt %250 : f32
    %252 = vector.broadcast %251 : f32 to vector<4x512xf32>
    %253 = arith.mulf %244, %252 : vector<4x512xf32>
    %254 = vector.extract_strided_slice %253 {offsets = [0, 0], sizes = [1, 512], strides = [1, 1]} : vector<4x512xf32> to vector<1x512xf32>
    %255 = vector.broadcast %17 : vector<32x1xf32> to vector<32x512xf32>
    %256 = vector.broadcast %254 : vector<1x512xf32> to vector<32x512xf32>
    %257 = arith.mulf %255, %256 : vector<32x512xf32>
    %258 = arith.addf %58, %257 : vector<32x512xf32>
    %259 = vector.extract_strided_slice %253 {offsets = [1, 0], sizes = [1, 512], strides = [1, 1]} : vector<4x512xf32> to vector<1x512xf32>
    %260 = vector.broadcast %19 : vector<32x1xf32> to vector<32x512xf32>
    %261 = vector.broadcast %259 : vector<1x512xf32> to vector<32x512xf32>
    %262 = arith.mulf %260, %261 : vector<32x512xf32>
    %263 = arith.addf %258, %262 : vector<32x512xf32>
    %264 = vector.extract_strided_slice %253 {offsets = [2, 0], sizes = [1, 512], strides = [1, 1]} : vector<4x512xf32> to vector<1x512xf32>
    %265 = vector.broadcast %21 : vector<32x1xf32> to vector<32x512xf32>
    %266 = vector.broadcast %264 : vector<1x512xf32> to vector<32x512xf32>
    %267 = arith.mulf %265, %266 : vector<32x512xf32>
    %268 = arith.addf %263, %267 : vector<32x512xf32>
    %269 = vector.extract_strided_slice %253 {offsets = [3, 0], sizes = [1, 512], strides = [1, 1]} : vector<4x512xf32> to vector<1x512xf32>
    %270 = vector.broadcast %23 : vector<32x1xf32> to vector<32x512xf32>
    %271 = vector.broadcast %269 : vector<1x512xf32> to vector<32x512xf32>
    %272 = arith.mulf %270, %271 : vector<32x512xf32>
    %273 = arith.addf %268, %272 : vector<32x512xf32>
    %274 = vector.extract_strided_slice %179 {offsets = [0, 0], sizes = [1, 512], strides = [1, 1]} : vector<8x512xf32> to vector<1x512xf32>
    %275 = vector.broadcast %25 : vector<32x1xf32> to vector<32x512xf32>
    %276 = vector.broadcast %274 : vector<1x512xf32> to vector<32x512xf32>
    %277 = arith.mulf %275, %276 : vector<32x512xf32>
    %278 = arith.addf %273, %277 : vector<32x512xf32>
    %279 = vector.extract_strided_slice %179 {offsets = [1, 0], sizes = [1, 512], strides = [1, 1]} : vector<8x512xf32> to vector<1x512xf32>
    %280 = vector.broadcast %27 : vector<32x1xf32> to vector<32x512xf32>
    %281 = vector.broadcast %279 : vector<1x512xf32> to vector<32x512xf32>
    %282 = arith.mulf %280, %281 : vector<32x512xf32>
    %283 = arith.addf %278, %282 : vector<32x512xf32>
    %284 = vector.extract_strided_slice %179 {offsets = [2, 0], sizes = [1, 512], strides = [1, 1]} : vector<8x512xf32> to vector<1x512xf32>
    %285 = vector.broadcast %29 : vector<32x1xf32> to vector<32x512xf32>
    %286 = vector.broadcast %284 : vector<1x512xf32> to vector<32x512xf32>
    %287 = arith.mulf %285, %286 : vector<32x512xf32>
    %288 = arith.addf %283, %287 : vector<32x512xf32>
    %289 = vector.extract_strided_slice %179 {offsets = [3, 0], sizes = [1, 512], strides = [1, 1]} : vector<8x512xf32> to vector<1x512xf32>
    %290 = vector.broadcast %31 : vector<32x1xf32> to vector<32x512xf32>
    %291 = vector.broadcast %289 : vector<1x512xf32> to vector<32x512xf32>
    %292 = arith.mulf %290, %291 : vector<32x512xf32>
    %293 = arith.addf %288, %292 : vector<32x512xf32>
    %294 = vector.extract_strided_slice %179 {offsets = [4, 0], sizes = [1, 512], strides = [1, 1]} : vector<8x512xf32> to vector<1x512xf32>
    %295 = vector.broadcast %33 : vector<32x1xf32> to vector<32x512xf32>
    %296 = vector.broadcast %294 : vector<1x512xf32> to vector<32x512xf32>
    %297 = arith.mulf %295, %296 : vector<32x512xf32>
    %298 = arith.addf %293, %297 : vector<32x512xf32>
    %299 = vector.extract_strided_slice %179 {offsets = [5, 0], sizes = [1, 512], strides = [1, 1]} : vector<8x512xf32> to vector<1x512xf32>
    %300 = vector.broadcast %35 : vector<32x1xf32> to vector<32x512xf32>
    %301 = vector.broadcast %299 : vector<1x512xf32> to vector<32x512xf32>
    %302 = arith.mulf %300, %301 : vector<32x512xf32>
    %303 = arith.addf %298, %302 : vector<32x512xf32>
    %304 = vector.extract_strided_slice %179 {offsets = [6, 0], sizes = [1, 512], strides = [1, 1]} : vector<8x512xf32> to vector<1x512xf32>
    %305 = vector.broadcast %37 : vector<32x1xf32> to vector<32x512xf32>
    %306 = vector.broadcast %304 : vector<1x512xf32> to vector<32x512xf32>
    %307 = arith.mulf %305, %306 : vector<32x512xf32>
    %308 = arith.addf %303, %307 : vector<32x512xf32>
    %309 = vector.extract_strided_slice %179 {offsets = [7, 0], sizes = [1, 512], strides = [1, 1]} : vector<8x512xf32> to vector<1x512xf32>
    %310 = vector.broadcast %39 : vector<32x1xf32> to vector<32x512xf32>
    %311 = vector.broadcast %309 : vector<1x512xf32> to vector<32x512xf32>
    %312 = arith.mulf %310, %311 : vector<32x512xf32>
    %313 = arith.addf %308, %312 : vector<32x512xf32>
    %314 = vector.extract_strided_slice %313 {offsets = [0, 0], sizes = [8, 512], strides = [1, 1]} : vector<32x512xf32> to vector<8x512xf32>
    %315 = arith.negf %314 : vector<8x512xf32>
    %316 = math.exp %315 : vector<8x512xf32>
    %cst_85 = arith.constant 1.000000e+00 : f32
    %317 = vector.broadcast %cst_85 : f32 to vector<8x512xf32>
    %318 = arith.addf %317, %316 : vector<8x512xf32>
    %319 = arith.divf %317, %318 : vector<8x512xf32>
    %320 = vector.extract_strided_slice %313 {offsets = [8, 0], sizes = [8, 512], strides = [1, 1]} : vector<32x512xf32> to vector<8x512xf32>
    %321 = arith.negf %320 : vector<8x512xf32>
    %322 = math.exp %321 : vector<8x512xf32>
    %cst_86 = arith.constant 1.000000e+00 : f32
    %323 = vector.broadcast %cst_86 : f32 to vector<8x512xf32>
    %324 = arith.addf %323, %322 : vector<8x512xf32>
    %325 = arith.divf %323, %324 : vector<8x512xf32>
    %326 = vector.extract_strided_slice %313 {offsets = [16, 0], sizes = [8, 512], strides = [1, 1]} : vector<32x512xf32> to vector<8x512xf32>
    %327 = math.tanh %326 : vector<8x512xf32>
    %328 = vector.extract_strided_slice %313 {offsets = [24, 0], sizes = [8, 512], strides = [1, 1]} : vector<32x512xf32> to vector<8x512xf32>
    %329 = arith.negf %328 : vector<8x512xf32>
    %330 = math.exp %329 : vector<8x512xf32>
    %cst_87 = arith.constant 1.000000e+00 : f32
    %331 = vector.broadcast %cst_87 : f32 to vector<8x512xf32>
    %332 = arith.addf %331, %330 : vector<8x512xf32>
    %333 = arith.divf %331, %332 : vector<8x512xf32>
    %334 = arith.mulf %325, %177 : vector<8x512xf32>
    %335 = arith.mulf %319, %327 : vector<8x512xf32>
    %336 = arith.addf %334, %335 : vector<8x512xf32>
    %337 = math.tanh %336 : vector<8x512xf32>
    %338 = arith.mulf %333, %337 : vector<8x512xf32>
    %339 = vector.extract_strided_slice %338 {offsets = [0, 0], sizes = [1, 512], strides = [1, 1]} : vector<8x512xf32> to vector<1x512xf32>
    %340 = vector.broadcast %41 : vector<4x1xf32> to vector<4x512xf32>
    %341 = vector.broadcast %339 : vector<1x512xf32> to vector<4x512xf32>
    %342 = arith.mulf %340, %341 : vector<4x512xf32>
    %343 = arith.addf %61, %342 : vector<4x512xf32>
    %344 = vector.extract_strided_slice %338 {offsets = [1, 0], sizes = [1, 512], strides = [1, 1]} : vector<8x512xf32> to vector<1x512xf32>
    %345 = vector.broadcast %43 : vector<4x1xf32> to vector<4x512xf32>
    %346 = vector.broadcast %344 : vector<1x512xf32> to vector<4x512xf32>
    %347 = arith.mulf %345, %346 : vector<4x512xf32>
    %348 = arith.addf %343, %347 : vector<4x512xf32>
    %349 = vector.extract_strided_slice %338 {offsets = [2, 0], sizes = [1, 512], strides = [1, 1]} : vector<8x512xf32> to vector<1x512xf32>
    %350 = vector.broadcast %45 : vector<4x1xf32> to vector<4x512xf32>
    %351 = vector.broadcast %349 : vector<1x512xf32> to vector<4x512xf32>
    %352 = arith.mulf %350, %351 : vector<4x512xf32>
    %353 = arith.addf %348, %352 : vector<4x512xf32>
    %354 = vector.extract_strided_slice %338 {offsets = [3, 0], sizes = [1, 512], strides = [1, 1]} : vector<8x512xf32> to vector<1x512xf32>
    %355 = vector.broadcast %47 : vector<4x1xf32> to vector<4x512xf32>
    %356 = vector.broadcast %354 : vector<1x512xf32> to vector<4x512xf32>
    %357 = arith.mulf %355, %356 : vector<4x512xf32>
    %358 = arith.addf %353, %357 : vector<4x512xf32>
    %359 = vector.extract_strided_slice %338 {offsets = [4, 0], sizes = [1, 512], strides = [1, 1]} : vector<8x512xf32> to vector<1x512xf32>
    %360 = vector.broadcast %49 : vector<4x1xf32> to vector<4x512xf32>
    %361 = vector.broadcast %359 : vector<1x512xf32> to vector<4x512xf32>
    %362 = arith.mulf %360, %361 : vector<4x512xf32>
    %363 = arith.addf %358, %362 : vector<4x512xf32>
    %364 = vector.extract_strided_slice %338 {offsets = [5, 0], sizes = [1, 512], strides = [1, 1]} : vector<8x512xf32> to vector<1x512xf32>
    %365 = vector.broadcast %51 : vector<4x1xf32> to vector<4x512xf32>
    %366 = vector.broadcast %364 : vector<1x512xf32> to vector<4x512xf32>
    %367 = arith.mulf %365, %366 : vector<4x512xf32>
    %368 = arith.addf %363, %367 : vector<4x512xf32>
    %369 = vector.extract_strided_slice %338 {offsets = [6, 0], sizes = [1, 512], strides = [1, 1]} : vector<8x512xf32> to vector<1x512xf32>
    %370 = vector.broadcast %53 : vector<4x1xf32> to vector<4x512xf32>
    %371 = vector.broadcast %369 : vector<1x512xf32> to vector<4x512xf32>
    %372 = arith.mulf %370, %371 : vector<4x512xf32>
    %373 = arith.addf %368, %372 : vector<4x512xf32>
    %374 = vector.extract_strided_slice %338 {offsets = [7, 0], sizes = [1, 512], strides = [1, 1]} : vector<8x512xf32> to vector<1x512xf32>
    %375 = vector.broadcast %55 : vector<4x1xf32> to vector<4x512xf32>
    %376 = vector.broadcast %374 : vector<1x512xf32> to vector<4x512xf32>
    %377 = arith.mulf %375, %376 : vector<4x512xf32>
    %378 = arith.addf %373, %377 : vector<4x512xf32>
    %cst_88 = arith.constant 2.500000e-01 : f32
    %379 = vector.broadcast %cst_88 : f32 to vector<4x512xf32>
    %380 = arith.mulf %378, %379 : vector<4x512xf32>
    %381 = arith.subf %222, %380 : vector<4x512xf32>
    %382 = arith.mulf %6, %381 : vector<4x512xf32>
    %383 = arith.subf %382, %7 : vector<4x512xf32>
    %384 = vector.extract_strided_slice %381 {offsets = [0, 0], sizes = [1, 512], strides = [1, 1]} : vector<4x512xf32> to vector<1x512xf32>
    %385 = vector.broadcast %9 : vector<4x1xf32> to vector<4x512xf32>
    %386 = vector.broadcast %384 : vector<1x512xf32> to vector<4x512xf32>
    %387 = arith.mulf %385, %386 : vector<4x512xf32>
    %388 = arith.addf %383, %387 : vector<4x512xf32>
    %389 = vector.extract_strided_slice %381 {offsets = [1, 0], sizes = [1, 512], strides = [1, 1]} : vector<4x512xf32> to vector<1x512xf32>
    %390 = vector.broadcast %11 : vector<4x1xf32> to vector<4x512xf32>
    %391 = vector.broadcast %389 : vector<1x512xf32> to vector<4x512xf32>
    %392 = arith.mulf %390, %391 : vector<4x512xf32>
    %393 = arith.addf %388, %392 : vector<4x512xf32>
    %394 = vector.extract_strided_slice %381 {offsets = [2, 0], sizes = [1, 512], strides = [1, 1]} : vector<4x512xf32> to vector<1x512xf32>
    %395 = vector.broadcast %13 : vector<4x1xf32> to vector<4x512xf32>
    %396 = vector.broadcast %394 : vector<1x512xf32> to vector<4x512xf32>
    %397 = arith.mulf %395, %396 : vector<4x512xf32>
    %398 = arith.addf %393, %397 : vector<4x512xf32>
    %399 = vector.extract_strided_slice %381 {offsets = [3, 0], sizes = [1, 512], strides = [1, 1]} : vector<4x512xf32> to vector<1x512xf32>
    %400 = vector.broadcast %15 : vector<4x1xf32> to vector<4x512xf32>
    %401 = vector.broadcast %399 : vector<1x512xf32> to vector<4x512xf32>
    %402 = arith.mulf %400, %401 : vector<4x512xf32>
    %403 = arith.addf %398, %402 : vector<4x512xf32>
    %404 = arith.mulf %403, %403 : vector<4x512xf32>
    %405 = vector.shape_cast %404 : vector<4x512xf32> to vector<1x4x512xf32>
    %cst_89 = arith.constant dense<0.000000e+00> : vector<1xf32>
    %406 = vector.multi_reduction <add>, %405, %cst_89 [1, 2] : vector<1x4x512xf32> to vector<1xf32>
    %407 = vector.shape_cast %406 : vector<1xf32> to vector<1x1x1xf32>
    %408 = vector.extract %407[0, 0, 0] : f32 from vector<1x1x1xf32>
    %cst_90 = arith.constant 2.048000e+03 : f32
    %409 = arith.divf %408, %cst_90 : f32
    %410 = math.rsqrt %409 : f32
    %411 = vector.broadcast %410 : f32 to vector<4x512xf32>
    %412 = arith.mulf %403, %411 : vector<4x512xf32>
    %413 = vector.extract_strided_slice %412 {offsets = [0, 0], sizes = [1, 512], strides = [1, 1]} : vector<4x512xf32> to vector<1x512xf32>
    %414 = vector.broadcast %17 : vector<32x1xf32> to vector<32x512xf32>
    %415 = vector.broadcast %413 : vector<1x512xf32> to vector<32x512xf32>
    %416 = arith.mulf %414, %415 : vector<32x512xf32>
    %417 = arith.addf %58, %416 : vector<32x512xf32>
    %418 = vector.extract_strided_slice %412 {offsets = [1, 0], sizes = [1, 512], strides = [1, 1]} : vector<4x512xf32> to vector<1x512xf32>
    %419 = vector.broadcast %19 : vector<32x1xf32> to vector<32x512xf32>
    %420 = vector.broadcast %418 : vector<1x512xf32> to vector<32x512xf32>
    %421 = arith.mulf %419, %420 : vector<32x512xf32>
    %422 = arith.addf %417, %421 : vector<32x512xf32>
    %423 = vector.extract_strided_slice %412 {offsets = [2, 0], sizes = [1, 512], strides = [1, 1]} : vector<4x512xf32> to vector<1x512xf32>
    %424 = vector.broadcast %21 : vector<32x1xf32> to vector<32x512xf32>
    %425 = vector.broadcast %423 : vector<1x512xf32> to vector<32x512xf32>
    %426 = arith.mulf %424, %425 : vector<32x512xf32>
    %427 = arith.addf %422, %426 : vector<32x512xf32>
    %428 = vector.extract_strided_slice %412 {offsets = [3, 0], sizes = [1, 512], strides = [1, 1]} : vector<4x512xf32> to vector<1x512xf32>
    %429 = vector.broadcast %23 : vector<32x1xf32> to vector<32x512xf32>
    %430 = vector.broadcast %428 : vector<1x512xf32> to vector<32x512xf32>
    %431 = arith.mulf %429, %430 : vector<32x512xf32>
    %432 = arith.addf %427, %431 : vector<32x512xf32>
    %433 = vector.extract_strided_slice %338 {offsets = [0, 0], sizes = [1, 512], strides = [1, 1]} : vector<8x512xf32> to vector<1x512xf32>
    %434 = vector.broadcast %25 : vector<32x1xf32> to vector<32x512xf32>
    %435 = vector.broadcast %433 : vector<1x512xf32> to vector<32x512xf32>
    %436 = arith.mulf %434, %435 : vector<32x512xf32>
    %437 = arith.addf %432, %436 : vector<32x512xf32>
    %438 = vector.extract_strided_slice %338 {offsets = [1, 0], sizes = [1, 512], strides = [1, 1]} : vector<8x512xf32> to vector<1x512xf32>
    %439 = vector.broadcast %27 : vector<32x1xf32> to vector<32x512xf32>
    %440 = vector.broadcast %438 : vector<1x512xf32> to vector<32x512xf32>
    %441 = arith.mulf %439, %440 : vector<32x512xf32>
    %442 = arith.addf %437, %441 : vector<32x512xf32>
    %443 = vector.extract_strided_slice %338 {offsets = [2, 0], sizes = [1, 512], strides = [1, 1]} : vector<8x512xf32> to vector<1x512xf32>
    %444 = vector.broadcast %29 : vector<32x1xf32> to vector<32x512xf32>
    %445 = vector.broadcast %443 : vector<1x512xf32> to vector<32x512xf32>
    %446 = arith.mulf %444, %445 : vector<32x512xf32>
    %447 = arith.addf %442, %446 : vector<32x512xf32>
    %448 = vector.extract_strided_slice %338 {offsets = [3, 0], sizes = [1, 512], strides = [1, 1]} : vector<8x512xf32> to vector<1x512xf32>
    %449 = vector.broadcast %31 : vector<32x1xf32> to vector<32x512xf32>
    %450 = vector.broadcast %448 : vector<1x512xf32> to vector<32x512xf32>
    %451 = arith.mulf %449, %450 : vector<32x512xf32>
    %452 = arith.addf %447, %451 : vector<32x512xf32>
    %453 = vector.extract_strided_slice %338 {offsets = [4, 0], sizes = [1, 512], strides = [1, 1]} : vector<8x512xf32> to vector<1x512xf32>
    %454 = vector.broadcast %33 : vector<32x1xf32> to vector<32x512xf32>
    %455 = vector.broadcast %453 : vector<1x512xf32> to vector<32x512xf32>
    %456 = arith.mulf %454, %455 : vector<32x512xf32>
    %457 = arith.addf %452, %456 : vector<32x512xf32>
    %458 = vector.extract_strided_slice %338 {offsets = [5, 0], sizes = [1, 512], strides = [1, 1]} : vector<8x512xf32> to vector<1x512xf32>
    %459 = vector.broadcast %35 : vector<32x1xf32> to vector<32x512xf32>
    %460 = vector.broadcast %458 : vector<1x512xf32> to vector<32x512xf32>
    %461 = arith.mulf %459, %460 : vector<32x512xf32>
    %462 = arith.addf %457, %461 : vector<32x512xf32>
    %463 = vector.extract_strided_slice %338 {offsets = [6, 0], sizes = [1, 512], strides = [1, 1]} : vector<8x512xf32> to vector<1x512xf32>
    %464 = vector.broadcast %37 : vector<32x1xf32> to vector<32x512xf32>
    %465 = vector.broadcast %463 : vector<1x512xf32> to vector<32x512xf32>
    %466 = arith.mulf %464, %465 : vector<32x512xf32>
    %467 = arith.addf %462, %466 : vector<32x512xf32>
    %468 = vector.extract_strided_slice %338 {offsets = [7, 0], sizes = [1, 512], strides = [1, 1]} : vector<8x512xf32> to vector<1x512xf32>
    %469 = vector.broadcast %39 : vector<32x1xf32> to vector<32x512xf32>
    %470 = vector.broadcast %468 : vector<1x512xf32> to vector<32x512xf32>
    %471 = arith.mulf %469, %470 : vector<32x512xf32>
    %472 = arith.addf %467, %471 : vector<32x512xf32>
    %473 = vector.extract_strided_slice %472 {offsets = [0, 0], sizes = [8, 512], strides = [1, 1]} : vector<32x512xf32> to vector<8x512xf32>
    %474 = arith.negf %473 : vector<8x512xf32>
    %475 = math.exp %474 : vector<8x512xf32>
    %cst_91 = arith.constant 1.000000e+00 : f32
    %476 = vector.broadcast %cst_91 : f32 to vector<8x512xf32>
    %477 = arith.addf %476, %475 : vector<8x512xf32>
    %478 = arith.divf %476, %477 : vector<8x512xf32>
    %479 = vector.extract_strided_slice %472 {offsets = [8, 0], sizes = [8, 512], strides = [1, 1]} : vector<32x512xf32> to vector<8x512xf32>
    %480 = arith.negf %479 : vector<8x512xf32>
    %481 = math.exp %480 : vector<8x512xf32>
    %cst_92 = arith.constant 1.000000e+00 : f32
    %482 = vector.broadcast %cst_92 : f32 to vector<8x512xf32>
    %483 = arith.addf %482, %481 : vector<8x512xf32>
    %484 = arith.divf %482, %483 : vector<8x512xf32>
    %485 = vector.extract_strided_slice %472 {offsets = [16, 0], sizes = [8, 512], strides = [1, 1]} : vector<32x512xf32> to vector<8x512xf32>
    %486 = math.tanh %485 : vector<8x512xf32>
    %487 = vector.extract_strided_slice %472 {offsets = [24, 0], sizes = [8, 512], strides = [1, 1]} : vector<32x512xf32> to vector<8x512xf32>
    %488 = arith.negf %487 : vector<8x512xf32>
    %489 = math.exp %488 : vector<8x512xf32>
    %cst_93 = arith.constant 1.000000e+00 : f32
    %490 = vector.broadcast %cst_93 : f32 to vector<8x512xf32>
    %491 = arith.addf %490, %489 : vector<8x512xf32>
    %492 = arith.divf %490, %491 : vector<8x512xf32>
    %493 = arith.mulf %484, %336 : vector<8x512xf32>
    %494 = arith.mulf %478, %486 : vector<8x512xf32>
    %495 = arith.addf %493, %494 : vector<8x512xf32>
    %496 = math.tanh %495 : vector<8x512xf32>
    %497 = arith.mulf %492, %496 : vector<8x512xf32>
    %498 = vector.extract_strided_slice %497 {offsets = [0, 0], sizes = [1, 512], strides = [1, 1]} : vector<8x512xf32> to vector<1x512xf32>
    %499 = vector.broadcast %41 : vector<4x1xf32> to vector<4x512xf32>
    %500 = vector.broadcast %498 : vector<1x512xf32> to vector<4x512xf32>
    %501 = arith.mulf %499, %500 : vector<4x512xf32>
    %502 = arith.addf %61, %501 : vector<4x512xf32>
    %503 = vector.extract_strided_slice %497 {offsets = [1, 0], sizes = [1, 512], strides = [1, 1]} : vector<8x512xf32> to vector<1x512xf32>
    %504 = vector.broadcast %43 : vector<4x1xf32> to vector<4x512xf32>
    %505 = vector.broadcast %503 : vector<1x512xf32> to vector<4x512xf32>
    %506 = arith.mulf %504, %505 : vector<4x512xf32>
    %507 = arith.addf %502, %506 : vector<4x512xf32>
    %508 = vector.extract_strided_slice %497 {offsets = [2, 0], sizes = [1, 512], strides = [1, 1]} : vector<8x512xf32> to vector<1x512xf32>
    %509 = vector.broadcast %45 : vector<4x1xf32> to vector<4x512xf32>
    %510 = vector.broadcast %508 : vector<1x512xf32> to vector<4x512xf32>
    %511 = arith.mulf %509, %510 : vector<4x512xf32>
    %512 = arith.addf %507, %511 : vector<4x512xf32>
    %513 = vector.extract_strided_slice %497 {offsets = [3, 0], sizes = [1, 512], strides = [1, 1]} : vector<8x512xf32> to vector<1x512xf32>
    %514 = vector.broadcast %47 : vector<4x1xf32> to vector<4x512xf32>
    %515 = vector.broadcast %513 : vector<1x512xf32> to vector<4x512xf32>
    %516 = arith.mulf %514, %515 : vector<4x512xf32>
    %517 = arith.addf %512, %516 : vector<4x512xf32>
    %518 = vector.extract_strided_slice %497 {offsets = [4, 0], sizes = [1, 512], strides = [1, 1]} : vector<8x512xf32> to vector<1x512xf32>
    %519 = vector.broadcast %49 : vector<4x1xf32> to vector<4x512xf32>
    %520 = vector.broadcast %518 : vector<1x512xf32> to vector<4x512xf32>
    %521 = arith.mulf %519, %520 : vector<4x512xf32>
    %522 = arith.addf %517, %521 : vector<4x512xf32>
    %523 = vector.extract_strided_slice %497 {offsets = [5, 0], sizes = [1, 512], strides = [1, 1]} : vector<8x512xf32> to vector<1x512xf32>
    %524 = vector.broadcast %51 : vector<4x1xf32> to vector<4x512xf32>
    %525 = vector.broadcast %523 : vector<1x512xf32> to vector<4x512xf32>
    %526 = arith.mulf %524, %525 : vector<4x512xf32>
    %527 = arith.addf %522, %526 : vector<4x512xf32>
    %528 = vector.extract_strided_slice %497 {offsets = [6, 0], sizes = [1, 512], strides = [1, 1]} : vector<8x512xf32> to vector<1x512xf32>
    %529 = vector.broadcast %53 : vector<4x1xf32> to vector<4x512xf32>
    %530 = vector.broadcast %528 : vector<1x512xf32> to vector<4x512xf32>
    %531 = arith.mulf %529, %530 : vector<4x512xf32>
    %532 = arith.addf %527, %531 : vector<4x512xf32>
    %533 = vector.extract_strided_slice %497 {offsets = [7, 0], sizes = [1, 512], strides = [1, 1]} : vector<8x512xf32> to vector<1x512xf32>
    %534 = vector.broadcast %55 : vector<4x1xf32> to vector<4x512xf32>
    %535 = vector.broadcast %533 : vector<1x512xf32> to vector<4x512xf32>
    %536 = arith.mulf %534, %535 : vector<4x512xf32>
    %537 = arith.addf %532, %536 : vector<4x512xf32>
    %cst_94 = arith.constant 2.500000e-01 : f32
    %538 = vector.broadcast %cst_94 : f32 to vector<4x512xf32>
    %539 = arith.mulf %537, %538 : vector<4x512xf32>
    %540 = arith.subf %381, %539 : vector<4x512xf32>
    %541 = arith.mulf %6, %540 : vector<4x512xf32>
    %542 = arith.subf %541, %7 : vector<4x512xf32>
    %543 = vector.extract_strided_slice %540 {offsets = [0, 0], sizes = [1, 512], strides = [1, 1]} : vector<4x512xf32> to vector<1x512xf32>
    %544 = vector.broadcast %9 : vector<4x1xf32> to vector<4x512xf32>
    %545 = vector.broadcast %543 : vector<1x512xf32> to vector<4x512xf32>
    %546 = arith.mulf %544, %545 : vector<4x512xf32>
    %547 = arith.addf %542, %546 : vector<4x512xf32>
    %548 = vector.extract_strided_slice %540 {offsets = [1, 0], sizes = [1, 512], strides = [1, 1]} : vector<4x512xf32> to vector<1x512xf32>
    %549 = vector.broadcast %11 : vector<4x1xf32> to vector<4x512xf32>
    %550 = vector.broadcast %548 : vector<1x512xf32> to vector<4x512xf32>
    %551 = arith.mulf %549, %550 : vector<4x512xf32>
    %552 = arith.addf %547, %551 : vector<4x512xf32>
    %553 = vector.extract_strided_slice %540 {offsets = [2, 0], sizes = [1, 512], strides = [1, 1]} : vector<4x512xf32> to vector<1x512xf32>
    %554 = vector.broadcast %13 : vector<4x1xf32> to vector<4x512xf32>
    %555 = vector.broadcast %553 : vector<1x512xf32> to vector<4x512xf32>
    %556 = arith.mulf %554, %555 : vector<4x512xf32>
    %557 = arith.addf %552, %556 : vector<4x512xf32>
    %558 = vector.extract_strided_slice %540 {offsets = [3, 0], sizes = [1, 512], strides = [1, 1]} : vector<4x512xf32> to vector<1x512xf32>
    %559 = vector.broadcast %15 : vector<4x1xf32> to vector<4x512xf32>
    %560 = vector.broadcast %558 : vector<1x512xf32> to vector<4x512xf32>
    %561 = arith.mulf %559, %560 : vector<4x512xf32>
    %562 = arith.addf %557, %561 : vector<4x512xf32>
    %563 = arith.mulf %562, %562 : vector<4x512xf32>
    %564 = vector.shape_cast %563 : vector<4x512xf32> to vector<1x4x512xf32>
    %cst_95 = arith.constant dense<0.000000e+00> : vector<1xf32>
    %565 = vector.multi_reduction <add>, %564, %cst_95 [1, 2] : vector<1x4x512xf32> to vector<1xf32>
    %566 = vector.shape_cast %565 : vector<1xf32> to vector<1x1x1xf32>
    %567 = vector.extract %566[0, 0, 0] : f32 from vector<1x1x1xf32>
    %cst_96 = arith.constant 2.048000e+03 : f32
    %568 = arith.divf %567, %cst_96 : f32
    %569 = math.rsqrt %568 : f32
    %570 = vector.broadcast %569 : f32 to vector<4x512xf32>
    %571 = arith.mulf %562, %570 : vector<4x512xf32>
    %572 = vector.extract_strided_slice %571 {offsets = [0, 0], sizes = [1, 512], strides = [1, 1]} : vector<4x512xf32> to vector<1x512xf32>
    %573 = vector.broadcast %17 : vector<32x1xf32> to vector<32x512xf32>
    %574 = vector.broadcast %572 : vector<1x512xf32> to vector<32x512xf32>
    %575 = arith.mulf %573, %574 : vector<32x512xf32>
    %576 = arith.addf %58, %575 : vector<32x512xf32>
    %577 = vector.extract_strided_slice %571 {offsets = [1, 0], sizes = [1, 512], strides = [1, 1]} : vector<4x512xf32> to vector<1x512xf32>
    %578 = vector.broadcast %19 : vector<32x1xf32> to vector<32x512xf32>
    %579 = vector.broadcast %577 : vector<1x512xf32> to vector<32x512xf32>
    %580 = arith.mulf %578, %579 : vector<32x512xf32>
    %581 = arith.addf %576, %580 : vector<32x512xf32>
    %582 = vector.extract_strided_slice %571 {offsets = [2, 0], sizes = [1, 512], strides = [1, 1]} : vector<4x512xf32> to vector<1x512xf32>
    %583 = vector.broadcast %21 : vector<32x1xf32> to vector<32x512xf32>
    %584 = vector.broadcast %582 : vector<1x512xf32> to vector<32x512xf32>
    %585 = arith.mulf %583, %584 : vector<32x512xf32>
    %586 = arith.addf %581, %585 : vector<32x512xf32>
    %587 = vector.extract_strided_slice %571 {offsets = [3, 0], sizes = [1, 512], strides = [1, 1]} : vector<4x512xf32> to vector<1x512xf32>
    %588 = vector.broadcast %23 : vector<32x1xf32> to vector<32x512xf32>
    %589 = vector.broadcast %587 : vector<1x512xf32> to vector<32x512xf32>
    %590 = arith.mulf %588, %589 : vector<32x512xf32>
    %591 = arith.addf %586, %590 : vector<32x512xf32>
    %592 = vector.extract_strided_slice %497 {offsets = [0, 0], sizes = [1, 512], strides = [1, 1]} : vector<8x512xf32> to vector<1x512xf32>
    %593 = vector.broadcast %25 : vector<32x1xf32> to vector<32x512xf32>
    %594 = vector.broadcast %592 : vector<1x512xf32> to vector<32x512xf32>
    %595 = arith.mulf %593, %594 : vector<32x512xf32>
    %596 = arith.addf %591, %595 : vector<32x512xf32>
    %597 = vector.extract_strided_slice %497 {offsets = [1, 0], sizes = [1, 512], strides = [1, 1]} : vector<8x512xf32> to vector<1x512xf32>
    %598 = vector.broadcast %27 : vector<32x1xf32> to vector<32x512xf32>
    %599 = vector.broadcast %597 : vector<1x512xf32> to vector<32x512xf32>
    %600 = arith.mulf %598, %599 : vector<32x512xf32>
    %601 = arith.addf %596, %600 : vector<32x512xf32>
    %602 = vector.extract_strided_slice %497 {offsets = [2, 0], sizes = [1, 512], strides = [1, 1]} : vector<8x512xf32> to vector<1x512xf32>
    %603 = vector.broadcast %29 : vector<32x1xf32> to vector<32x512xf32>
    %604 = vector.broadcast %602 : vector<1x512xf32> to vector<32x512xf32>
    %605 = arith.mulf %603, %604 : vector<32x512xf32>
    %606 = arith.addf %601, %605 : vector<32x512xf32>
    %607 = vector.extract_strided_slice %497 {offsets = [3, 0], sizes = [1, 512], strides = [1, 1]} : vector<8x512xf32> to vector<1x512xf32>
    %608 = vector.broadcast %31 : vector<32x1xf32> to vector<32x512xf32>
    %609 = vector.broadcast %607 : vector<1x512xf32> to vector<32x512xf32>
    %610 = arith.mulf %608, %609 : vector<32x512xf32>
    %611 = arith.addf %606, %610 : vector<32x512xf32>
    %612 = vector.extract_strided_slice %497 {offsets = [4, 0], sizes = [1, 512], strides = [1, 1]} : vector<8x512xf32> to vector<1x512xf32>
    %613 = vector.broadcast %33 : vector<32x1xf32> to vector<32x512xf32>
    %614 = vector.broadcast %612 : vector<1x512xf32> to vector<32x512xf32>
    %615 = arith.mulf %613, %614 : vector<32x512xf32>
    %616 = arith.addf %611, %615 : vector<32x512xf32>
    %617 = vector.extract_strided_slice %497 {offsets = [5, 0], sizes = [1, 512], strides = [1, 1]} : vector<8x512xf32> to vector<1x512xf32>
    %618 = vector.broadcast %35 : vector<32x1xf32> to vector<32x512xf32>
    %619 = vector.broadcast %617 : vector<1x512xf32> to vector<32x512xf32>
    %620 = arith.mulf %618, %619 : vector<32x512xf32>
    %621 = arith.addf %616, %620 : vector<32x512xf32>
    %622 = vector.extract_strided_slice %497 {offsets = [6, 0], sizes = [1, 512], strides = [1, 1]} : vector<8x512xf32> to vector<1x512xf32>
    %623 = vector.broadcast %37 : vector<32x1xf32> to vector<32x512xf32>
    %624 = vector.broadcast %622 : vector<1x512xf32> to vector<32x512xf32>
    %625 = arith.mulf %623, %624 : vector<32x512xf32>
    %626 = arith.addf %621, %625 : vector<32x512xf32>
    %627 = vector.extract_strided_slice %497 {offsets = [7, 0], sizes = [1, 512], strides = [1, 1]} : vector<8x512xf32> to vector<1x512xf32>
    %628 = vector.broadcast %39 : vector<32x1xf32> to vector<32x512xf32>
    %629 = vector.broadcast %627 : vector<1x512xf32> to vector<32x512xf32>
    %630 = arith.mulf %628, %629 : vector<32x512xf32>
    %631 = arith.addf %626, %630 : vector<32x512xf32>
    %632 = vector.extract_strided_slice %631 {offsets = [0, 0], sizes = [8, 512], strides = [1, 1]} : vector<32x512xf32> to vector<8x512xf32>
    %633 = arith.negf %632 : vector<8x512xf32>
    %634 = math.exp %633 : vector<8x512xf32>
    %cst_97 = arith.constant 1.000000e+00 : f32
    %635 = vector.broadcast %cst_97 : f32 to vector<8x512xf32>
    %636 = arith.addf %635, %634 : vector<8x512xf32>
    %637 = arith.divf %635, %636 : vector<8x512xf32>
    %638 = vector.extract_strided_slice %631 {offsets = [8, 0], sizes = [8, 512], strides = [1, 1]} : vector<32x512xf32> to vector<8x512xf32>
    %639 = arith.negf %638 : vector<8x512xf32>
    %640 = math.exp %639 : vector<8x512xf32>
    %cst_98 = arith.constant 1.000000e+00 : f32
    %641 = vector.broadcast %cst_98 : f32 to vector<8x512xf32>
    %642 = arith.addf %641, %640 : vector<8x512xf32>
    %643 = arith.divf %641, %642 : vector<8x512xf32>
    %644 = vector.extract_strided_slice %631 {offsets = [16, 0], sizes = [8, 512], strides = [1, 1]} : vector<32x512xf32> to vector<8x512xf32>
    %645 = math.tanh %644 : vector<8x512xf32>
    %646 = vector.extract_strided_slice %631 {offsets = [24, 0], sizes = [8, 512], strides = [1, 1]} : vector<32x512xf32> to vector<8x512xf32>
    %647 = arith.negf %646 : vector<8x512xf32>
    %648 = math.exp %647 : vector<8x512xf32>
    %cst_99 = arith.constant 1.000000e+00 : f32
    %649 = vector.broadcast %cst_99 : f32 to vector<8x512xf32>
    %650 = arith.addf %649, %648 : vector<8x512xf32>
    %651 = arith.divf %649, %650 : vector<8x512xf32>
    %652 = arith.mulf %643, %495 : vector<8x512xf32>
    %653 = arith.mulf %637, %645 : vector<8x512xf32>
    %654 = arith.addf %652, %653 : vector<8x512xf32>
    %655 = math.tanh %654 : vector<8x512xf32>
    %656 = arith.mulf %651, %655 : vector<8x512xf32>
    %657 = vector.extract_strided_slice %656 {offsets = [0, 0], sizes = [1, 512], strides = [1, 1]} : vector<8x512xf32> to vector<1x512xf32>
    %658 = vector.broadcast %41 : vector<4x1xf32> to vector<4x512xf32>
    %659 = vector.broadcast %657 : vector<1x512xf32> to vector<4x512xf32>
    %660 = arith.mulf %658, %659 : vector<4x512xf32>
    %661 = arith.addf %61, %660 : vector<4x512xf32>
    %662 = vector.extract_strided_slice %656 {offsets = [1, 0], sizes = [1, 512], strides = [1, 1]} : vector<8x512xf32> to vector<1x512xf32>
    %663 = vector.broadcast %43 : vector<4x1xf32> to vector<4x512xf32>
    %664 = vector.broadcast %662 : vector<1x512xf32> to vector<4x512xf32>
    %665 = arith.mulf %663, %664 : vector<4x512xf32>
    %666 = arith.addf %661, %665 : vector<4x512xf32>
    %667 = vector.extract_strided_slice %656 {offsets = [2, 0], sizes = [1, 512], strides = [1, 1]} : vector<8x512xf32> to vector<1x512xf32>
    %668 = vector.broadcast %45 : vector<4x1xf32> to vector<4x512xf32>
    %669 = vector.broadcast %667 : vector<1x512xf32> to vector<4x512xf32>
    %670 = arith.mulf %668, %669 : vector<4x512xf32>
    %671 = arith.addf %666, %670 : vector<4x512xf32>
    %672 = vector.extract_strided_slice %656 {offsets = [3, 0], sizes = [1, 512], strides = [1, 1]} : vector<8x512xf32> to vector<1x512xf32>
    %673 = vector.broadcast %47 : vector<4x1xf32> to vector<4x512xf32>
    %674 = vector.broadcast %672 : vector<1x512xf32> to vector<4x512xf32>
    %675 = arith.mulf %673, %674 : vector<4x512xf32>
    %676 = arith.addf %671, %675 : vector<4x512xf32>
    %677 = vector.extract_strided_slice %656 {offsets = [4, 0], sizes = [1, 512], strides = [1, 1]} : vector<8x512xf32> to vector<1x512xf32>
    %678 = vector.broadcast %49 : vector<4x1xf32> to vector<4x512xf32>
    %679 = vector.broadcast %677 : vector<1x512xf32> to vector<4x512xf32>
    %680 = arith.mulf %678, %679 : vector<4x512xf32>
    %681 = arith.addf %676, %680 : vector<4x512xf32>
    %682 = vector.extract_strided_slice %656 {offsets = [5, 0], sizes = [1, 512], strides = [1, 1]} : vector<8x512xf32> to vector<1x512xf32>
    %683 = vector.broadcast %51 : vector<4x1xf32> to vector<4x512xf32>
    %684 = vector.broadcast %682 : vector<1x512xf32> to vector<4x512xf32>
    %685 = arith.mulf %683, %684 : vector<4x512xf32>
    %686 = arith.addf %681, %685 : vector<4x512xf32>
    %687 = vector.extract_strided_slice %656 {offsets = [6, 0], sizes = [1, 512], strides = [1, 1]} : vector<8x512xf32> to vector<1x512xf32>
    %688 = vector.broadcast %53 : vector<4x1xf32> to vector<4x512xf32>
    %689 = vector.broadcast %687 : vector<1x512xf32> to vector<4x512xf32>
    %690 = arith.mulf %688, %689 : vector<4x512xf32>
    %691 = arith.addf %686, %690 : vector<4x512xf32>
    %692 = vector.extract_strided_slice %656 {offsets = [7, 0], sizes = [1, 512], strides = [1, 1]} : vector<8x512xf32> to vector<1x512xf32>
    %693 = vector.broadcast %55 : vector<4x1xf32> to vector<4x512xf32>
    %694 = vector.broadcast %692 : vector<1x512xf32> to vector<4x512xf32>
    %695 = arith.mulf %693, %694 : vector<4x512xf32>
    %696 = arith.addf %691, %695 : vector<4x512xf32>
    %cst_100 = arith.constant 2.500000e-01 : f32
    %697 = vector.broadcast %cst_100 : f32 to vector<4x512xf32>
    %698 = arith.mulf %696, %697 : vector<4x512xf32>
    %699 = arith.subf %540, %698 : vector<4x512xf32>
    %c0_101 = arith.constant 0 : index
    %c0_102 = arith.constant 0 : index
    %700 = vector.load %arg10[%c0_101, %c0_102] : memref<4x512xf32, #tpu.memory_space<vmem>>, vector<4x512xf32>
    tpu.vector_store %arg10[%c0_101, %c0_102], %699 {strides = array<i32>} : memref<4x512xf32, #tpu.memory_space<vmem>>, vector<4x512xf32>,
    %c0_103 = arith.constant 0 : index
    %c0_104 = arith.constant 0 : index
    %701 = vector.load %arg11[%c0_103, %c0_104] : memref<8x512xf32, #tpu.memory_space<vmem>>, vector<8x512xf32>
    tpu.vector_store %arg11[%c0_103, %c0_104], %656 {strides = array<i32>} : memref<8x512xf32, #tpu.memory_space<vmem>>, vector<8x512xf32>,
    %c0_105 = arith.constant 0 : index
    %c0_106 = arith.constant 0 : index
    %702 = vector.load %arg12[%c0_105, %c0_106] : memref<8x512xf32, #tpu.memory_space<vmem>>, vector<8x512xf32>
    tpu.vector_store %arg12[%c0_105, %c0_106], %654 {strides = array<i32>} : memref<8x512xf32, #tpu.memory_space<vmem>>, vector<8x512xf32>,
    %703 = math.sqrt %568 : f32
    %704 = vector.broadcast %703 : f32 to vector<1x1xf32>
    %c0_107 = arith.constant 0 : index
    %c0_108 = arith.constant 0 : index
    %705 = vector.load %arg13[%c0_107, %c0_108] : memref<1x1xf32, #tpu.memory_space<vmem>>, vector<1x1xf32>
    tpu.vector_store %arg13[%c0_107, %c0_108], %704 {strides = array<i32>} : memref<1x1xf32, #tpu.memory_space<vmem>>, vector<1x1xf32>,
    return
  }
}

</mosaic_0001>

<llo_original>
// kernel: tpu_custom_call.1
$region0: #{tpu_custom_call.1}
  #allocation0 [shape = 'u32[]', space=smem, size = 0x4, offset = 0x4, fixed_abs, tag = 'smem constant byte address 0x4 - core index']
  #allocation1 [shape = 'u32[144,128]{1,0:T(1,128)}', space=vmem, size = 0x12000, scoped, tag = 'internal scratch']
  %s0 = inlined_call_operand.vmem [shape: f32[4,512], index: 0, kind: input, shape index: {}]
  %s1 = inlined_call_operand.vmem [shape: f32[4,512], index: 1, kind: input, shape index: {}]
  %s2 = inlined_call_operand.vmem [shape: f32[4,512], index: 2, kind: input, shape index: {}]
  %s3 = inlined_call_operand.vmem [shape: f32[4,4,1], index: 3, kind: input, shape index: {}]
  %s4 = inlined_call_operand.vmem [shape: f32[4,1], index: 4, kind: input, shape index: {}]
  %s5 = inlined_call_operand.vmem [shape: f32[4,32,1], index: 5, kind: input, shape index: {}]
  %s6 = inlined_call_operand.vmem [shape: f32[8,32,1], index: 6, kind: input, shape index: {}]
  %s7 = inlined_call_operand.vmem [shape: f32[32,1], index: 7, kind: input, shape index: {}]
  %s8 = inlined_call_operand.vmem [shape: f32[8,4,1], index: 8, kind: input, shape index: {}]
  %s9 = inlined_call_operand.vmem [shape: f32[4,1], index: 9, kind: input, shape index: {}]
  %s10 = inlined_call_operand.hbm [shape: f32[4,512], index: 10, kind: output, shape index: {0}]
  %s11 = inlined_call_operand.hbm [shape: f32[8,512], index: 11, kind: output, shape index: {1}]
  %s12 = inlined_call_operand.hbm [shape: f32[8,512], index: 12, kind: output, shape index: {2}]
  %s13 = inlined_call_operand.hbm [shape: f32[1,1], index: 13, kind: output, shape index: {3}]
  %14 = xla_tuple %s10, %s11, %s12, %s13
  %s15 = sld [smem:[#allocation0]]
  $region74: #{tpu_custom_call.1} parent=0
    _
  %s17 = ssub.s32 1, %s15
  %s18 = scalar_select 0, %s17, %s15
  $region1: #{tpu_custom_call.1} parent=0
    #allocation2 [shape = 'u8[8192]{0}', space=vmem, size = 0x2000, scoped, tag = 'output window, operand 0, single buffered']
    #allocation3 [shape = 's32[1]{0}', space=sflag, size = 0x4, scoped, tag = 'scoped memory for tpu_custom_call.1']
    #allocation4 [shape = 'u8[16384]{0}', space=vmem, size = 0x4000, scoped, tag = 'output window, operand 1, single buffered']
    #allocation5 [shape = 's32[1]{0}', space=sflag, size = 0x4, scoped, tag = 'scoped memory for tpu_custom_call.1']
    #allocation6 [shape = 'u8[16384]{0}', space=vmem, size = 0x4000, scoped, tag = 'output window, operand 2, single buffered']
    #allocation7 [shape = 'u8[512]{0}', space=vmem, size = 0x400, scoped, tag = 'output window, operand 3, single buffered']
    #allocation8 [shape = 's32[1]{0}', space=sflag, size = 0x4, scoped, tag = 'scoped memory for tpu_custom_call.1']
    %19 = vsyncpa [#allocation3], 0
    %20 = vsyncpa [#allocation5], 0
    %21 = vsyncpa [#allocation8], 0
    // Predicated region
    $region2: #{tpu_custom_call.1} parent=1 // pred_check
      _
    $region3: #{tpu_custom_call.1} parent=1 // pred_check_branch
      %23 = sbr.rel (0) target = $region5
    $region4: #{tpu_custom_call.1} parent=1 // pred_region
      _
    $region5: #{tpu_custom_call.1} parent=1 // pred_fallthru
      _
    // Predicated region
    $region6: #{tpu_custom_call.1} parent=1 // pred_check
      _
    $region7: #{tpu_custom_call.1} parent=1 // pred_check_branch
      %25 = sbr.rel (0) target = $region9
    $region8: #{tpu_custom_call.1} parent=1 // pred_region
      _
    $region9: #{tpu_custom_call.1} parent=1 // pred_fallthru
      _
    // Predicated region
    $region10: #{tpu_custom_call.1} parent=1 // pred_check
      _
    $region11: #{tpu_custom_call.1} parent=1 // pred_check_branch
      %27 = sbr.rel (0) target = $region13
    $region12: #{tpu_custom_call.1} parent=1 // pred_region
      _
    $region13: #{tpu_custom_call.1} parent=1 // pred_fallthru
      _
    // Predicated region
    $region14: #{tpu_custom_call.1} parent=1 // pred_check
      _
    $region15: #{tpu_custom_call.1} parent=1 // pred_check_branch
      %29 = sbr.rel (0) target = $region17
    $region16: #{tpu_custom_call.1} parent=1 // pred_region
      _
    $region17: #{tpu_custom_call.1} parent=1 // pred_fallthru
      _
    // Predicated region
    $region18: #{tpu_custom_call.1} parent=1 // pred_check
      _
    $region19: #{tpu_custom_call.1} parent=1 // pred_check_branch
      %31 = sbr.rel (0) target = $region21
    $region20: #{tpu_custom_call.1} parent=1 // pred_region
      _
    $region21: #{tpu_custom_call.1} parent=1 // pred_fallthru
      _
    // Predicated region
    $region22: #{tpu_custom_call.1} parent=1 // pred_check
      _
    $region23: #{tpu_custom_call.1} parent=1 // pred_check_branch
      %33 = sbr.rel (0) target = $region25
    $region24: #{tpu_custom_call.1} parent=1 // pred_region
      _
    $region25: #{tpu_custom_call.1} parent=1 // pred_fallthru
      _
    // Predicated region
    $region26: #{tpu_custom_call.1} parent=1 // pred_check
      _
    $region27: #{tpu_custom_call.1} parent=1 // pred_check_branch
      %35 = sbr.rel (0) target = $region29
    $region28: #{tpu_custom_call.1} parent=1 // pred_region
      _
    $region29: #{tpu_custom_call.1} parent=1 // pred_fallthru
      _
    // Predicated region
    $region30: #{tpu_custom_call.1} parent=1 // pred_check
      _
    $region31: #{tpu_custom_call.1} parent=1 // pred_check_branch
      %37 = sbr.rel (0) target = $region33
    $region32: #{tpu_custom_call.1} parent=1 // pred_region
      _
    $region33: #{tpu_custom_call.1} parent=1 // pred_fallthru
      _
    // Predicated region
    $region34: #{tpu_custom_call.1} parent=1 // pred_check
      _
    $region35: #{tpu_custom_call.1} parent=1 // pred_check_branch
      %39 = sbr.rel (0) target = $region37
    $region36: #{tpu_custom_call.1} parent=1 // pred_region
      _
    $region37: #{tpu_custom_call.1} parent=1 // pred_fallthru
      _
    // Predicated region
    $region38: #{tpu_custom_call.1} parent=1 // pred_check
      _
    $region39: #{tpu_custom_call.1} parent=1 // pred_check_branch
      %41 = sbr.rel (0) target = $region41
    $region40: #{tpu_custom_call.1} parent=1 // pred_region
      _
    $region41: #{tpu_custom_call.1} parent=1 // pred_fallthru
      _
    %v42 = vld [vmem:[%s0] sm:$0xff]
    %v43 = vld [vmem:[%s0 + $0x8] sm:$0xff]
    %v44 = vld [vmem:[%s1] sm:$0xff]
    %v45 = vld [vmem:[%s1 + $0x8] sm:$0xff]
    %v46 = vld [vmem:[%s2] sm:$0xff]
    %v47 = vld [vmem:[%s2 + $0x8] sm:$0xff]
    %v48 = vld [vmem:[%s4] sm:$0xf]
    %50 = vset.pattern.permute.xlu0 0
    %51 = vperm.xlu0 %50, %v48
    %v52 = vpop.permute.xlu0 %51
    %v56 = vcombine.high %v46, %v46
    %v57 = vcombine.high %v47, %v47
    %v60 = vmul.f32 %v52, %v46
    %v61 = vmul.f32 %v52, %v56
    %v62 = vmul.f32 %v52, %v47
    %v63 = vmul.f32 %v52, %v57
    %v64 = vmul.f32 %v60, %v46
    %v65 = vmul.f32 %v61, %v56
    %v66 = vmul.f32 %v62, %v47
    %v67 = vmul.f32 %v63, %v57
    %v70 = vcombine.high %v44, %v44
    %v71 = vcombine.high %v45, %v45
    %v74 = vmul.f32 %v64, %v44
    %v75 = vmul.f32 %v65, %v70
    %v76 = vmul.f32 %v66, %v45
    %v77 = vmul.f32 %v67, %v71
    %v78 = vld [vmem:[%s3] sm:$0xf]
    %s79 = scalar_lea.vmem %s3, 4
    %v80 = vld [vmem:[%s79] sm:$0xf]
    %s81 = scalar_lea.vmem %s3, 8
    %v82 = vld [vmem:[%s81] sm:$0xf]
    %s83 = scalar_lea.vmem %s3, 12
    %v84 = vld [vmem:[%s83] sm:$0xf]
    %v85 = vld [vmem:[%s5] sm:$0xff]
    %v86 = vld [vmem:[%s5 + $0x8] sm:$0xff]
    %v87 = vld [vmem:[%s5 + $0x10] sm:$0xff]
    %v88 = vld [vmem:[%s5 + $0x18] sm:$0xff]
    %s89 = scalar_lea.vmem %s5, 32
    %v90 = vld [vmem:[%s89] sm:$0xff]
    %v91 = vld [vmem:[%s89 + $0x8] sm:$0xff]
    %v92 = vld [vmem:[%s89 + $0x10] sm:$0xff]
    %v93 = vld [vmem:[%s89 + $0x18] sm:$0xff]
    %s94 = scalar_lea.vmem %s5, 64
    %v95 = vld [vmem:[%s94] sm:$0xff]
    %v96 = vld [vmem:[%s94 + $0x8] sm:$0xff]
    %v97 = vld [vmem:[%s94 + $0x10] sm:$0xff]
    %v98 = vld [vmem:[%s94 + $0x18] sm:$0xff]
    %s99 = scalar_lea.vmem %s5, 96
    %v100 = vld [vmem:[%s99] sm:$0xff]
    %v101 = vld [vmem:[%s99 + $0x8] sm:$0xff]
    %v102 = vld [vmem:[%s99 + $0x10] sm:$0xff]
    %v103 = vld [vmem:[%s99 + $0x18] sm:$0xff]
    %v104 = vld [vmem:[%s6] sm:$0xff]
    %v105 = vld [vmem:[%s6 + $0x8] sm:$0xff]
    %v106 = vld [vmem:[%s6 + $0x10] sm:$0xff]
    %v107 = vld [vmem:[%s6 + $0x18] sm:$0xff]
    %s108 = scalar_lea.vmem %s6, 32
    %v109 = vld [vmem:[%s108] sm:$0xff]
    %v110 = vld [vmem:[%s108 + $0x8] sm:$0xff]
    %v111 = vld [vmem:[%s108 + $0x10] sm:$0xff]
    %v112 = vld [vmem:[%s108 + $0x18] sm:$0xff]
    %s113 = scalar_lea.vmem %s6, 64
    %v114 = vld [vmem:[%s113] sm:$0xff]
    %v115 = vld [vmem:[%s113 + $0x8] sm:$0xff]
    %v116 = vld [vmem:[%s113 + $0x10] sm:$0xff]
    %v117 = vld [vmem:[%s113 + $0x18] sm:$0xff]
    %s118 = scalar_lea.vmem %s6, 96
    %v119 = vld [vmem:[%s118] sm:$0xff]
    %v120 = vld [vmem:[%s118 + $0x8] sm:$0xff]
    %v121 = vld [vmem:[%s118 + $0x10] sm:$0xff]
    %v122 = vld [vmem:[%s118 + $0x18] sm:$0xff]
    %s123 = scalar_lea.vmem %s6, 128
    %v124 = vld [vmem:[%s123] sm:$0xff]
    %v125 = vld [vmem:[%s123 + $0x8] sm:$0xff]
    %v126 = vld [vmem:[%s123 + $0x10] sm:$0xff]
    %v127 = vld [vmem:[%s123 + $0x18] sm:$0xff]
    %s128 = scalar_lea.vmem %s6, 160
    %v129 = vld [vmem:[%s128] sm:$0xff]
    %v130 = vld [vmem:[%s128 + $0x8] sm:$0xff]
    %v131 = vld [vmem:[%s128 + $0x10] sm:$0xff]
    %v132 = vld [vmem:[%s128 + $0x18] sm:$0xff]
    %s133 = scalar_lea.vmem %s6, 192
    %v134 = vld [vmem:[%s133] sm:$0xff]
    %v135 = vld [vmem:[%s133 + $0x8] sm:$0xff]
    %v136 = vld [vmem:[%s133 + $0x10] sm:$0xff]
    %v137 = vld [vmem:[%s133 + $0x18] sm:$0xff]
    %s138 = scalar_lea.vmem %s6, 224
    %v139 = vld [vmem:[%s138] sm:$0xff]
    %v140 = vld [vmem:[%s138 + $0x8] sm:$0xff]
    %v141 = vld [vmem:[%s138 + $0x10] sm:$0xff]
    %v142 = vld [vmem:[%s138 + $0x18] sm:$0xff]
    %v143 = vld [vmem:[%s8] sm:$0xf]
    %s144 = scalar_lea.vmem %s8, 4
    %v145 = vld [vmem:[%s144] sm:$0xf]
    %s146 = scalar_lea.vmem %s8, 8
    %v147 = vld [vmem:[%s146] sm:$0xf]
    %s148 = scalar_lea.vmem %s8, 12
    %v149 = vld [vmem:[%s148] sm:$0xf]
    %s150 = scalar_lea.vmem %s8, 16
    %v151 = vld [vmem:[%s150] sm:$0xf]
    %s152 = scalar_lea.vmem %s8, 20
    %v153 = vld [vmem:[%s152] sm:$0xf]
    %s154 = scalar_lea.vmem %s8, 24
    %v155 = vld [vmem:[%s154] sm:$0xf]
    %s156 = scalar_lea.vmem %s8, 28
    %v157 = vld [vmem:[%s156] sm:$0xf]
    %v158 = vld [vmem:[%s7] sm:$0xff]
    %v159 = vld [vmem:[%s7 + $0x8] sm:$0xff]
    %v160 = vld [vmem:[%s7 + $0x10] sm:$0xff]
    %v161 = vld [vmem:[%s7 + $0x18] sm:$0xff]
    %163 = vset.pattern.permute.xlu0 0
    %164 = vperm.xlu0 %163, %v158
    %v165 = vpop.permute.xlu0 %164
    %168 = vset.pattern.permute.xlu0 0
    %169 = vperm.xlu0 %168, %v159
    %v170 = vpop.permute.xlu0 %169
    %173 = vset.pattern.permute.xlu0 0
    %174 = vperm.xlu0 %173, %v160
    %v175 = vpop.permute.xlu0 %174
    %178 = vset.pattern.permute.xlu0 0
    %179 = vperm.xlu0 %178, %v161
    %v180 = vpop.permute.xlu0 %179
    %v182 = vld [vmem:[%s9] sm:$0xf]
    %184 = vset.pattern.permute.xlu0 0
    %185 = vperm.xlu0 %184, %v182
    %v186 = vpop.permute.xlu0 %185
    %v190 = vcombine.high %v42, %v42
    %v191 = vcombine.high %v43, %v43
    %v194 = vmul.f32 %v64, %v42
    %v195 = vmul.f32 %v65, %v190
    %v196 = vmul.f32 %v66, %v43
    %v197 = vmul.f32 %v67, %v191
    %v198 = vsub.f32 %v194, %v74
    %v199 = vsub.f32 %v195, %v75
    %v200 = vsub.f32 %v196, %v76
    %v201 = vsub.f32 %v197, %v77
    %203 = vset.pattern.permute.xlu0 0
    %204 = vperm.xlu0 %203, %v78
    %v205 = vpop.permute.xlu0 %204
    %v207 = vlaneseq
    %v208 = vshrl.u32 %v207, 7
    %v209 = vsub.s32 0, %v208
    %v210 = vrot.slane %v42, %v209
    %v211 = vlaneseq
    %v212 = vshrl.u32 %v211, 7
    %v213 = vsub.s32 4, %v212
    %v214 = vrot.slane %v42, %v213
    %v215 = vlaneseq
    %v216 = vshrl.u32 %v215, 7
    %v217 = vsub.s32 0, %v216
    %v218 = vrot.slane %v43, %v217
    %v219 = vlaneseq
    %v220 = vshrl.u32 %v219, 7
    %v221 = vsub.s32 4, %v220
    %v222 = vrot.slane %v43, %v221
    %v227 = vlaneseq
    %v228 = vshrl.u32 %v227, 7
    %v229 = vsub.s32 0, %v228
    %v230 = vrot.slane %v210, %v229
    %v231 = vlaneseq
    %v232 = vshrl.u32 %v231, 7
    %v233 = vsub.s32 0, %v232
    %v234 = vrot.slane %v214, %v233
    %v235 = vlaneseq
    %v236 = vshrl.u32 %v235, 7
    %v237 = vsub.s32 0, %v236
    %v238 = vrot.slane %v218, %v237
    %v239 = vlaneseq
    %v240 = vshrl.u32 %v239, 7
    %v241 = vsub.s32 0, %v240
    %v242 = vrot.slane %v222, %v241
    %v243 = vmul.f32 %v205, %v230
    %v244 = vmul.f32 %v205, %v234
    %v245 = vmul.f32 %v205, %v238
    %v246 = vmul.f32 %v205, %v242
    %v247 = vadd.f32 %v198, %v243
    %v248 = vadd.f32 %v199, %v244
    %v249 = vadd.f32 %v200, %v245
    %v250 = vadd.f32 %v201, %v246
    %252 = vset.pattern.permute.xlu0 0
    %253 = vperm.xlu0 %252, %v80
    %v254 = vpop.permute.xlu0 %253
    %v256 = vlaneseq
    %v257 = vshrl.u32 %v256, 7
    %v258 = vsub.s32 1, %v257
    %v259 = vrot.slane %v42, %v258
    %v260 = vlaneseq
    %v261 = vshrl.u32 %v260, 7
    %v262 = vsub.s32 5, %v261
    %v263 = vrot.slane %v42, %v262
    %v264 = vlaneseq
    %v265 = vshrl.u32 %v264, 7
    %v266 = vsub.s32 1, %v265
    %v267 = vrot.slane %v43, %v266
    %v268 = vlaneseq
    %v269 = vshrl.u32 %v268, 7
    %v270 = vsub.s32 5, %v269
    %v271 = vrot.slane %v43, %v270
    %v276 = vlaneseq
    %v277 = vshrl.u32 %v276, 7
    %v278 = vsub.s32 1, %v277
    %v279 = vrot.slane %v259, %v278
    %v280 = vlaneseq
    %v281 = vshrl.u32 %v280, 7
    %v282 = vsub.s32 1, %v281
    %v283 = vrot.slane %v263, %v282
    %v284 = vlaneseq
    %v285 = vshrl.u32 %v284, 7
    %v286 = vsub.s32 1, %v285
    %v287 = vrot.slane %v267, %v286
    %v288 = vlaneseq
    %v289 = vshrl.u32 %v288, 7
    %v290 = vsub.s32 1, %v289
    %v291 = vrot.slane %v271, %v290
    %v292 = vmul.f32 %v254, %v279
    %v293 = vmul.f32 %v254, %v283
    %v294 = vmul.f32 %v254, %v287
    %v295 = vmul.f32 %v254, %v291
    %v296 = vadd.f32 %v247, %v292
    %v297 = vadd.f32 %v248, %v293
    %v298 = vadd.f32 %v249, %v294
    %v299 = vadd.f32 %v250, %v295
    %301 = vset.pattern.permute.xlu0 0
    %302 = vperm.xlu0 %301, %v82
    %v303 = vpop.permute.xlu0 %302
    %v305 = vlaneseq
    %v306 = vshrl.u32 %v305, 7
    %v307 = vsub.s32 2, %v306
    %v308 = vrot.slane %v42, %v307
    %v309 = vlaneseq
    %v310 = vshrl.u32 %v309, 7
    %v311 = vsub.s32 6, %v310
    %v312 = vrot.slane %v42, %v311
    %v313 = vlaneseq
    %v314 = vshrl.u32 %v313, 7
    %v315 = vsub.s32 2, %v314
    %v316 = vrot.slane %v43, %v315
    %v317 = vlaneseq
    %v318 = vshrl.u32 %v317, 7
    %v319 = vsub.s32 6, %v318
    %v320 = vrot.slane %v43, %v319
    %v325 = vlaneseq
    %v326 = vshrl.u32 %v325, 7
    %v327 = vsub.s32 2, %v326
    %v328 = vrot.slane %v308, %v327
    %v329 = vlaneseq
    %v330 = vshrl.u32 %v329, 7
    %v331 = vsub.s32 2, %v330
    %v332 = vrot.slane %v312, %v331
    %v333 = vlaneseq
    %v334 = vshrl.u32 %v333, 7
    %v335 = vsub.s32 2, %v334
    %v336 = vrot.slane %v316, %v335
    %v337 = vlaneseq
    %v338 = vshrl.u32 %v337, 7
    %v339 = vsub.s32 2, %v338
    %v340 = vrot.slane %v320, %v339
    %v341 = vmul.f32 %v303, %v328
    %v342 = vmul.f32 %v303, %v332
    %v343 = vmul.f32 %v303, %v336
    %v344 = vmul.f32 %v303, %v340
    %v345 = vadd.f32 %v296, %v341
    %v346 = vadd.f32 %v297, %v342
    %v347 = vadd.f32 %v298, %v343
    %v348 = vadd.f32 %v299, %v344
    %350 = vset.pattern.permute.xlu0 0
    %351 = vperm.xlu0 %350, %v84
    %v352 = vpop.permute.xlu0 %351
    %v354 = vlaneseq
    %v355 = vshrl.u32 %v354, 7
    %v356 = vsub.s32 3, %v355
    %v357 = vrot.slane %v42, %v356
    %v358 = vlaneseq
    %v359 = vshrl.u32 %v358, 7
    %v360 = vsub.s32 7, %v359
    %v361 = vrot.slane %v42, %v360
    %v362 = vlaneseq
    %v363 = vshrl.u32 %v362, 7
    %v364 = vsub.s32 3, %v363
    %v365 = vrot.slane %v43, %v364
    %v366 = vlaneseq
    %v367 = vshrl.u32 %v366, 7
    %v368 = vsub.s32 7, %v367
    %v369 = vrot.slane %v43, %v368
    %v374 = vlaneseq
    %v375 = vshrl.u32 %v374, 7
    %v376 = vsub.s32 3, %v375
    %v377 = vrot.slane %v357, %v376
    %v378 = vlaneseq
    %v379 = vshrl.u32 %v378, 7
    %v380 = vsub.s32 3, %v379
    %v381 = vrot.slane %v361, %v380
    %v382 = vlaneseq
    %v383 = vshrl.u32 %v382, 7
    %v384 = vsub.s32 3, %v383
    %v385 = vrot.slane %v365, %v384
    %v386 = vlaneseq
    %v387 = vshrl.u32 %v386, 7
    %v388 = vsub.s32 3, %v387
    %v389 = vrot.slane %v369, %v388
    %v390 = vmul.f32 %v352, %v377
    %v391 = vmul.f32 %v352, %v381
    %v392 = vmul.f32 %v352, %v385
    %v393 = vmul.f32 %v352, %v389
    %v394 = vadd.f32 %v345, %v390
    %v395 = vadd.f32 %v346, %v391
    %v396 = vadd.f32 %v347, %v392
    %v397 = vadd.f32 %v348, %v393
    %v398 = vmul.f32 %v394, %v394
    %v399 = vmul.f32 %v395, %v395
    %v400 = vmul.f32 %v396, %v396
    %v401 = vmul.f32 %v397, %v397
    %vm402 = vcmask 1043456
    %v403 = vsel %vm402, %v398, 0.0
    %v404 = vsel %vm402, %v399, 0.0
    %v405 = vadd.f32 %v403, %v404
    %v406 = vsel %vm402, %v400, 0.0
    %v407 = vadd.f32 %v405, %v406
    %v408 = vsel %vm402, %v401, 0.0
    %v409 = vadd.f32 %v407, %v408
    %410 = vadd.xlane.f32.xlu0 %v409
    %v411 = vpop.xlane.xlu0 %410
    %v412 = vrot.slane %v411, 4
    %v413 = vadd.f32 %v411, %v412
    %v414 = vrot.slane %v413, 2
    %v415 = vadd.f32 %v413, %v414
    %v416 = vrot.slane %v415, 1
    %v417 = vadd.f32 %v415, %v416
    %s418 = vtos %v417
    %v419 = vrcp.pop 2048.0
    %s420 = vtos %v419
    %s421 = smul.f32 %s418, %s420
    %v422 = vstv %s421
    %v423 = vrsqrt.pop %v422
    %s424 = vtos %v423
    %v425 = vstv %s424
    %v426 = vmul.f32 %v394, %v425
    %v427 = vmul.f32 %v395, %v425
    %v428 = vmul.f32 %v396, %v425
    %v429 = vmul.f32 %v397, %v425
    %431 = vset.pattern.permute.xlu0 0
    %432 = vperm.xlu0 %431, %v85
    %v433 = vpop.permute.xlu0 %432
    %436 = vset.pattern.permute.xlu0 0
    %437 = vperm.xlu0 %436, %v86
    %v438 = vpop.permute.xlu0 %437
    %441 = vset.pattern.permute.xlu0 0
    %442 = vperm.xlu0 %441, %v87
    %v443 = vpop.permute.xlu0 %442
    %446 = vset.pattern.permute.xlu0 0
    %447 = vperm.xlu0 %446, %v88
    %v448 = vpop.permute.xlu0 %447
    %v450 = vlaneseq
    %v451 = vshrl.u32 %v450, 7
    %v452 = vsub.s32 0, %v451
    %v453 = vrot.slane %v426, %v452
    %v454 = vlaneseq
    %v455 = vshrl.u32 %v454, 7
    %v456 = vsub.s32 0, %v455
    %v457 = vrot.slane %v427, %v456
    %v458 = vlaneseq
    %v459 = vshrl.u32 %v458, 7
    %v460 = vsub.s32 0, %v459
    %v461 = vrot.slane %v428, %v460
    %v462 = vlaneseq
    %v463 = vshrl.u32 %v462, 7
    %v464 = vsub.s32 0, %v463
    %v465 = vrot.slane %v429, %v464
    %v466 = vmul.f32 %v433, %v453
    %v467 = vmul.f32 %v433, %v457
    %v468 = vmul.f32 %v433, %v461
    %v469 = vmul.f32 %v433, %v465
    %v470 = vmul.f32 %v438, %v453
    %v471 = vmul.f32 %v438, %v457
    %v472 = vmul.f32 %v438, %v461
    %v473 = vmul.f32 %v438, %v465
    %v474 = vmul.f32 %v443, %v453
    %v475 = vmul.f32 %v443, %v457
    %v476 = vmul.f32 %v443, %v461
    %v477 = vmul.f32 %v443, %v465
    %v478 = vmul.f32 %v448, %v453
    %v479 = vmul.f32 %v448, %v457
    %v480 = vmul.f32 %v448, %v461
    %v481 = vmul.f32 %v448, %v465
    %v482 = vadd.f32 %v165, %v466
    %v483 = vadd.f32 %v165, %v467
    %v484 = vadd.f32 %v165, %v468
    %v485 = vadd.f32 %v165, %v469
    %v486 = vadd.f32 %v170, %v470
    %v487 = vadd.f32 %v170, %v471
    %v488 = vadd.f32 %v170, %v472
    %v489 = vadd.f32 %v170, %v473
    %v490 = vadd.f32 %v175, %v474
    %v491 = vadd.f32 %v175, %v475
    %v492 = vadd.f32 %v175, %v476
    %v493 = vadd.f32 %v175, %v477
    %v494 = vadd.f32 %v180, %v478
    %v495 = vadd.f32 %v180, %v479
    %v496 = vadd.f32 %v180, %v480
    %v497 = vadd.f32 %v180, %v481
    %499 = vset.pattern.permute.xlu0 0
    %500 = vperm.xlu0 %499, %v90
    %v501 = vpop.permute.xlu0 %500
    %504 = vset.pattern.permute.xlu0 0
    %505 = vperm.xlu0 %504, %v91
    %v506 = vpop.permute.xlu0 %505
    %509 = vset.pattern.permute.xlu0 0
    %510 = vperm.xlu0 %509, %v92
    %v511 = vpop.permute.xlu0 %510
    %514 = vset.pattern.permute.xlu0 0
    %515 = vperm.xlu0 %514, %v93
    %v516 = vpop.permute.xlu0 %515
    %v518 = vlaneseq
    %v519 = vshrl.u32 %v518, 7
    %v520 = vsub.s32 1, %v519
    %v521 = vrot.slane %v426, %v520
    %v522 = vlaneseq
    %v523 = vshrl.u32 %v522, 7
    %v524 = vsub.s32 1, %v523
    %v525 = vrot.slane %v427, %v524
    %v526 = vlaneseq
    %v527 = vshrl.u32 %v526, 7
    %v528 = vsub.s32 1, %v527
    %v529 = vrot.slane %v428, %v528
    %v530 = vlaneseq
    %v531 = vshrl.u32 %v530, 7
    %v532 = vsub.s32 1, %v531
    %v533 = vrot.slane %v429, %v532
    %v534 = vmul.f32 %v501, %v521
    %v535 = vmul.f32 %v501, %v525
    %v536 = vmul.f32 %v501, %v529
    %v537 = vmul.f32 %v501, %v533
    %v538 = vmul.f32 %v506, %v521
    %v539 = vmul.f32 %v506, %v525
    %v540 = vmul.f32 %v506, %v529
    %v541 = vmul.f32 %v506, %v533
    %v542 = vmul.f32 %v511, %v521
    %v543 = vmul.f32 %v511, %v525
    %v544 = vmul.f32 %v511, %v529
    %v545 = vmul.f32 %v511, %v533
    %v546 = vmul.f32 %v516, %v521
    %v547 = vmul.f32 %v516, %v525
    %v548 = vmul.f32 %v516, %v529
    %v549 = vmul.f32 %v516, %v533
    %v550 = vadd.f32 %v482, %v534
    %v551 = vadd.f32 %v483, %v535
    %v552 = vadd.f32 %v484, %v536
    %v553 = vadd.f32 %v485, %v537
    %v554 = vadd.f32 %v486, %v538
    %v555 = vadd.f32 %v487, %v539
    %v556 = vadd.f32 %v488, %v540
    %v557 = vadd.f32 %v489, %v541
    %v558 = vadd.f32 %v490, %v542
    %v559 = vadd.f32 %v491, %v543
    %v560 = vadd.f32 %v492, %v544
    %v561 = vadd.f32 %v493, %v545
    %v562 = vadd.f32 %v494, %v546
    %v563 = vadd.f32 %v495, %v547
    %v564 = vadd.f32 %v496, %v548
    %v565 = vadd.f32 %v497, %v549
    %567 = vset.pattern.permute.xlu0 0
    %568 = vperm.xlu0 %567, %v95
    %v569 = vpop.permute.xlu0 %568
    %572 = vset.pattern.permute.xlu0 0
    %573 = vperm.xlu0 %572, %v96
    %v574 = vpop.permute.xlu0 %573
    %577 = vset.pattern.permute.xlu0 0
    %578 = vperm.xlu0 %577, %v97
    %v579 = vpop.permute.xlu0 %578
    %582 = vset.pattern.permute.xlu0 0
    %583 = vperm.xlu0 %582, %v98
    %v584 = vpop.permute.xlu0 %583
    %v586 = vlaneseq
    %v587 = vshrl.u32 %v586, 7
    %v588 = vsub.s32 2, %v587
    %v589 = vrot.slane %v426, %v588
    %v590 = vlaneseq
    %v591 = vshrl.u32 %v590, 7
    %v592 = vsub.s32 2, %v591
    %v593 = vrot.slane %v427, %v592
    %v594 = vlaneseq
    %v595 = vshrl.u32 %v594, 7
    %v596 = vsub.s32 2, %v595
    %v597 = vrot.slane %v428, %v596
    %v598 = vlaneseq
    %v599 = vshrl.u32 %v598, 7
    %v600 = vsub.s32 2, %v599
    %v601 = vrot.slane %v429, %v600
    %v602 = vmul.f32 %v569, %v589
    %v603 = vmul.f32 %v569, %v593
    %v604 = vmul.f32 %v569, %v597
    %v605 = vmul.f32 %v569, %v601
    %v606 = vmul.f32 %v574, %v589
    %v607 = vmul.f32 %v574, %v593
    %v608 = vmul.f32 %v574, %v597
    %v609 = vmul.f32 %v574, %v601
    %v610 = vmul.f32 %v579, %v589
    %v611 = vmul.f32 %v579, %v593
    %v612 = vmul.f32 %v579, %v597
    %v613 = vmul.f32 %v579, %v601
    %v614 = vmul.f32 %v584, %v589
    %v615 = vmul.f32 %v584, %v593
    %v616 = vmul.f32 %v584, %v597
    %v617 = vmul.f32 %v584, %v601
    %v618 = vadd.f32 %v550, %v602
    %v619 = vadd.f32 %v551, %v603
    %v620 = vadd.f32 %v552, %v604
    %v621 = vadd.f32 %v553, %v605
    %v622 = vadd.f32 %v554, %v606
    %v623 = vadd.f32 %v555, %v607
    %v624 = vadd.f32 %v556, %v608
    %v625 = vadd.f32 %v557, %v609
    %v626 = vadd.f32 %v558, %v610
    %v627 = vadd.f32 %v559, %v611
    %v628 = vadd.f32 %v560, %v612
    %v629 = vadd.f32 %v561, %v613
    %v630 = vadd.f32 %v562, %v614
    %v631 = vadd.f32 %v563, %v615
    %v632 = vadd.f32 %v564, %v616
    %v633 = vadd.f32 %v565, %v617
    %635 = vset.pattern.permute.xlu0 0
    %636 = vperm.xlu0 %635, %v100
    %v637 = vpop.permute.xlu0 %636
    %640 = vset.pattern.permute.xlu0 0
    %641 = vperm.xlu0 %640, %v101
    %v642 = vpop.permute.xlu0 %641
    %645 = vset.pattern.permute.xlu0 0
    %646 = vperm.xlu0 %645, %v102
    %v647 = vpop.permute.xlu0 %646
    %650 = vset.pattern.permute.xlu0 0
    %651 = vperm.xlu0 %650, %v103
    %v652 = vpop.permute.xlu0 %651
    %v654 = vlaneseq
    %v655 = vshrl.u32 %v654, 7
    %v656 = vsub.s32 3, %v655
    %v657 = vrot.slane %v426, %v656
    %v658 = vlaneseq
    %v659 = vshrl.u32 %v658, 7
    %v660 = vsub.s32 3, %v659
    %v661 = vrot.slane %v427, %v660
    %v662 = vlaneseq
    %v663 = vshrl.u32 %v662, 7
    %v664 = vsub.s32 3, %v663
    %v665 = vrot.slane %v428, %v664
    %v666 = vlaneseq
    %v667 = vshrl.u32 %v666, 7
    %v668 = vsub.s32 3, %v667
    %v669 = vrot.slane %v429, %v668
    %v670 = vmul.f32 %v637, %v657
    %v671 = vmul.f32 %v637, %v661
    %v672 = vmul.f32 %v637, %v665
    %v673 = vmul.f32 %v637, %v669
    %v674 = vmul.f32 %v642, %v657
    %v675 = vmul.f32 %v642, %v661
    %v676 = vmul.f32 %v642, %v665
    %v677 = vmul.f32 %v642, %v669
    %v678 = vmul.f32 %v647, %v657
    %v679 = vmul.f32 %v647, %v661
    %v680 = vmul.f32 %v647, %v665
    %v681 = vmul.f32 %v647, %v669
    %v682 = vmul.f32 %v652, %v657
    %v683 = vmul.f32 %v652, %v661
    %v684 = vmul.f32 %v652, %v665
    %v685 = vmul.f32 %v652, %v669
    %v686 = vadd.f32 %v618, %v670
    %v687 = vadd.f32 %v619, %v671
    %v688 = vadd.f32 %v620, %v672
    %v689 = vadd.f32 %v621, %v673
    %v690 = vadd.f32 %v622, %v674
    %v691 = vadd.f32 %v623, %v675
    %v692 = vadd.f32 %v624, %v676
    %v693 = vadd.f32 %v625, %v677
    %v694 = vadd.f32 %v626, %v678
    %v695 = vadd.f32 %v627, %v679
    %v696 = vadd.f32 %v628, %v680
    %v697 = vadd.f32 %v629, %v681
    %v698 = vadd.f32 %v630, %v682
    %v699 = vadd.f32 %v631, %v683
    %v700 = vadd.f32 %v632, %v684
    %v701 = vadd.f32 %v633, %v685
    %703 = vset.pattern.permute.xlu0 0
    %704 = vperm.xlu0 %703, %v104
    %v705 = vpop.permute.xlu0 %704
    %708 = vset.pattern.permute.xlu0 0
    %709 = vperm.xlu0 %708, %v105
    %v710 = vpop.permute.xlu0 %709
    %713 = vset.pattern.permute.xlu0 0
    %714 = vperm.xlu0 %713, %v106
    %v715 = vpop.permute.xlu0 %714
    %718 = vset.pattern.permute.xlu0 0
    %719 = vperm.xlu0 %718, %v107
    %v720 = vpop.permute.xlu0 %719
    %v722 = vmul.f32 %v705, 0.0
    %v723 = vmul.f32 %v710, 0.0
    %v724 = vmul.f32 %v715, 0.0
    %v725 = vmul.f32 %v720, 0.0
    %v726 = vadd.f32 %v686, %v722
    %v727 = vadd.f32 %v687, %v722
    %v728 = vadd.f32 %v688, %v722
    %v729 = vadd.f32 %v689, %v722
    %v730 = vadd.f32 %v690, %v723
    %v731 = vadd.f32 %v691, %v723
    %v732 = vadd.f32 %v692, %v723
    %v733 = vadd.f32 %v693, %v723
    %v734 = vadd.f32 %v694, %v724
    %v735 = vadd.f32 %v695, %v724
    %v736 = vadd.f32 %v696, %v724
    %v737 = vadd.f32 %v697, %v724
    %v738 = vadd.f32 %v698, %v725
    %v739 = vadd.f32 %v699, %v725
    %v740 = vadd.f32 %v700, %v725
    %v741 = vadd.f32 %v701, %v725
    %743 = vset.pattern.permute.xlu0 0
    %744 = vperm.xlu0 %743, %v109
    %v745 = vpop.permute.xlu0 %744
    %748 = vset.pattern.permute.xlu0 0
    %749 = vperm.xlu0 %748, %v110
    %v750 = vpop.permute.xlu0 %749
    %753 = vset.pattern.permute.xlu0 0
    %754 = vperm.xlu0 %753, %v111
    %v755 = vpop.permute.xlu0 %754
    %758 = vset.pattern.permute.xlu0 0
    %759 = vperm.xlu0 %758, %v112
    %v760 = vpop.permute.xlu0 %759
    %v762 = vmul.f32 %v745, 0.0
    %v763 = vmul.f32 %v750, 0.0
    %v764 = vmul.f32 %v755, 0.0
    %v765 = vmul.f32 %v760, 0.0
    %v766 = vadd.f32 %v726, %v762
    %v767 = vadd.f32 %v727, %v762
    %v768 = vadd.f32 %v728, %v762
    %v769 = vadd.f32 %v729, %v762
    %v770 = vadd.f32 %v730, %v763
    %v771 = vadd.f32 %v731, %v763
    %v772 = vadd.f32 %v732, %v763
    %v773 = vadd.f32 %v733, %v763
    %v774 = vadd.f32 %v734, %v764
    %v775 = vadd.f32 %v735, %v764
    %v776 = vadd.f32 %v736, %v764
    %v777 = vadd.f32 %v737, %v764
    %v778 = vadd.f32 %v738, %v765
    %v779 = vadd.f32 %v739, %v765
    %v780 = vadd.f32 %v740, %v765
    %v781 = vadd.f32 %v741, %v765
    %783 = vset.pattern.permute.xlu0 0
    %784 = vperm.xlu0 %783, %v114
    %v785 = vpop.permute.xlu0 %784
    %788 = vset.pattern.permute.xlu0 0
    %789 = vperm.xlu0 %788, %v115
    %v790 = vpop.permute.xlu0 %789
    %793 = vset.pattern.permute.xlu0 0
    %794 = vperm.xlu0 %793, %v116
    %v795 = vpop.permute.xlu0 %794
    %798 = vset.pattern.permute.xlu0 0
    %799 = vperm.xlu0 %798, %v117
    %v800 = vpop.permute.xlu0 %799
    %v802 = vmul.f32 %v785, 0.0
    %v803 = vmul.f32 %v790, 0.0
    %v804 = vmul.f32 %v795, 0.0
    %v805 = vmul.f32 %v800, 0.0
    %v806 = vadd.f32 %v766, %v802
    %v807 = vadd.f32 %v767, %v802
    %v808 = vadd.f32 %v768, %v802
    %v809 = vadd.f32 %v769, %v802
    %v810 = vadd.f32 %v770, %v803
    %v811 = vadd.f32 %v771, %v803
    %v812 = vadd.f32 %v772, %v803
    %v813 = vadd.f32 %v773, %v803
    %v814 = vadd.f32 %v774, %v804
    %v815 = vadd.f32 %v775, %v804
    %v816 = vadd.f32 %v776, %v804
    %v817 = vadd.f32 %v777, %v804
    %v818 = vadd.f32 %v778, %v805
    %v819 = vadd.f32 %v779, %v805
    %v820 = vadd.f32 %v780, %v805
    %v821 = vadd.f32 %v781, %v805
    %823 = vset.pattern.permute.xlu0 0
    %824 = vperm.xlu0 %823, %v119
    %v825 = vpop.permute.xlu0 %824
    %828 = vset.pattern.permute.xlu0 0
    %829 = vperm.xlu0 %828, %v120
    %v830 = vpop.permute.xlu0 %829
    %833 = vset.pattern.permute.xlu0 0
    %834 = vperm.xlu0 %833, %v121
    %v835 = vpop.permute.xlu0 %834
    %838 = vset.pattern.permute.xlu0 0
    %839 = vperm.xlu0 %838, %v122
    %v840 = vpop.permute.xlu0 %839
    %v842 = vmul.f32 %v825, 0.0
    %v843 = vmul.f32 %v830, 0.0
    %v844 = vmul.f32 %v835, 0.0
    %v845 = vmul.f32 %v840, 0.0
    %v846 = vadd.f32 %v806, %v842
    %v847 = vadd.f32 %v807, %v842
    %v848 = vadd.f32 %v808, %v842
    %v849 = vadd.f32 %v809, %v842
    %v850 = vadd.f32 %v810, %v843
    %v851 = vadd.f32 %v811, %v843
    %v852 = vadd.f32 %v812, %v843
    %v853 = vadd.f32 %v813, %v843
    %v854 = vadd.f32 %v814, %v844
    %v855 = vadd.f32 %v815, %v844
    %v856 = vadd.f32 %v816, %v844
    %v857 = vadd.f32 %v817, %v844
    %v858 = vadd.f32 %v818, %v845
    %v859 = vadd.f32 %v819, %v845
    %v860 = vadd.f32 %v820, %v845
    %v861 = vadd.f32 %v821, %v845
    %863 = vset.pattern.permute.xlu0 0
    %864 = vperm.xlu0 %863, %v124
    %v865 = vpop.permute.xlu0 %864
    %868 = vset.pattern.permute.xlu0 0
    %869 = vperm.xlu0 %868, %v125
    %v870 = vpop.permute.xlu0 %869
    %873 = vset.pattern.permute.xlu0 0
    %874 = vperm.xlu0 %873, %v126
    %v875 = vpop.permute.xlu0 %874
    %878 = vset.pattern.permute.xlu0 0
    %879 = vperm.xlu0 %878, %v127
    %v880 = vpop.permute.xlu0 %879
    %v882 = vmul.f32 %v865, 0.0
    %v883 = vmul.f32 %v870, 0.0
    %v884 = vmul.f32 %v875, 0.0
    %v885 = vmul.f32 %v880, 0.0
    %v886 = vadd.f32 %v846, %v882
    %v887 = vadd.f32 %v847, %v882
    %v888 = vadd.f32 %v848, %v882
    %v889 = vadd.f32 %v849, %v882
    %v890 = vadd.f32 %v850, %v883
    %v891 = vadd.f32 %v851, %v883
    %v892 = vadd.f32 %v852, %v883
    %v893 = vadd.f32 %v853, %v883
    %v894 = vadd.f32 %v854, %v884
    %v895 = vadd.f32 %v855, %v884
    %v896 = vadd.f32 %v856, %v884
    %v897 = vadd.f32 %v857, %v884
    %v898 = vadd.f32 %v858, %v885
    %v899 = vadd.f32 %v859, %v885
    %v900 = vadd.f32 %v860, %v885
    %v901 = vadd.f32 %v861, %v885
    %903 = vset.pattern.permute.xlu0 0
    %904 = vperm.xlu0 %903, %v129
    %v905 = vpop.permute.xlu0 %904
    %908 = vset.pattern.permute.xlu0 0
    %909 = vperm.xlu0 %908, %v130
    %v910 = vpop.permute.xlu0 %909
    %913 = vset.pattern.permute.xlu0 0
    %914 = vperm.xlu0 %913, %v131
    %v915 = vpop.permute.xlu0 %914
    %918 = vset.pattern.permute.xlu0 0
    %919 = vperm.xlu0 %918, %v132
    %v920 = vpop.permute.xlu0 %919
    %v922 = vmul.f32 %v905, 0.0
    %v923 = vmul.f32 %v910, 0.0
    %v924 = vmul.f32 %v915, 0.0
    %v925 = vmul.f32 %v920, 0.0
    %v926 = vadd.f32 %v886, %v922
    %v927 = vadd.f32 %v887, %v922
    %v928 = vadd.f32 %v888, %v922
    %v929 = vadd.f32 %v889, %v922
    %v930 = vadd.f32 %v890, %v923
    %v931 = vadd.f32 %v891, %v923
    %v932 = vadd.f32 %v892, %v923
    %v933 = vadd.f32 %v893, %v923
    %v934 = vadd.f32 %v894, %v924
    %v935 = vadd.f32 %v895, %v924
    %v936 = vadd.f32 %v896, %v924
    %v937 = vadd.f32 %v897, %v924
    %v938 = vadd.f32 %v898, %v925
    %v939 = vadd.f32 %v899, %v925
    %v940 = vadd.f32 %v900, %v925
    %v941 = vadd.f32 %v901, %v925
    %943 = vset.pattern.permute.xlu0 0
    %944 = vperm.xlu0 %943, %v134
    %v945 = vpop.permute.xlu0 %944
    %948 = vset.pattern.permute.xlu0 0
    %949 = vperm.xlu0 %948, %v135
    %v950 = vpop.permute.xlu0 %949
    %953 = vset.pattern.permute.xlu0 0
    %954 = vperm.xlu0 %953, %v136
    %v955 = vpop.permute.xlu0 %954
    %958 = vset.pattern.permute.xlu0 0
    %959 = vperm.xlu0 %958, %v137
    %v960 = vpop.permute.xlu0 %959
    %v962 = vmul.f32 %v945, 0.0
    %v963 = vmul.f32 %v950, 0.0
    %v964 = vmul.f32 %v955, 0.0
    %v965 = vmul.f32 %v960, 0.0
    %v966 = vadd.f32 %v926, %v962
    %v967 = vadd.f32 %v927, %v962
    %v968 = vadd.f32 %v928, %v962
    %v969 = vadd.f32 %v929, %v962
    %v970 = vadd.f32 %v930, %v963
    %v971 = vadd.f32 %v931, %v963
    %v972 = vadd.f32 %v932, %v963
    %v973 = vadd.f32 %v933, %v963
    %v974 = vadd.f32 %v934, %v964
    %v975 = vadd.f32 %v935, %v964
    %v976 = vadd.f32 %v936, %v964
    %v977 = vadd.f32 %v937, %v964
    %v978 = vadd.f32 %v938, %v965
    %v979 = vadd.f32 %v939, %v965
    %v980 = vadd.f32 %v940, %v965
    %v981 = vadd.f32 %v941, %v965
    %983 = vset.pattern.permute.xlu0 0
    %984 = vperm.xlu0 %983, %v139
    %v985 = vpop.permute.xlu0 %984
    %988 = vset.pattern.permute.xlu0 0
    %989 = vperm.xlu0 %988, %v140
    %v990 = vpop.permute.xlu0 %989
    %993 = vset.pattern.permute.xlu0 0
    %994 = vperm.xlu0 %993, %v141
    %v995 = vpop.permute.xlu0 %994
    %998 = vset.pattern.permute.xlu0 0
    %999 = vperm.xlu0 %998, %v142
    %v1000 = vpop.permute.xlu0 %999
    %v1002 = vmul.f32 %v985, 0.0
    %v1003 = vmul.f32 %v990, 0.0
    %v1004 = vmul.f32 %v995, 0.0
    %v1005 = vmul.f32 %v1000, 0.0
    %v1006 = vadd.f32 %v966, %v1002
    %v1007 = vadd.f32 %v967, %v1002
    %v1008 = vadd.f32 %v968, %v1002
    %v1009 = vadd.f32 %v969, %v1002
    %v1010 = vadd.f32 %v970, %v1003
    %v1011 = vadd.f32 %v971, %v1003
    %v1012 = vadd.f32 %v972, %v1003
    %v1013 = vadd.f32 %v973, %v1003
    %v1014 = vadd.f32 %v974, %v1004
    %v1015 = vadd.f32 %v975, %v1004
    %v1016 = vadd.f32 %v976, %v1004
    %v1017 = vadd.f32 %v977, %v1004
    %v1018 = vadd.f32 %v978, %v1005
    %v1019 = vadd.f32 %v979, %v1005
    %v1020 = vadd.f32 %v980, %v1005
    %v1021 = vadd.f32 %v981, %v1005
    %v1022 = vxor.u32 %v1006, 2147483648
    %v1023 = vxor.u32 %v1007, 2147483648
    %v1024 = vxor.u32 %v1008, 2147483648
    %v1025 = vxor.u32 %v1009, 2147483648
    %v1026 = vmul.f32 %v1022, 1.442695
    %v1027 = vpow.pop %v1026
    %v1028 = vmul.f32 %v1023, 1.442695
    %v1029 = vpow.pop %v1028
    %v1030 = vmul.f32 %v1024, 1.442695
    %v1031 = vpow.pop %v1030
    %v1032 = vmul.f32 %v1025, 1.442695
    %v1033 = vpow.pop %v1032
    %v1034 = vadd.f32 %v1027, 1.0
    %v1035 = vadd.f32 %v1029, 1.0
    %v1036 = vadd.f32 %v1031, 1.0
    %v1037 = vadd.f32 %v1033, 1.0
    %v1038 = vrcp.pop %v1034
    %v1039 = vmul.f32 1.0, %v1038
    %v1040 = vrcp.pop %v1035
    %v1041 = vmul.f32 1.0, %v1040
    %v1042 = vrcp.pop %v1036
    %v1043 = vmul.f32 1.0, %v1042
    %v1044 = vrcp.pop %v1037
    %v1045 = vmul.f32 1.0, %v1044
    %v1046 = vxor.u32 %v1010, 2147483648
    %v1047 = vxor.u32 %v1011, 2147483648
    %v1048 = vxor.u32 %v1012, 2147483648
    %v1049 = vxor.u32 %v1013, 2147483648
    %v1050 = vmul.f32 %v1046, 1.442695
    %v1051 = vpow.pop %v1050
    %v1052 = vmul.f32 %v1047, 1.442695
    %v1053 = vpow.pop %v1052
    %v1054 = vmul.f32 %v1048, 1.442695
    %v1055 = vpow.pop %v1054
    %v1056 = vmul.f32 %v1049, 1.442695
    %v1057 = vpow.pop %v1056
    %v1058 = vadd.f32 %v1051, 1.0
    %v1059 = vadd.f32 %v1053, 1.0
    %v1060 = vadd.f32 %v1055, 1.0
    %v1061 = vadd.f32 %v1057, 1.0
    %v1062 = vrcp.pop %v1058
    %v1063 = vmul.f32 1.0, %v1062
    %v1064 = vrcp.pop %v1059
    %v1065 = vmul.f32 1.0, %v1064
    %v1066 = vrcp.pop %v1060
    %v1067 = vmul.f32 1.0, %v1066
    %v1068 = vrcp.pop %v1061
    %v1069 = vmul.f32 1.0, %v1068
    %v1070 = vtanh.pop %v1014
    %v1071 = vtanh.pop %v1015
    %v1072 = vtanh.pop %v1016
    %v1073 = vtanh.pop %v1017
    %v1074 = vxor.u32 %v1018, 2147483648
    %v1075 = vxor.u32 %v1019, 2147483648
    %v1076 = vxor.u32 %v1020, 2147483648
    %v1077 = vxor.u32 %v1021, 2147483648
    %v1078 = vmul.f32 %v1074, 1.442695
    %v1079 = vpow.pop %v1078
    %v1080 = vmul.f32 %v1075, 1.442695
    %v1081 = vpow.pop %v1080
    %v1082 = vmul.f32 %v1076, 1.442695
    %v1083 = vpow.pop %v1082
    %v1084 = vmul.f32 %v1077, 1.442695
    %v1085 = vpow.pop %v1084
    %v1086 = vadd.f32 %v1079, 1.0
    %v1087 = vadd.f32 %v1081, 1.0
    %v1088 = vadd.f32 %v1083, 1.0
    %v1089 = vadd.f32 %v1085, 1.0
    %v1090 = vrcp.pop %v1086
    %v1091 = vmul.f32 1.0, %v1090
    %v1092 = vrcp.pop %v1087
    %v1093 = vmul.f32 1.0, %v1092
    %v1094 = vrcp.pop %v1088
    %v1095 = vmul.f32 1.0, %v1094
    %v1096 = vrcp.pop %v1089
    %v1097 = vmul.f32 1.0, %v1096
    %v1098 = vmul.f32 %v1063, 0.0
    %v1099 = vmul.f32 %v1065, 0.0
    %v1100 = vmul.f32 %v1067, 0.0
    %v1101 = vmul.f32 %v1069, 0.0
    %v1102 = vmul.f32 %v1039, %v1070
    %v1103 = vmul.f32 %v1041, %v1071
    %v1104 = vmul.f32 %v1043, %v1072
    %v1105 = vmul.f32 %v1045, %v1073
    %v1106 = vadd.f32 %v1098, %v1102
    %v1107 = vadd.f32 %v1099, %v1103
    %v1108 = vadd.f32 %v1100, %v1104
    %v1109 = vadd.f32 %v1101, %v1105
    %v1110 = vtanh.pop %v1106
    %v1111 = vtanh.pop %v1107
    %v1112 = vtanh.pop %v1108
    %v1113 = vtanh.pop %v1109
    %v1114 = vmul.f32 %v1091, %v1110
    %v1115 = vmul.f32 %v1093, %v1111
    %v1116 = vmul.f32 %v1095, %v1112
    %v1117 = vmul.f32 %v1097, %v1113
    %1119 = vset.pattern.permute.xlu0 0
    %1120 = vperm.xlu0 %1119, %v143
    %v1121 = vpop.permute.xlu0 %1120
    %v1123 = vlaneseq
    %v1124 = vshrl.u32 %v1123, 7
    %v1125 = vsub.s32 0, %v1124
    %v1126 = vrot.slane %v1114, %v1125
    %v1127 = vlaneseq
    %v1128 = vshrl.u32 %v1127, 7
    %v1129 = vsub.s32 0, %v1128
    %v1130 = vrot.slane %v1115, %v1129
    %v1131 = vlaneseq
    %v1132 = vshrl.u32 %v1131, 7
    %v1133 = vsub.s32 0, %v1132
    %v1134 = vrot.slane %v1116, %v1133
    %v1135 = vlaneseq
    %v1136 = vshrl.u32 %v1135, 7
    %v1137 = vsub.s32 0, %v1136
    %v1138 = vrot.slane %v1117, %v1137
    %v1139 = vmul.f32 %v1121, %v1126
    %v1140 = vmul.f32 %v1121, %v1130
    %v1141 = vmul.f32 %v1121, %v1134
    %v1142 = vmul.f32 %v1121, %v1138
    %v1143 = vadd.f32 %v186, %v1139
    %v1144 = vadd.f32 %v186, %v1140
    %v1145 = vadd.f32 %v186, %v1141
    %v1146 = vadd.f32 %v186, %v1142
    %1148 = vset.pattern.permute.xlu0 0
    %1149 = vperm.xlu0 %1148, %v145
    %v1150 = vpop.permute.xlu0 %1149
    %v1152 = vlaneseq
    %v1153 = vshrl.u32 %v1152, 7
    %v1154 = vsub.s32 1, %v1153
    %v1155 = vrot.slane %v1114, %v1154
    %v1156 = vlaneseq
    %v1157 = vshrl.u32 %v1156, 7
    %v1158 = vsub.s32 1, %v1157
    %v1159 = vrot.slane %v1115, %v1158
    %v1160 = vlaneseq
    %v1161 = vshrl.u32 %v1160, 7
    %v1162 = vsub.s32 1, %v1161
    %v1163 = vrot.slane %v1116, %v1162
    %v1164 = vlaneseq
    %v1165 = vshrl.u32 %v1164, 7
    %v1166 = vsub.s32 1, %v1165
    %v1167 = vrot.slane %v1117, %v1166
    %v1168 = vmul.f32 %v1150, %v1155
    %v1169 = vmul.f32 %v1150, %v1159
    %v1170 = vmul.f32 %v1150, %v1163
    %v1171 = vmul.f32 %v1150, %v1167
    %v1172 = vadd.f32 %v1143, %v1168
    %v1173 = vadd.f32 %v1144, %v1169
    %v1174 = vadd.f32 %v1145, %v1170
    %v1175 = vadd.f32 %v1146, %v1171
    %1177 = vset.pattern.permute.xlu0 0
    %1178 = vperm.xlu0 %1177, %v147
    %v1179 = vpop.permute.xlu0 %1178
    %v1181 = vlaneseq
    %v1182 = vshrl.u32 %v1181, 7
    %v1183 = vsub.s32 2, %v1182
    %v1184 = vrot.slane %v1114, %v1183
    %v1185 = vlaneseq
    %v1186 = vshrl.u32 %v1185, 7
    %v1187 = vsub.s32 2, %v1186
    %v1188 = vrot.slane %v1115, %v1187
    %v1189 = vlaneseq
    %v1190 = vshrl.u32 %v1189, 7
    %v1191 = vsub.s32 2, %v1190
    %v1192 = vrot.slane %v1116, %v1191
    %v1193 = vlaneseq
    %v1194 = vshrl.u32 %v1193, 7
    %v1195 = vsub.s32 2, %v1194
    %v1196 = vrot.slane %v1117, %v1195
    %v1197 = vmul.f32 %v1179, %v1184
    %v1198 = vmul.f32 %v1179, %v1188
    %v1199 = vmul.f32 %v1179, %v1192
    %v1200 = vmul.f32 %v1179, %v1196
    %v1201 = vadd.f32 %v1172, %v1197
    %v1202 = vadd.f32 %v1173, %v1198
    %v1203 = vadd.f32 %v1174, %v1199
    %v1204 = vadd.f32 %v1175, %v1200
    %1206 = vset.pattern.permute.xlu0 0
    %1207 = vperm.xlu0 %1206, %v149
    %v1208 = vpop.permute.xlu0 %1207
    %v1210 = vlaneseq
    %v1211 = vshrl.u32 %v1210, 7
    %v1212 = vsub.s32 3, %v1211
    %v1213 = vrot.slane %v1114, %v1212
    %v1214 = vlaneseq
    %v1215 = vshrl.u32 %v1214, 7
    %v1216 = vsub.s32 3, %v1215
    %v1217 = vrot.slane %v1115, %v1216
    %v1218 = vlaneseq
    %v1219 = vshrl.u32 %v1218, 7
    %v1220 = vsub.s32 3, %v1219
    %v1221 = vrot.slane %v1116, %v1220
    %v1222 = vlaneseq
    %v1223 = vshrl.u32 %v1222, 7
    %v1224 = vsub.s32 3, %v1223
    %v1225 = vrot.slane %v1117, %v1224
    %v1226 = vmul.f32 %v1208, %v1213
    %v1227 = vmul.f32 %v1208, %v1217
    %v1228 = vmul.f32 %v1208, %v1221
    %v1229 = vmul.f32 %v1208, %v1225
    %v1230 = vadd.f32 %v1201, %v1226
    %v1231 = vadd.f32 %v1202, %v1227
    %v1232 = vadd.f32 %v1203, %v1228
    %v1233 = vadd.f32 %v1204, %v1229
    %1235 = vset.pattern.permute.xlu0 0
    %1236 = vperm.xlu0 %1235, %v151
    %v1237 = vpop.permute.xlu0 %1236
    %v1239 = vlaneseq
    %v1240 = vshrl.u32 %v1239, 7
    %v1241 = vsub.s32 4, %v1240
    %v1242 = vrot.slane %v1114, %v1241
    %v1243 = vlaneseq
    %v1244 = vshrl.u32 %v1243, 7
    %v1245 = vsub.s32 4, %v1244
    %v1246 = vrot.slane %v1115, %v1245
    %v1247 = vlaneseq
    %v1248 = vshrl.u32 %v1247, 7
    %v1249 = vsub.s32 4, %v1248
    %v1250 = vrot.slane %v1116, %v1249
    %v1251 = vlaneseq
    %v1252 = vshrl.u32 %v1251, 7
    %v1253 = vsub.s32 4, %v1252
    %v1254 = vrot.slane %v1117, %v1253
    %v1255 = vmul.f32 %v1237, %v1242
    %v1256 = vmul.f32 %v1237, %v1246
    %v1257 = vmul.f32 %v1237, %v1250
    %v1258 = vmul.f32 %v1237, %v1254
    %v1259 = vadd.f32 %v1230, %v1255
    %v1260 = vadd.f32 %v1231, %v1256
    %v1261 = vadd.f32 %v1232, %v1257
    %v1262 = vadd.f32 %v1233, %v1258
    %1264 = vset.pattern.permute.xlu0 0
    %1265 = vperm.xlu0 %1264, %v153
    %v1266 = vpop.permute.xlu0 %1265
    %v1268 = vlaneseq
    %v1269 = vshrl.u32 %v1268, 7
    %v1270 = vsub.s32 5, %v1269
    %v1271 = vrot.slane %v1114, %v1270
    %v1272 = vlaneseq
    %v1273 = vshrl.u32 %v1272, 7
    %v1274 = vsub.s32 5, %v1273
    %v1275 = vrot.slane %v1115, %v1274
    %v1276 = vlaneseq
    %v1277 = vshrl.u32 %v1276, 7
    %v1278 = vsub.s32 5, %v1277
    %v1279 = vrot.slane %v1116, %v1278
    %v1280 = vlaneseq
    %v1281 = vshrl.u32 %v1280, 7
    %v1282 = vsub.s32 5, %v1281
    %v1283 = vrot.slane %v1117, %v1282
    %v1284 = vmul.f32 %v1266, %v1271
    %v1285 = vmul.f32 %v1266, %v1275
    %v1286 = vmul.f32 %v1266, %v1279
    %v1287 = vmul.f32 %v1266, %v1283
    %v1288 = vadd.f32 %v1259, %v1284
    %v1289 = vadd.f32 %v1260, %v1285
    %v1290 = vadd.f32 %v1261, %v1286
    %v1291 = vadd.f32 %v1262, %v1287
    %1293 = vset.pattern.permute.xlu0 0
    %1294 = vperm.xlu0 %1293, %v155
    %v1295 = vpop.permute.xlu0 %1294
    %v1297 = vlaneseq
    %v1298 = vshrl.u32 %v1297, 7
    %v1299 = vsub.s32 6, %v1298
    %v1300 = vrot.slane %v1114, %v1299
    %v1301 = vlaneseq
    %v1302 = vshrl.u32 %v1301, 7
    %v1303 = vsub.s32 6, %v1302
    %v1304 = vrot.slane %v1115, %v1303
    %v1305 = vlaneseq
    %v1306 = vshrl.u32 %v1305, 7
    %v1307 = vsub.s32 6, %v1306
    %v1308 = vrot.slane %v1116, %v1307
    %v1309 = vlaneseq
    %v1310 = vshrl.u32 %v1309, 7
    %v1311 = vsub.s32 6, %v1310
    %v1312 = vrot.slane %v1117, %v1311
    %v1313 = vmul.f32 %v1295, %v1300
    %v1314 = vmul.f32 %v1295, %v1304
    %v1315 = vmul.f32 %v1295, %v1308
    %v1316 = vmul.f32 %v1295, %v1312
    %v1317 = vadd.f32 %v1288, %v1313
    %v1318 = vadd.f32 %v1289, %v1314
    %v1319 = vadd.f32 %v1290, %v1315
    %v1320 = vadd.f32 %v1291, %v1316
    %1322 = vset.pattern.permute.xlu0 0
    %1323 = vperm.xlu0 %1322, %v157
    %v1324 = vpop.permute.xlu0 %1323
    %v1326 = vlaneseq
    %v1327 = vshrl.u32 %v1326, 7
    %v1328 = vsub.s32 7, %v1327
    %v1329 = vrot.slane %v1114, %v1328
    %v1330 = vlaneseq
    %v1331 = vshrl.u32 %v1330, 7
    %v1332 = vsub.s32 7, %v1331
    %v1333 = vrot.slane %v1115, %v1332
    %v1334 = vlaneseq
    %v1335 = vshrl.u32 %v1334, 7
    %v1336 = vsub.s32 7, %v1335
    %v1337 = vrot.slane %v1116, %v1336
    %v1338 = vlaneseq
    %v1339 = vshrl.u32 %v1338, 7
    %v1340 = vsub.s32 7, %v1339
    %v1341 = vrot.slane %v1117, %v1340
    %v1342 = vmul.f32 %v1324, %v1329
    %v1343 = vmul.f32 %v1324, %v1333
    %v1344 = vmul.f32 %v1324, %v1337
    %v1345 = vmul.f32 %v1324, %v1341
    %v1346 = vadd.f32 %v1317, %v1342
    %v1347 = vadd.f32 %v1318, %v1343
    %v1348 = vadd.f32 %v1319, %v1344
    %v1349 = vadd.f32 %v1320, %v1345
    %v1350 = vmul.f32 %v1346, 0.25
    %v1351 = vmul.f32 %v1347, 0.25
    %v1352 = vmul.f32 %v1348, 0.25
    %v1353 = vmul.f32 %v1349, 0.25
    %v1358 = vcombine.low %v1350, %v1351
    %v1359 = vcombine.low %v1352, %v1353
    %v1362 = vsub.f32 %v42, %v1358
    %v1363 = vsub.f32 %v43, %v1359
    %v1366 = vcombine.high %v1362, %v1362
    %v1367 = vcombine.high %v1363, %v1363
    %v1370 = vmul.f32 %v64, %v1362
    %v1371 = vmul.f32 %v65, %v1366
    %v1372 = vmul.f32 %v66, %v1363
    %v1373 = vmul.f32 %v67, %v1367
    %v1374 = vsub.f32 %v1370, %v74
    %v1375 = vsub.f32 %v1371, %v75
    %v1376 = vsub.f32 %v1372, %v76
    %v1377 = vsub.f32 %v1373, %v77
    %v1378 = vlaneseq
    %v1379 = vshrl.u32 %v1378, 7
    %v1380 = vsub.s32 0, %v1379
    %v1381 = vrot.slane %v1362, %v1380
    %v1382 = vlaneseq
    %v1383 = vshrl.u32 %v1382, 7
    %v1384 = vsub.s32 4, %v1383
    %v1385 = vrot.slane %v1362, %v1384
    %v1386 = vlaneseq
    %v1387 = vshrl.u32 %v1386, 7
    %v1388 = vsub.s32 0, %v1387
    %v1389 = vrot.slane %v1363, %v1388
    %v1390 = vlaneseq
    %v1391 = vshrl.u32 %v1390, 7
    %v1392 = vsub.s32 4, %v1391
    %v1393 = vrot.slane %v1363, %v1392
    %v1398 = vlaneseq
    %v1399 = vshrl.u32 %v1398, 7
    %v1400 = vsub.s32 0, %v1399
    %v1401 = vrot.slane %v1381, %v1400
    %v1402 = vlaneseq
    %v1403 = vshrl.u32 %v1402, 7
    %v1404 = vsub.s32 0, %v1403
    %v1405 = vrot.slane %v1385, %v1404
    %v1406 = vlaneseq
    %v1407 = vshrl.u32 %v1406, 7
    %v1408 = vsub.s32 0, %v1407
    %v1409 = vrot.slane %v1389, %v1408
    %v1410 = vlaneseq
    %v1411 = vshrl.u32 %v1410, 7
    %v1412 = vsub.s32 0, %v1411
    %v1413 = vrot.slane %v1393, %v1412
    %v1414 = vmul.f32 %v205, %v1401
    %v1415 = vmul.f32 %v205, %v1405
    %v1416 = vmul.f32 %v205, %v1409
    %v1417 = vmul.f32 %v205, %v1413
    %v1418 = vadd.f32 %v1374, %v1414
    %v1419 = vadd.f32 %v1375, %v1415
    %v1420 = vadd.f32 %v1376, %v1416
    %v1421 = vadd.f32 %v1377, %v1417
    %v1422 = vlaneseq
    %v1423 = vshrl.u32 %v1422, 7
    %v1424 = vsub.s32 1, %v1423
    %v1425 = vrot.slane %v1362, %v1424
    %v1426 = vlaneseq
    %v1427 = vshrl.u32 %v1426, 7
    %v1428 = vsub.s32 5, %v1427
    %v1429 = vrot.slane %v1362, %v1428
    %v1430 = vlaneseq
    %v1431 = vshrl.u32 %v1430, 7
    %v1432 = vsub.s32 1, %v1431
    %v1433 = vrot.slane %v1363, %v1432
    %v1434 = vlaneseq
    %v1435 = vshrl.u32 %v1434, 7
    %v1436 = vsub.s32 5, %v1435
    %v1437 = vrot.slane %v1363, %v1436
    %v1442 = vlaneseq
    %v1443 = vshrl.u32 %v1442, 7
    %v1444 = vsub.s32 1, %v1443
    %v1445 = vrot.slane %v1425, %v1444
    %v1446 = vlaneseq
    %v1447 = vshrl.u32 %v1446, 7
    %v1448 = vsub.s32 1, %v1447
    %v1449 = vrot.slane %v1429, %v1448
    %v1450 = vlaneseq
    %v1451 = vshrl.u32 %v1450, 7
    %v1452 = vsub.s32 1, %v1451
    %v1453 = vrot.slane %v1433, %v1452
    %v1454 = vlaneseq
    %v1455 = vshrl.u32 %v1454, 7
    %v1456 = vsub.s32 1, %v1455
    %v1457 = vrot.slane %v1437, %v1456
    %v1458 = vmul.f32 %v254, %v1445
    %v1459 = vmul.f32 %v254, %v1449
    %v1460 = vmul.f32 %v254, %v1453
    %v1461 = vmul.f32 %v254, %v1457
    %v1462 = vadd.f32 %v1418, %v1458
    %v1463 = vadd.f32 %v1419, %v1459
    %v1464 = vadd.f32 %v1420, %v1460
    %v1465 = vadd.f32 %v1421, %v1461
    %v1466 = vlaneseq
    %v1467 = vshrl.u32 %v1466, 7
    %v1468 = vsub.s32 2, %v1467
    %v1469 = vrot.slane %v1362, %v1468
    %v1470 = vlaneseq
    %v1471 = vshrl.u32 %v1470, 7
    %v1472 = vsub.s32 6, %v1471
    %v1473 = vrot.slane %v1362, %v1472
    %v1474 = vlaneseq
    %v1475 = vshrl.u32 %v1474, 7
    %v1476 = vsub.s32 2, %v1475
    %v1477 = vrot.slane %v1363, %v1476
    %v1478 = vlaneseq
    %v1479 = vshrl.u32 %v1478, 7
    %v1480 = vsub.s32 6, %v1479
    %v1481 = vrot.slane %v1363, %v1480
    %v1486 = vlaneseq
    %v1487 = vshrl.u32 %v1486, 7
    %v1488 = vsub.s32 2, %v1487
    %v1489 = vrot.slane %v1469, %v1488
    %v1490 = vlaneseq
    %v1491 = vshrl.u32 %v1490, 7
    %v1492 = vsub.s32 2, %v1491
    %v1493 = vrot.slane %v1473, %v1492
    %v1494 = vlaneseq
    %v1495 = vshrl.u32 %v1494, 7
    %v1496 = vsub.s32 2, %v1495
    %v1497 = vrot.slane %v1477, %v1496
    %v1498 = vlaneseq
    %v1499 = vshrl.u32 %v1498, 7
    %v1500 = vsub.s32 2, %v1499
    %v1501 = vrot.slane %v1481, %v1500
    %v1502 = vmul.f32 %v303, %v1489
    %v1503 = vmul.f32 %v303, %v1493
    %v1504 = vmul.f32 %v303, %v1497
    %v1505 = vmul.f32 %v303, %v1501
    %v1506 = vadd.f32 %v1462, %v1502
    %v1507 = vadd.f32 %v1463, %v1503
    %v1508 = vadd.f32 %v1464, %v1504
    %v1509 = vadd.f32 %v1465, %v1505
    %v1510 = vlaneseq
    %v1511 = vshrl.u32 %v1510, 7
    %v1512 = vsub.s32 3, %v1511
    %v1513 = vrot.slane %v1362, %v1512
    %v1514 = vlaneseq
    %v1515 = vshrl.u32 %v1514, 7
    %v1516 = vsub.s32 7, %v1515
    %v1517 = vrot.slane %v1362, %v1516
    %v1518 = vlaneseq
    %v1519 = vshrl.u32 %v1518, 7
    %v1520 = vsub.s32 3, %v1519
    %v1521 = vrot.slane %v1363, %v1520
    %v1522 = vlaneseq
    %v1523 = vshrl.u32 %v1522, 7
    %v1524 = vsub.s32 7, %v1523
    %v1525 = vrot.slane %v1363, %v1524
    %v1530 = vlaneseq
    %v1531 = vshrl.u32 %v1530, 7
    %v1532 = vsub.s32 3, %v1531
    %v1533 = vrot.slane %v1513, %v1532
    %v1534 = vlaneseq
    %v1535 = vshrl.u32 %v1534, 7
    %v1536 = vsub.s32 3, %v1535
    %v1537 = vrot.slane %v1517, %v1536
    %v1538 = vlaneseq
    %v1539 = vshrl.u32 %v1538, 7
    %v1540 = vsub.s32 3, %v1539
    %v1541 = vrot.slane %v1521, %v1540
    %v1542 = vlaneseq
    %v1543 = vshrl.u32 %v1542, 7
    %v1544 = vsub.s32 3, %v1543
    %v1545 = vrot.slane %v1525, %v1544
    %v1546 = vmul.f32 %v352, %v1533
    %v1547 = vmul.f32 %v352, %v1537
    %v1548 = vmul.f32 %v352, %v1541
    %v1549 = vmul.f32 %v352, %v1545
    %v1550 = vadd.f32 %v1506, %v1546
    %v1551 = vadd.f32 %v1507, %v1547
    %v1552 = vadd.f32 %v1508, %v1548
    %v1553 = vadd.f32 %v1509, %v1549
    %v1554 = vmul.f32 %v1550, %v1550
    %v1555 = vmul.f32 %v1551, %v1551
    %v1556 = vmul.f32 %v1552, %v1552
    %v1557 = vmul.f32 %v1553, %v1553
    %v1558 = vsel %vm402, %v1554, 0.0
    %v1559 = vsel %vm402, %v1555, 0.0
    %v1560 = vadd.f32 %v1558, %v1559
    %v1561 = vsel %vm402, %v1556, 0.0
    %v1562 = vadd.f32 %v1560, %v1561
    %v1563 = vsel %vm402, %v1557, 0.0
    %v1564 = vadd.f32 %v1562, %v1563
    %1565 = vadd.xlane.f32.xlu0 %v1564
    %v1566 = vpop.xlane.xlu0 %1565
    %v1567 = vrot.slane %v1566, 4
    %v1568 = vadd.f32 %v1566, %v1567
    %v1569 = vrot.slane %v1568, 2
    %v1570 = vadd.f32 %v1568, %v1569
    %v1571 = vrot.slane %v1570, 1
    %v1572 = vadd.f32 %v1570, %v1571
    %s1573 = vtos %v1572
    %v1574 = vrcp.pop 2048.0
    %s1575 = vtos %v1574
    %s1576 = smul.f32 %s1573, %s1575
    %v1577 = vstv %s1576
    %v1578 = vrsqrt.pop %v1577
    %s1579 = vtos %v1578
    %v1580 = vstv %s1579
    %v1581 = vmul.f32 %v1550, %v1580
    %v1582 = vmul.f32 %v1551, %v1580
    %v1583 = vmul.f32 %v1552, %v1580
    %v1584 = vmul.f32 %v1553, %v1580
    %v1585 = vlaneseq
    %v1586 = vshrl.u32 %v1585, 7
    %v1587 = vsub.s32 0, %v1586
    %v1588 = vrot.slane %v1581, %v1587
    %v1589 = vlaneseq
    %v1590 = vshrl.u32 %v1589, 7
    %v1591 = vsub.s32 0, %v1590
    %v1592 = vrot.slane %v1582, %v1591
    %v1593 = vlaneseq
    %v1594 = vshrl.u32 %v1593, 7
    %v1595 = vsub.s32 0, %v1594
    %v1596 = vrot.slane %v1583, %v1595
    %v1597 = vlaneseq
    %v1598 = vshrl.u32 %v1597, 7
    %v1599 = vsub.s32 0, %v1598
    %v1600 = vrot.slane %v1584, %v1599
    %v1601 = vmul.f32 %v433, %v1588
    %v1602 = vmul.f32 %v433, %v1592
    %v1603 = vmul.f32 %v433, %v1596
    %v1604 = vmul.f32 %v433, %v1600
    %v1605 = vmul.f32 %v438, %v1588
    %v1606 = vmul.f32 %v438, %v1592
    %v1607 = vmul.f32 %v438, %v1596
    %v1608 = vmul.f32 %v438, %v1600
    %v1609 = vmul.f32 %v443, %v1588
    %v1610 = vmul.f32 %v443, %v1592
    %v1611 = vmul.f32 %v443, %v1596
    %v1612 = vmul.f32 %v443, %v1600
    %v1613 = vmul.f32 %v448, %v1588
    %v1614 = vmul.f32 %v448, %v1592
    %v1615 = vmul.f32 %v448, %v1596
    %v1616 = vmul.f32 %v448, %v1600
    %v1617 = vadd.f32 %v165, %v1601
    %v1618 = vadd.f32 %v165, %v1602
    %v1619 = vadd.f32 %v165, %v1603
    %v1620 = vadd.f32 %v165, %v1604
    %v1621 = vadd.f32 %v170, %v1605
    %v1622 = vadd.f32 %v170, %v1606
    %v1623 = vadd.f32 %v170, %v1607
    %v1624 = vadd.f32 %v170, %v1608
    %v1625 = vadd.f32 %v175, %v1609
    %v1626 = vadd.f32 %v175, %v1610
    %v1627 = vadd.f32 %v175, %v1611
    %v1628 = vadd.f32 %v175, %v1612
    %v1629 = vadd.f32 %v180, %v1613
    %v1630 = vadd.f32 %v180, %v1614
    %v1631 = vadd.f32 %v180, %v1615
    %v1632 = vadd.f32 %v180, %v1616
    %v1633 = vlaneseq
    %v1634 = vshrl.u32 %v1633, 7
    %v1635 = vsub.s32 1, %v1634
    %v1636 = vrot.slane %v1581, %v1635
    %v1637 = vlaneseq
    %v1638 = vshrl.u32 %v1637, 7
    %v1639 = vsub.s32 1, %v1638
    %v1640 = vrot.slane %v1582, %v1639
    %v1641 = vlaneseq
    %v1642 = vshrl.u32 %v1641, 7
    %v1643 = vsub.s32 1, %v1642
    %v1644 = vrot.slane %v1583, %v1643
    %v1645 = vlaneseq
    %v1646 = vshrl.u32 %v1645, 7
    %v1647 = vsub.s32 1, %v1646
    %v1648 = vrot.slane %v1584, %v1647
    %v1649 = vmul.f32 %v501, %v1636
    %v1650 = vmul.f32 %v501, %v1640
    %v1651 = vmul.f32 %v501, %v1644
    %v1652 = vmul.f32 %v501, %v1648
    %v1653 = vmul.f32 %v506, %v1636
    %v1654 = vmul.f32 %v506, %v1640
    %v1655 = vmul.f32 %v506, %v1644
    %v1656 = vmul.f32 %v506, %v1648
    %v1657 = vmul.f32 %v511, %v1636
    %v1658 = vmul.f32 %v511, %v1640
    %v1659 = vmul.f32 %v511, %v1644
    %v1660 = vmul.f32 %v511, %v1648
    %v1661 = vmul.f32 %v516, %v1636
    %v1662 = vmul.f32 %v516, %v1640
    %v1663 = vmul.f32 %v516, %v1644
    %v1664 = vmul.f32 %v516, %v1648
    %v1665 = vadd.f32 %v1617, %v1649
    %v1666 = vadd.f32 %v1618, %v1650
    %v1667 = vadd.f32 %v1619, %v1651
    %v1668 = vadd.f32 %v1620, %v1652
    %v1669 = vadd.f32 %v1621, %v1653
    %v1670 = vadd.f32 %v1622, %v1654
    %v1671 = vadd.f32 %v1623, %v1655
    %v1672 = vadd.f32 %v1624, %v1656
    %v1673 = vadd.f32 %v1625, %v1657
    %v1674 = vadd.f32 %v1626, %v1658
    %v1675 = vadd.f32 %v1627, %v1659
    %v1676 = vadd.f32 %v1628, %v1660
    %v1677 = vadd.f32 %v1629, %v1661
    %v1678 = vadd.f32 %v1630, %v1662
    %v1679 = vadd.f32 %v1631, %v1663
    %v1680 = vadd.f32 %v1632, %v1664
    %v1681 = vlaneseq
    %v1682 = vshrl.u32 %v1681, 7
    %v1683 = vsub.s32 2, %v1682
    %v1684 = vrot.slane %v1581, %v1683
    %v1685 = vlaneseq
    %v1686 = vshrl.u32 %v1685, 7
    %v1687 = vsub.s32 2, %v1686
    %v1688 = vrot.slane %v1582, %v1687
    %v1689 = vlaneseq
    %v1690 = vshrl.u32 %v1689, 7
    %v1691 = vsub.s32 2, %v1690
    %v1692 = vrot.slane %v1583, %v1691
    %v1693 = vlaneseq
    %v1694 = vshrl.u32 %v1693, 7
    %v1695 = vsub.s32 2, %v1694
    %v1696 = vrot.slane %v1584, %v1695
    %v1697 = vmul.f32 %v569, %v1684
    %v1698 = vmul.f32 %v569, %v1688
    %v1699 = vmul.f32 %v569, %v1692
    %v1700 = vmul.f32 %v569, %v1696
    %v1701 = vmul.f32 %v574, %v1684
    %v1702 = vmul.f32 %v574, %v1688
    %v1703 = vmul.f32 %v574, %v1692
    %v1704 = vmul.f32 %v574, %v1696
    %v1705 = vmul.f32 %v579, %v1684
    %v1706 = vmul.f32 %v579, %v1688
    %v1707 = vmul.f32 %v579, %v1692
    %v1708 = vmul.f32 %v579, %v1696
    %v1709 = vmul.f32 %v584, %v1684
    %v1710 = vmul.f32 %v584, %v1688
    %v1711 = vmul.f32 %v584, %v1692
    %v1712 = vmul.f32 %v584, %v1696
    %v1713 = vadd.f32 %v1665, %v1697
    %v1714 = vadd.f32 %v1666, %v1698
    %v1715 = vadd.f32 %v1667, %v1699
    %v1716 = vadd.f32 %v1668, %v1700
    %v1717 = vadd.f32 %v1669, %v1701
    %v1718 = vadd.f32 %v1670, %v1702
    %v1719 = vadd.f32 %v1671, %v1703
    %v1720 = vadd.f32 %v1672, %v1704
    %v1721 = vadd.f32 %v1673, %v1705
    %v1722 = vadd.f32 %v1674, %v1706
    %v1723 = vadd.f32 %v1675, %v1707
    %v1724 = vadd.f32 %v1676, %v1708
    %v1725 = vadd.f32 %v1677, %v1709
    %v1726 = vadd.f32 %v1678, %v1710
    %v1727 = vadd.f32 %v1679, %v1711
    %v1728 = vadd.f32 %v1680, %v1712
    %v1729 = vlaneseq
    %v1730 = vshrl.u32 %v1729, 7
    %v1731 = vsub.s32 3, %v1730
    %v1732 = vrot.slane %v1581, %v1731
    %v1733 = vlaneseq
    %v1734 = vshrl.u32 %v1733, 7
    %v1735 = vsub.s32 3, %v1734
    %v1736 = vrot.slane %v1582, %v1735
    %v1737 = vlaneseq
    %v1738 = vshrl.u32 %v1737, 7
    %v1739 = vsub.s32 3, %v1738
    %v1740 = vrot.slane %v1583, %v1739
    %v1741 = vlaneseq
    %v1742 = vshrl.u32 %v1741, 7
    %v1743 = vsub.s32 3, %v1742
    %v1744 = vrot.slane %v1584, %v1743
    %v1745 = vmul.f32 %v637, %v1732
    %v1746 = vmul.f32 %v637, %v1736
    %v1747 = vmul.f32 %v637, %v1740
    %v1748 = vmul.f32 %v637, %v1744
    %v1749 = vmul.f32 %v642, %v1732
    %v1750 = vmul.f32 %v642, %v1736
    %v1751 = vmul.f32 %v642, %v1740
    %v1752 = vmul.f32 %v642, %v1744
    %v1753 = vmul.f32 %v647, %v1732
    %v1754 = vmul.f32 %v647, %v1736
    %v1755 = vmul.f32 %v647, %v1740
    %v1756 = vmul.f32 %v647, %v1744
    %v1757 = vmul.f32 %v652, %v1732
    %v1758 = vmul.f32 %v652, %v1736
    %v1759 = vmul.f32 %v652, %v1740
    %v1760 = vmul.f32 %v652, %v1744
    %v1761 = vadd.f32 %v1713, %v1745
    %v1762 = vadd.f32 %v1714, %v1746
    %v1763 = vadd.f32 %v1715, %v1747
    %v1764 = vadd.f32 %v1716, %v1748
    %v1765 = vadd.f32 %v1717, %v1749
    %v1766 = vadd.f32 %v1718, %v1750
    %v1767 = vadd.f32 %v1719, %v1751
    %v1768 = vadd.f32 %v1720, %v1752
    %v1769 = vadd.f32 %v1721, %v1753
    %v1770 = vadd.f32 %v1722, %v1754
    %v1771 = vadd.f32 %v1723, %v1755
    %v1772 = vadd.f32 %v1724, %v1756
    %v1773 = vadd.f32 %v1725, %v1757
    %v1774 = vadd.f32 %v1726, %v1758
    %v1775 = vadd.f32 %v1727, %v1759
    %v1776 = vadd.f32 %v1728, %v1760
    %v1777 = vmul.f32 %v705, %v1126
    %v1778 = vmul.f32 %v705, %v1130
    %v1779 = vmul.f32 %v705, %v1134
    %v1780 = vmul.f32 %v705, %v1138
    %v1781 = vmul.f32 %v710, %v1126
    %v1782 = vmul.f32 %v710, %v1130
    %v1783 = vmul.f32 %v710, %v1134
    %v1784 = vmul.f32 %v710, %v1138
    %v1785 = vmul.f32 %v715, %v1126
    %v1786 = vmul.f32 %v715, %v1130
    %v1787 = vmul.f32 %v715, %v1134
    %v1788 = vmul.f32 %v715, %v1138
    %v1789 = vmul.f32 %v720, %v1126
    %v1790 = vmul.f32 %v720, %v1130
    %v1791 = vmul.f32 %v720, %v1134
    %v1792 = vmul.f32 %v720, %v1138
    %v1793 = vadd.f32 %v1761, %v1777
    %v1794 = vadd.f32 %v1762, %v1778
    %v1795 = vadd.f32 %v1763, %v1779
    %v1796 = vadd.f32 %v1764, %v1780
    %v1797 = vadd.f32 %v1765, %v1781
    %v1798 = vadd.f32 %v1766, %v1782
    %v1799 = vadd.f32 %v1767, %v1783
    %v1800 = vadd.f32 %v1768, %v1784
    %v1801 = vadd.f32 %v1769, %v1785
    %v1802 = vadd.f32 %v1770, %v1786
    %v1803 = vadd.f32 %v1771, %v1787
    %v1804 = vadd.f32 %v1772, %v1788
    %v1805 = vadd.f32 %v1773, %v1789
    %v1806 = vadd.f32 %v1774, %v1790
    %v1807 = vadd.f32 %v1775, %v1791
    %v1808 = vadd.f32 %v1776, %v1792
    %v1809 = vmul.f32 %v745, %v1155
    %v1810 = vmul.f32 %v745, %v1159
    %v1811 = vmul.f32 %v745, %v1163
    %v1812 = vmul.f32 %v745, %v1167
    %v1813 = vmul.f32 %v750, %v1155
    %v1814 = vmul.f32 %v750, %v1159
    %v1815 = vmul.f32 %v750, %v1163
    %v1816 = vmul.f32 %v750, %v1167
    %v1817 = vmul.f32 %v755, %v1155
    %v1818 = vmul.f32 %v755, %v1159
    %v1819 = vmul.f32 %v755, %v1163
    %v1820 = vmul.f32 %v755, %v1167
    %v1821 = vmul.f32 %v760, %v1155
    %v1822 = vmul.f32 %v760, %v1159
    %v1823 = vmul.f32 %v760, %v1163
    %v1824 = vmul.f32 %v760, %v1167
    %v1825 = vadd.f32 %v1793, %v1809
    %v1826 = vadd.f32 %v1794, %v1810
    %v1827 = vadd.f32 %v1795, %v1811
    %v1828 = vadd.f32 %v1796, %v1812
    %v1829 = vadd.f32 %v1797, %v1813
    %v1830 = vadd.f32 %v1798, %v1814
    %v1831 = vadd.f32 %v1799, %v1815
    %v1832 = vadd.f32 %v1800, %v1816
    %v1833 = vadd.f32 %v1801, %v1817
    %v1834 = vadd.f32 %v1802, %v1818
    %v1835 = vadd.f32 %v1803, %v1819
    %v1836 = vadd.f32 %v1804, %v1820
    %v1837 = vadd.f32 %v1805, %v1821
    %v1838 = vadd.f32 %v1806, %v1822
    %v1839 = vadd.f32 %v1807, %v1823
    %v1840 = vadd.f32 %v1808, %v1824
    %v1841 = vmul.f32 %v785, %v1184
    %v1842 = vmul.f32 %v785, %v1188
    %v1843 = vmul.f32 %v785, %v1192
    %v1844 = vmul.f32 %v785, %v1196
    %v1845 = vmul.f32 %v790, %v1184
    %v1846 = vmul.f32 %v790, %v1188
    %v1847 = vmul.f32 %v790, %v1192
    %v1848 = vmul.f32 %v790, %v1196
    %v1849 = vmul.f32 %v795, %v1184
    %v1850 = vmul.f32 %v795, %v1188
    %v1851 = vmul.f32 %v795, %v1192
    %v1852 = vmul.f32 %v795, %v1196
    %v1853 = vmul.f32 %v800, %v1184
    %v1854 = vmul.f32 %v800, %v1188
    %v1855 = vmul.f32 %v800, %v1192
    %v1856 = vmul.f32 %v800, %v1196
    %v1857 = vadd.f32 %v1825, %v1841
    %v1858 = vadd.f32 %v1826, %v1842
    %v1859 = vadd.f32 %v1827, %v1843
    %v1860 = vadd.f32 %v1828, %v1844
    %v1861 = vadd.f32 %v1829, %v1845
    %v1862 = vadd.f32 %v1830, %v1846
    %v1863 = vadd.f32 %v1831, %v1847
    %v1864 = vadd.f32 %v1832, %v1848
    %v1865 = vadd.f32 %v1833, %v1849
    %v1866 = vadd.f32 %v1834, %v1850
    %v1867 = vadd.f32 %v1835, %v1851
    %v1868 = vadd.f32 %v1836, %v1852
    %v1869 = vadd.f32 %v1837, %v1853
    %v1870 = vadd.f32 %v1838, %v1854
    %v1871 = vadd.f32 %v1839, %v1855
    %v1872 = vadd.f32 %v1840, %v1856
    %v1873 = vmul.f32 %v825, %v1213
    %v1874 = vmul.f32 %v825, %v1217
    %v1875 = vmul.f32 %v825, %v1221
    %v1876 = vmul.f32 %v825, %v1225
    %v1877 = vmul.f32 %v830, %v1213
    %v1878 = vmul.f32 %v830, %v1217
    %v1879 = vmul.f32 %v830, %v1221
    %v1880 = vmul.f32 %v830, %v1225
    %v1881 = vmul.f32 %v835, %v1213
    %v1882 = vmul.f32 %v835, %v1217
    %v1883 = vmul.f32 %v835, %v1221
    %v1884 = vmul.f32 %v835, %v1225
    %v1885 = vmul.f32 %v840, %v1213
    %v1886 = vmul.f32 %v840, %v1217
    %v1887 = vmul.f32 %v840, %v1221
    %v1888 = vmul.f32 %v840, %v1225
    %v1889 = vadd.f32 %v1857, %v1873
    %v1890 = vadd.f32 %v1858, %v1874
    %v1891 = vadd.f32 %v1859, %v1875
    %v1892 = vadd.f32 %v1860, %v1876
    %v1893 = vadd.f32 %v1861, %v1877
    %v1894 = vadd.f32 %v1862, %v1878
    %v1895 = vadd.f32 %v1863, %v1879
    %v1896 = vadd.f32 %v1864, %v1880
    %v1897 = vadd.f32 %v1865, %v1881
    %v1898 = vadd.f32 %v1866, %v1882
    %v1899 = vadd.f32 %v1867, %v1883
    %v1900 = vadd.f32 %v1868, %v1884
    %v1901 = vadd.f32 %v1869, %v1885
    %v1902 = vadd.f32 %v1870, %v1886
    %v1903 = vadd.f32 %v1871, %v1887
    %v1904 = vadd.f32 %v1872, %v1888
    %v1905 = vmul.f32 %v865, %v1242
    %v1906 = vmul.f32 %v865, %v1246
    %v1907 = vmul.f32 %v865, %v1250
    %v1908 = vmul.f32 %v865, %v1254
    %v1909 = vmul.f32 %v870, %v1242
    %v1910 = vmul.f32 %v870, %v1246
    %v1911 = vmul.f32 %v870, %v1250
    %v1912 = vmul.f32 %v870, %v1254
    %v1913 = vmul.f32 %v875, %v1242
    %v1914 = vmul.f32 %v875, %v1246
    %v1915 = vmul.f32 %v875, %v1250
    %v1916 = vmul.f32 %v875, %v1254
    %v1917 = vmul.f32 %v880, %v1242
    %v1918 = vmul.f32 %v880, %v1246
    %v1919 = vmul.f32 %v880, %v1250
    %v1920 = vmul.f32 %v880, %v1254
    %v1921 = vadd.f32 %v1889, %v1905
    %v1922 = vadd.f32 %v1890, %v1906
    %v1923 = vadd.f32 %v1891, %v1907
    %v1924 = vadd.f32 %v1892, %v1908
    %v1925 = vadd.f32 %v1893, %v1909
    %v1926 = vadd.f32 %v1894, %v1910
    %v1927 = vadd.f32 %v1895, %v1911
    %v1928 = vadd.f32 %v1896, %v1912
    %v1929 = vadd.f32 %v1897, %v1913
    %v1930 = vadd.f32 %v1898, %v1914
    %v1931 = vadd.f32 %v1899, %v1915
    %v1932 = vadd.f32 %v1900, %v1916
    %v1933 = vadd.f32 %v1901, %v1917
    %v1934 = vadd.f32 %v1902, %v1918
    %v1935 = vadd.f32 %v1903, %v1919
    %v1936 = vadd.f32 %v1904, %v1920
    %v1937 = vmul.f32 %v905, %v1271
    %v1938 = vmul.f32 %v905, %v1275
    %v1939 = vmul.f32 %v905, %v1279
    %v1940 = vmul.f32 %v905, %v1283
    %v1941 = vmul.f32 %v910, %v1271
    %v1942 = vmul.f32 %v910, %v1275
    %v1943 = vmul.f32 %v910, %v1279
    %v1944 = vmul.f32 %v910, %v1283
    %v1945 = vmul.f32 %v915, %v1271
    %v1946 = vmul.f32 %v915, %v1275
    %v1947 = vmul.f32 %v915, %v1279
    %v1948 = vmul.f32 %v915, %v1283
    %v1949 = vmul.f32 %v920, %v1271
    %v1950 = vmul.f32 %v920, %v1275
    %v1951 = vmul.f32 %v920, %v1279
    %v1952 = vmul.f32 %v920, %v1283
    %v1953 = vadd.f32 %v1921, %v1937
    %v1954 = vadd.f32 %v1922, %v1938
    %v1955 = vadd.f32 %v1923, %v1939
    %v1956 = vadd.f32 %v1924, %v1940
    %v1957 = vadd.f32 %v1925, %v1941
    %v1958 = vadd.f32 %v1926, %v1942
    %v1959 = vadd.f32 %v1927, %v1943
    %v1960 = vadd.f32 %v1928, %v1944
    %v1961 = vadd.f32 %v1929, %v1945
    %v1962 = vadd.f32 %v1930, %v1946
    %v1963 = vadd.f32 %v1931, %v1947
    %v1964 = vadd.f32 %v1932, %v1948
    %v1965 = vadd.f32 %v1933, %v1949
    %v1966 = vadd.f32 %v1934, %v1950
    %v1967 = vadd.f32 %v1935, %v1951
    %v1968 = vadd.f32 %v1936, %v1952
    %v1969 = vmul.f32 %v945, %v1300
    %v1970 = vmul.f32 %v945, %v1304
    %v1971 = vmul.f32 %v945, %v1308
    %v1972 = vmul.f32 %v945, %v1312
    %v1973 = vmul.f32 %v950, %v1300
    %v1974 = vmul.f32 %v950, %v1304
    %v1975 = vmul.f32 %v950, %v1308
    %v1976 = vmul.f32 %v950, %v1312
    %v1977 = vmul.f32 %v955, %v1300
    %v1978 = vmul.f32 %v955, %v1304
    %v1979 = vmul.f32 %v955, %v1308
    %v1980 = vmul.f32 %v955, %v1312
    %v1981 = vmul.f32 %v960, %v1300
    %v1982 = vmul.f32 %v960, %v1304
    %v1983 = vmul.f32 %v960, %v1308
    %v1984 = vmul.f32 %v960, %v1312
    %v1985 = vadd.f32 %v1953, %v1969
    %v1986 = vadd.f32 %v1954, %v1970
    %v1987 = vadd.f32 %v1955, %v1971
    %v1988 = vadd.f32 %v1956, %v1972
    %v1989 = vadd.f32 %v1957, %v1973
    %v1990 = vadd.f32 %v1958, %v1974
    %v1991 = vadd.f32 %v1959, %v1975
    %v1992 = vadd.f32 %v1960, %v1976
    %v1993 = vadd.f32 %v1961, %v1977
    %v1994 = vadd.f32 %v1962, %v1978
    %v1995 = vadd.f32 %v1963, %v1979
    %v1996 = vadd.f32 %v1964, %v1980
    %v1997 = vadd.f32 %v1965, %v1981
    %v1998 = vadd.f32 %v1966, %v1982
    %v1999 = vadd.f32 %v1967, %v1983
    %v2000 = vadd.f32 %v1968, %v1984
    %v2001 = vmul.f32 %v985, %v1329
    %v2002 = vmul.f32 %v985, %v1333
    %v2003 = vmul.f32 %v985, %v1337
    %v2004 = vmul.f32 %v985, %v1341
    %v2005 = vmul.f32 %v990, %v1329
    %v2006 = vmul.f32 %v990, %v1333
    %v2007 = vmul.f32 %v990, %v1337
    %v2008 = vmul.f32 %v990, %v1341
    %v2009 = vmul.f32 %v995, %v1329
    %v2010 = vmul.f32 %v995, %v1333
    %v2011 = vmul.f32 %v995, %v1337
    %v2012 = vmul.f32 %v995, %v1341
    %v2013 = vmul.f32 %v1000, %v1329
    %v2014 = vmul.f32 %v1000, %v1333
    %v2015 = vmul.f32 %v1000, %v1337
    %v2016 = vmul.f32 %v1000, %v1341
    %v2017 = vadd.f32 %v1985, %v2001
    %v2018 = vadd.f32 %v1986, %v2002
    %v2019 = vadd.f32 %v1987, %v2003
    %v2020 = vadd.f32 %v1988, %v2004
    %v2021 = vadd.f32 %v1989, %v2005
    %v2022 = vadd.f32 %v1990, %v2006
    %v2023 = vadd.f32 %v1991, %v2007
    %v2024 = vadd.f32 %v1992, %v2008
    %v2025 = vadd.f32 %v1993, %v2009
    %v2026 = vadd.f32 %v1994, %v2010
    %v2027 = vadd.f32 %v1995, %v2011
    %v2028 = vadd.f32 %v1996, %v2012
    %v2029 = vadd.f32 %v1997, %v2013
    %v2030 = vadd.f32 %v1998, %v2014
    %v2031 = vadd.f32 %v1999, %v2015
    %v2032 = vadd.f32 %v2000, %v2016
    %v2033 = vxor.u32 %v2017, 2147483648
    %v2034 = vxor.u32 %v2018, 2147483648
    %v2035 = vxor.u32 %v2019, 2147483648
    %v2036 = vxor.u32 %v2020, 2147483648
    %v2037 = vmul.f32 %v2033, 1.442695
    %v2038 = vpow.pop %v2037
    %v2039 = vmul.f32 %v2034, 1.442695
    %v2040 = vpow.pop %v2039
    %v2041 = vmul.f32 %v2035, 1.442695
    %v2042 = vpow.pop %v2041
    %v2043 = vmul.f32 %v2036, 1.442695
    %v2044 = vpow.pop %v2043
    %v2045 = vadd.f32 %v2038, 1.0
    %v2046 = vadd.f32 %v2040, 1.0
    %v2047 = vadd.f32 %v2042, 1.0
    %v2048 = vadd.f32 %v2044, 1.0
    %v2049 = vrcp.pop %v2045
    %v2050 = vmul.f32 1.0, %v2049
    %v2051 = vrcp.pop %v2046
    %v2052 = vmul.f32 1.0, %v2051
    %v2053 = vrcp.pop %v2047
    %v2054 = vmul.f32 1.0, %v2053
    %v2055 = vrcp.pop %v2048
    %v2056 = vmul.f32 1.0, %v2055
    %v2057 = vxor.u32 %v2021, 2147483648
    %v2058 = vxor.u32 %v2022, 2147483648
    %v2059 = vxor.u32 %v2023, 2147483648
    %v2060 = vxor.u32 %v2024, 2147483648
    %v2061 = vmul.f32 %v2057, 1.442695
    %v2062 = vpow.pop %v2061
    %v2063 = vmul.f32 %v2058, 1.442695
    %v2064 = vpow.pop %v2063
    %v2065 = vmul.f32 %v2059, 1.442695
    %v2066 = vpow.pop %v2065
    %v2067 = vmul.f32 %v2060, 1.442695
    %v2068 = vpow.pop %v2067
    %v2069 = vadd.f32 %v2062, 1.0
    %v2070 = vadd.f32 %v2064, 1.0
    %v2071 = vadd.f32 %v2066, 1.0
    %v2072 = vadd.f32 %v2068, 1.0
    %v2073 = vrcp.pop %v2069
    %v2074 = vmul.f32 1.0, %v2073
    %v2075 = vrcp.pop %v2070
    %v2076 = vmul.f32 1.0, %v2075
    %v2077 = vrcp.pop %v2071
    %v2078 = vmul.f32 1.0, %v2077
    %v2079 = vrcp.pop %v2072
    %v2080 = vmul.f32 1.0, %v2079
    %v2081 = vtanh.pop %v2025
    %v2082 = vtanh.pop %v2026
    %v2083 = vtanh.pop %v2027
    %v2084 = vtanh.pop %v2028
    %v2085 = vxor.u32 %v2029, 2147483648
    %v2086 = vxor.u32 %v2030, 2147483648
    %v2087 = vxor.u32 %v2031, 2147483648
    %v2088 = vxor.u32 %v2032, 2147483648
    %v2089 = vmul.f32 %v2085, 1.442695
    %v2090 = vpow.pop %v2089
    %v2091 = vmul.f32 %v2086, 1.442695
    %v2092 = vpow.pop %v2091
    %v2093 = vmul.f32 %v2087, 1.442695
    %v2094 = vpow.pop %v2093
    %v2095 = vmul.f32 %v2088, 1.442695
    %v2096 = vpow.pop %v2095
    %v2097 = vadd.f32 %v2090, 1.0
    %v2098 = vadd.f32 %v2092, 1.0
    %v2099 = vadd.f32 %v2094, 1.0
    %v2100 = vadd.f32 %v2096, 1.0
    %v2101 = vrcp.pop %v2097
    %v2102 = vmul.f32 1.0, %v2101
    %v2103 = vrcp.pop %v2098
    %v2104 = vmul.f32 1.0, %v2103
    %v2105 = vrcp.pop %v2099
    %v2106 = vmul.f32 1.0, %v2105
    %v2107 = vrcp.pop %v2100
    %v2108 = vmul.f32 1.0, %v2107
    %v2109 = vmul.f32 %v2074, %v1106
    %v2110 = vmul.f32 %v2076, %v1107
    %v2111 = vmul.f32 %v2078, %v1108
    %v2112 = vmul.f32 %v2080, %v1109
    %v2113 = vmul.f32 %v2050, %v2081
    %v2114 = vmul.f32 %v2052, %v2082
    %v2115 = vmul.f32 %v2054, %v2083
    %v2116 = vmul.f32 %v2056, %v2084
    %v2117 = vadd.f32 %v2109, %v2113
    %v2118 = vadd.f32 %v2110, %v2114
    %v2119 = vadd.f32 %v2111, %v2115
    %v2120 = vadd.f32 %v2112, %v2116
    %v2121 = vtanh.pop %v2117
    %v2122 = vtanh.pop %v2118
    %v2123 = vtanh.pop %v2119
    %v2124 = vtanh.pop %v2120
    %v2125 = vmul.f32 %v2102, %v2121
    %v2126 = vmul.f32 %v2104, %v2122
    %v2127 = vmul.f32 %v2106, %v2123
    %v2128 = vmul.f32 %v2108, %v2124
    %v2129 = vlaneseq
    %v2130 = vshrl.u32 %v2129, 7
    %v2131 = vsub.s32 0, %v2130
    %v2132 = vrot.slane %v2125, %v2131
    %v2133 = vlaneseq
    %v2134 = vshrl.u32 %v2133, 7
    %v2135 = vsub.s32 0, %v2134
    %v2136 = vrot.slane %v2126, %v2135
    %v2137 = vlaneseq
    %v2138 = vshrl.u32 %v2137, 7
    %v2139 = vsub.s32 0, %v2138
    %v2140 = vrot.slane %v2127, %v2139
    %v2141 = vlaneseq
    %v2142 = vshrl.u32 %v2141, 7
    %v2143 = vsub.s32 0, %v2142
    %v2144 = vrot.slane %v2128, %v2143
    %v2145 = vmul.f32 %v1121, %v2132
    %v2146 = vmul.f32 %v1121, %v2136
    %v2147 = vmul.f32 %v1121, %v2140
    %v2148 = vmul.f32 %v1121, %v2144
    %v2149 = vadd.f32 %v186, %v2145
    %v2150 = vadd.f32 %v186, %v2146
    %v2151 = vadd.f32 %v186, %v2147
    %v2152 = vadd.f32 %v186, %v2148
    %v2153 = vlaneseq
    %v2154 = vshrl.u32 %v2153, 7
    %v2155 = vsub.s32 1, %v2154
    %v2156 = vrot.slane %v2125, %v2155
    %v2157 = vlaneseq
    %v2158 = vshrl.u32 %v2157, 7
    %v2159 = vsub.s32 1, %v2158
    %v2160 = vrot.slane %v2126, %v2159
    %v2161 = vlaneseq
    %v2162 = vshrl.u32 %v2161, 7
    %v2163 = vsub.s32 1, %v2162
    %v2164 = vrot.slane %v2127, %v2163
    %v2165 = vlaneseq
    %v2166 = vshrl.u32 %v2165, 7
    %v2167 = vsub.s32 1, %v2166
    %v2168 = vrot.slane %v2128, %v2167
    %v2169 = vmul.f32 %v1150, %v2156
    %v2170 = vmul.f32 %v1150, %v2160
    %v2171 = vmul.f32 %v1150, %v2164
    %v2172 = vmul.f32 %v1150, %v2168
    %v2173 = vadd.f32 %v2149, %v2169
    %v2174 = vadd.f32 %v2150, %v2170
    %v2175 = vadd.f32 %v2151, %v2171
    %v2176 = vadd.f32 %v2152, %v2172
    %v2177 = vlaneseq
    %v2178 = vshrl.u32 %v2177, 7
    %v2179 = vsub.s32 2, %v2178
    %v2180 = vrot.slane %v2125, %v2179
    %v2181 = vlaneseq
    %v2182 = vshrl.u32 %v2181, 7
    %v2183 = vsub.s32 2, %v2182
    %v2184 = vrot.slane %v2126, %v2183
    %v2185 = vlaneseq
    %v2186 = vshrl.u32 %v2185, 7
    %v2187 = vsub.s32 2, %v2186
    %v2188 = vrot.slane %v2127, %v2187
    %v2189 = vlaneseq
    %v2190 = vshrl.u32 %v2189, 7
    %v2191 = vsub.s32 2, %v2190
    %v2192 = vrot.slane %v2128, %v2191
    %v2193 = vmul.f32 %v1179, %v2180
    %v2194 = vmul.f32 %v1179, %v2184
    %v2195 = vmul.f32 %v1179, %v2188
    %v2196 = vmul.f32 %v1179, %v2192
    %v2197 = vadd.f32 %v2173, %v2193
    %v2198 = vadd.f32 %v2174, %v2194
    %v2199 = vadd.f32 %v2175, %v2195
    %v2200 = vadd.f32 %v2176, %v2196
    %v2201 = vlaneseq
    %v2202 = vshrl.u32 %v2201, 7
    %v2203 = vsub.s32 3, %v2202
    %v2204 = vrot.slane %v2125, %v2203
    %v2205 = vlaneseq
    %v2206 = vshrl.u32 %v2205, 7
    %v2207 = vsub.s32 3, %v2206
    %v2208 = vrot.slane %v2126, %v2207
    %v2209 = vlaneseq
    %v2210 = vshrl.u32 %v2209, 7
    %v2211 = vsub.s32 3, %v2210
    %v2212 = vrot.slane %v2127, %v2211
    %v2213 = vlaneseq
    %v2214 = vshrl.u32 %v2213, 7
    %v2215 = vsub.s32 3, %v2214
    %v2216 = vrot.slane %v2128, %v2215
    %v2217 = vmul.f32 %v1208, %v2204
    %v2218 = vmul.f32 %v1208, %v2208
    %v2219 = vmul.f32 %v1208, %v2212
    %v2220 = vmul.f32 %v1208, %v2216
    %v2221 = vadd.f32 %v2197, %v2217
    %v2222 = vadd.f32 %v2198, %v2218
    %v2223 = vadd.f32 %v2199, %v2219
    %v2224 = vadd.f32 %v2200, %v2220
    %v2225 = vlaneseq
    %v2226 = vshrl.u32 %v2225, 7
    %v2227 = vsub.s32 4, %v2226
    %v2228 = vrot.slane %v2125, %v2227
    %v2229 = vlaneseq
    %v2230 = vshrl.u32 %v2229, 7
    %v2231 = vsub.s32 4, %v2230
    %v2232 = vrot.slane %v2126, %v2231
    %v2233 = vlaneseq
    %v2234 = vshrl.u32 %v2233, 7
    %v2235 = vsub.s32 4, %v2234
    %v2236 = vrot.slane %v2127, %v2235
    %v2237 = vlaneseq
    %v2238 = vshrl.u32 %v2237, 7
    %v2239 = vsub.s32 4, %v2238
    %v2240 = vrot.slane %v2128, %v2239
    %v2241 = vmul.f32 %v1237, %v2228
    %v2242 = vmul.f32 %v1237, %v2232
    %v2243 = vmul.f32 %v1237, %v2236
    %v2244 = vmul.f32 %v1237, %v2240
    %v2245 = vadd.f32 %v2221, %v2241
    %v2246 = vadd.f32 %v2222, %v2242
    %v2247 = vadd.f32 %v2223, %v2243
    %v2248 = vadd.f32 %v2224, %v2244
    %v2249 = vlaneseq
    %v2250 = vshrl.u32 %v2249, 7
    %v2251 = vsub.s32 5, %v2250
    %v2252 = vrot.slane %v2125, %v2251
    %v2253 = vlaneseq
    %v2254 = vshrl.u32 %v2253, 7
    %v2255 = vsub.s32 5, %v2254
    %v2256 = vrot.slane %v2126, %v2255
    %v2257 = vlaneseq
    %v2258 = vshrl.u32 %v2257, 7
    %v2259 = vsub.s32 5, %v2258
    %v2260 = vrot.slane %v2127, %v2259
    %v2261 = vlaneseq
    %v2262 = vshrl.u32 %v2261, 7
    %v2263 = vsub.s32 5, %v2262
    %v2264 = vrot.slane %v2128, %v2263
    %v2265 = vmul.f32 %v1266, %v2252
    %v2266 = vmul.f32 %v1266, %v2256
    %v2267 = vmul.f32 %v1266, %v2260
    %v2268 = vmul.f32 %v1266, %v2264
    %v2269 = vadd.f32 %v2245, %v2265
    %v2270 = vadd.f32 %v2246, %v2266
    %v2271 = vadd.f32 %v2247, %v2267
    %v2272 = vadd.f32 %v2248, %v2268
    %v2273 = vlaneseq
    %v2274 = vshrl.u32 %v2273, 7
    %v2275 = vsub.s32 6, %v2274
    %v2276 = vrot.slane %v2125, %v2275
    %v2277 = vlaneseq
    %v2278 = vshrl.u32 %v2277, 7
    %v2279 = vsub.s32 6, %v2278
    %v2280 = vrot.slane %v2126, %v2279
    %v2281 = vlaneseq
    %v2282 = vshrl.u32 %v2281, 7
    %v2283 = vsub.s32 6, %v2282
    %v2284 = vrot.slane %v2127, %v2283
    %v2285 = vlaneseq
    %v2286 = vshrl.u32 %v2285, 7
    %v2287 = vsub.s32 6, %v2286
    %v2288 = vrot.slane %v2128, %v2287
    %v2289 = vmul.f32 %v1295, %v2276
    %v2290 = vmul.f32 %v1295, %v2280
    %v2291 = vmul.f32 %v1295, %v2284
    %v2292 = vmul.f32 %v1295, %v2288
    %v2293 = vadd.f32 %v2269, %v2289
    %v2294 = vadd.f32 %v2270, %v2290
    %v2295 = vadd.f32 %v2271, %v2291
    %v2296 = vadd.f32 %v2272, %v2292
    %v2297 = vlaneseq
    %v2298 = vshrl.u32 %v2297, 7
    %v2299 = vsub.s32 7, %v2298
    %v2300 = vrot.slane %v2125, %v2299
    %v2301 = vlaneseq
    %v2302 = vshrl.u32 %v2301, 7
    %v2303 = vsub.s32 7, %v2302
    %v2304 = vrot.slane %v2126, %v2303
    %v2305 = vlaneseq
    %v2306 = vshrl.u32 %v2305, 7
    %v2307 = vsub.s32 7, %v2306
    %v2308 = vrot.slane %v2127, %v2307
    %v2309 = vlaneseq
    %v2310 = vshrl.u32 %v2309, 7
    %v2311 = vsub.s32 7, %v2310
    %v2312 = vrot.slane %v2128, %v2311
    %v2313 = vmul.f32 %v1324, %v2300
    %v2314 = vmul.f32 %v1324, %v2304
    %v2315 = vmul.f32 %v1324, %v2308
    %v2316 = vmul.f32 %v1324, %v2312
    %v2317 = vadd.f32 %v2293, %v2313
    %v2318 = vadd.f32 %v2294, %v2314
    %v2319 = vadd.f32 %v2295, %v2315
    %v2320 = vadd.f32 %v2296, %v2316
    %v2321 = vmul.f32 %v2317, 0.25
    %v2322 = vmul.f32 %v2318, 0.25
    %v2323 = vmul.f32 %v2319, 0.25
    %v2324 = vmul.f32 %v2320, 0.25
    %v2329 = vcombine.low %v2321, %v2322
    %v2330 = vcombine.low %v2323, %v2324
    %v2333 = vsub.f32 %v1362, %v2329
    %v2334 = vsub.f32 %v1363, %v2330
    %v2337 = vcombine.high %v2333, %v2333
    %v2338 = vcombine.high %v2334, %v2334
    %v2341 = vmul.f32 %v64, %v2333
    %v2342 = vmul.f32 %v65, %v2337
    %v2343 = vmul.f32 %v66, %v2334
    %v2344 = vmul.f32 %v67, %v2338
    %v2345 = vsub.f32 %v2341, %v74
    %v2346 = vsub.f32 %v2342, %v75
    %v2347 = vsub.f32 %v2343, %v76
    %v2348 = vsub.f32 %v2344, %v77
    %v2349 = vlaneseq
    %v2350 = vshrl.u32 %v2349, 7
    %v2351 = vsub.s32 0, %v2350
    %v2352 = vrot.slane %v2333, %v2351
    %v2353 = vlaneseq
    %v2354 = vshrl.u32 %v2353, 7
    %v2355 = vsub.s32 4, %v2354
    %v2356 = vrot.slane %v2333, %v2355
    %v2357 = vlaneseq
    %v2358 = vshrl.u32 %v2357, 7
    %v2359 = vsub.s32 0, %v2358
    %v2360 = vrot.slane %v2334, %v2359
    %v2361 = vlaneseq
    %v2362 = vshrl.u32 %v2361, 7
    %v2363 = vsub.s32 4, %v2362
    %v2364 = vrot.slane %v2334, %v2363
    %v2369 = vlaneseq
    %v2370 = vshrl.u32 %v2369, 7
    %v2371 = vsub.s32 0, %v2370
    %v2372 = vrot.slane %v2352, %v2371
    %v2373 = vlaneseq
    %v2374 = vshrl.u32 %v2373, 7
    %v2375 = vsub.s32 0, %v2374
    %v2376 = vrot.slane %v2356, %v2375
    %v2377 = vlaneseq
    %v2378 = vshrl.u32 %v2377, 7
    %v2379 = vsub.s32 0, %v2378
    %v2380 = vrot.slane %v2360, %v2379
    %v2381 = vlaneseq
    %v2382 = vshrl.u32 %v2381, 7
    %v2383 = vsub.s32 0, %v2382
    %v2384 = vrot.slane %v2364, %v2383
    %v2385 = vmul.f32 %v205, %v2372
    %v2386 = vmul.f32 %v205, %v2376
    %v2387 = vmul.f32 %v205, %v2380
    %v2388 = vmul.f32 %v205, %v2384
    %v2389 = vadd.f32 %v2345, %v2385
    %v2390 = vadd.f32 %v2346, %v2386
    %v2391 = vadd.f32 %v2347, %v2387
    %v2392 = vadd.f32 %v2348, %v2388
    %v2393 = vlaneseq
    %v2394 = vshrl.u32 %v2393, 7
    %v2395 = vsub.s32 1, %v2394
    %v2396 = vrot.slane %v2333, %v2395
    %v2397 = vlaneseq
    %v2398 = vshrl.u32 %v2397, 7
    %v2399 = vsub.s32 5, %v2398
    %v2400 = vrot.slane %v2333, %v2399
    %v2401 = vlaneseq
    %v2402 = vshrl.u32 %v2401, 7
    %v2403 = vsub.s32 1, %v2402
    %v2404 = vrot.slane %v2334, %v2403
    %v2405 = vlaneseq
    %v2406 = vshrl.u32 %v2405, 7
    %v2407 = vsub.s32 5, %v2406
    %v2408 = vrot.slane %v2334, %v2407
    %v2413 = vlaneseq
    %v2414 = vshrl.u32 %v2413, 7
    %v2415 = vsub.s32 1, %v2414
    %v2416 = vrot.slane %v2396, %v2415
    %v2417 = vlaneseq
    %v2418 = vshrl.u32 %v2417, 7
    %v2419 = vsub.s32 1, %v2418
    %v2420 = vrot.slane %v2400, %v2419
    %v2421 = vlaneseq
    %v2422 = vshrl.u32 %v2421, 7
    %v2423 = vsub.s32 1, %v2422
    %v2424 = vrot.slane %v2404, %v2423
    %v2425 = vlaneseq
    %v2426 = vshrl.u32 %v2425, 7
    %v2427 = vsub.s32 1, %v2426
    %v2428 = vrot.slane %v2408, %v2427
    %v2429 = vmul.f32 %v254, %v2416
    %v2430 = vmul.f32 %v254, %v2420
    %v2431 = vmul.f32 %v254, %v2424
    %v2432 = vmul.f32 %v254, %v2428
    %v2433 = vadd.f32 %v2389, %v2429
    %v2434 = vadd.f32 %v2390, %v2430
    %v2435 = vadd.f32 %v2391, %v2431
    %v2436 = vadd.f32 %v2392, %v2432
    %v2437 = vlaneseq
    %v2438 = vshrl.u32 %v2437, 7
    %v2439 = vsub.s32 2, %v2438
    %v2440 = vrot.slane %v2333, %v2439
    %v2441 = vlaneseq
    %v2442 = vshrl.u32 %v2441, 7
    %v2443 = vsub.s32 6, %v2442
    %v2444 = vrot.slane %v2333, %v2443
    %v2445 = vlaneseq
    %v2446 = vshrl.u32 %v2445, 7
    %v2447 = vsub.s32 2, %v2446
    %v2448 = vrot.slane %v2334, %v2447
    %v2449 = vlaneseq
    %v2450 = vshrl.u32 %v2449, 7
    %v2451 = vsub.s32 6, %v2450
    %v2452 = vrot.slane %v2334, %v2451
    %v2457 = vlaneseq
    %v2458 = vshrl.u32 %v2457, 7
    %v2459 = vsub.s32 2, %v2458
    %v2460 = vrot.slane %v2440, %v2459
    %v2461 = vlaneseq
    %v2462 = vshrl.u32 %v2461, 7
    %v2463 = vsub.s32 2, %v2462
    %v2464 = vrot.slane %v2444, %v2463
    %v2465 = vlaneseq
    %v2466 = vshrl.u32 %v2465, 7
    %v2467 = vsub.s32 2, %v2466
    %v2468 = vrot.slane %v2448, %v2467
    %v2469 = vlaneseq
    %v2470 = vshrl.u32 %v2469, 7
    %v2471 = vsub.s32 2, %v2470
    %v2472 = vrot.slane %v2452, %v2471
    %v2473 = vmul.f32 %v303, %v2460
    %v2474 = vmul.f32 %v303, %v2464
    %v2475 = vmul.f32 %v303, %v2468
    %v2476 = vmul.f32 %v303, %v2472
    %v2477 = vadd.f32 %v2433, %v2473
    %v2478 = vadd.f32 %v2434, %v2474
    %v2479 = vadd.f32 %v2435, %v2475
    %v2480 = vadd.f32 %v2436, %v2476
    %v2481 = vlaneseq
    %v2482 = vshrl.u32 %v2481, 7
    %v2483 = vsub.s32 3, %v2482
    %v2484 = vrot.slane %v2333, %v2483
    %v2485 = vlaneseq
    %v2486 = vshrl.u32 %v2485, 7
    %v2487 = vsub.s32 7, %v2486
    %v2488 = vrot.slane %v2333, %v2487
    %v2489 = vlaneseq
    %v2490 = vshrl.u32 %v2489, 7
    %v2491 = vsub.s32 3, %v2490
    %v2492 = vrot.slane %v2334, %v2491
    %v2493 = vlaneseq
    %v2494 = vshrl.u32 %v2493, 7
    %v2495 = vsub.s32 7, %v2494
    %v2496 = vrot.slane %v2334, %v2495
    %v2501 = vlaneseq
    %v2502 = vshrl.u32 %v2501, 7
    %v2503 = vsub.s32 3, %v2502
    %v2504 = vrot.slane %v2484, %v2503
    %v2505 = vlaneseq
    %v2506 = vshrl.u32 %v2505, 7
    %v2507 = vsub.s32 3, %v2506
    %v2508 = vrot.slane %v2488, %v2507
    %v2509 = vlaneseq
    %v2510 = vshrl.u32 %v2509, 7
    %v2511 = vsub.s32 3, %v2510
    %v2512 = vrot.slane %v2492, %v2511
    %v2513 = vlaneseq
    %v2514 = vshrl.u32 %v2513, 7
    %v2515 = vsub.s32 3, %v2514
    %v2516 = vrot.slane %v2496, %v2515
    %v2517 = vmul.f32 %v352, %v2504
    %v2518 = vmul.f32 %v352, %v2508
    %v2519 = vmul.f32 %v352, %v2512
    %v2520 = vmul.f32 %v352, %v2516
    %v2521 = vadd.f32 %v2477, %v2517
    %v2522 = vadd.f32 %v2478, %v2518
    %v2523 = vadd.f32 %v2479, %v2519
    %v2524 = vadd.f32 %v2480, %v2520
    %v2525 = vmul.f32 %v2521, %v2521
    %v2526 = vmul.f32 %v2522, %v2522
    %v2527 = vmul.f32 %v2523, %v2523
    %v2528 = vmul.f32 %v2524, %v2524
    %v2529 = vsel %vm402, %v2525, 0.0
    %v2530 = vsel %vm402, %v2526, 0.0
    %v2531 = vadd.f32 %v2529, %v2530
    %v2532 = vsel %vm402, %v2527, 0.0
    %v2533 = vadd.f32 %v2531, %v2532
    %v2534 = vsel %vm402, %v2528, 0.0
    %v2535 = vadd.f32 %v2533, %v2534
    %2536 = vadd.xlane.f32.xlu0 %v2535
    %v2537 = vpop.xlane.xlu0 %2536
    %v2538 = vrot.slane %v2537, 4
    %v2539 = vadd.f32 %v2537, %v2538
    %v2540 = vrot.slane %v2539, 2
    %v2541 = vadd.f32 %v2539, %v2540
    %v2542 = vrot.slane %v2541, 1
    %v2543 = vadd.f32 %v2541, %v2542
    %s2544 = vtos %v2543
    %v2545 = vrcp.pop 2048.0
    %s2546 = vtos %v2545
    %s2547 = smul.f32 %s2544, %s2546
    %v2548 = vstv %s2547
    %v2549 = vrsqrt.pop %v2548
    %s2550 = vtos %v2549
    %v2551 = vstv %s2550
    %v2552 = vmul.f32 %v2521, %v2551
    %v2553 = vmul.f32 %v2522, %v2551
    %v2554 = vmul.f32 %v2523, %v2551
    %v2555 = vmul.f32 %v2524, %v2551
    %v2556 = vlaneseq
    %v2557 = vshrl.u32 %v2556, 7
    %v2558 = vsub.s32 0, %v2557
    %v2559 = vrot.slane %v2552, %v2558
    %v2560 = vlaneseq
    %v2561 = vshrl.u32 %v2560, 7
    %v2562 = vsub.s32 0, %v2561
    %v2563 = vrot.slane %v2553, %v2562
    %v2564 = vlaneseq
    %v2565 = vshrl.u32 %v2564, 7
    %v2566 = vsub.s32 0, %v2565
    %v2567 = vrot.slane %v2554, %v2566
    %v2568 = vlaneseq
    %v2569 = vshrl.u32 %v2568, 7
    %v2570 = vsub.s32 0, %v2569
    %v2571 = vrot.slane %v2555, %v2570
    %v2572 = vmul.f32 %v433, %v2559
    %v2573 = vmul.f32 %v433, %v2563
    %v2574 = vmul.f32 %v433, %v2567
    %v2575 = vmul.f32 %v433, %v2571
    %v2576 = vmul.f32 %v438, %v2559
    %v2577 = vmul.f32 %v438, %v2563
    %v2578 = vmul.f32 %v438, %v2567
    %v2579 = vmul.f32 %v438, %v2571
    %v2580 = vmul.f32 %v443, %v2559
    %v2581 = vmul.f32 %v443, %v2563
    %v2582 = vmul.f32 %v443, %v2567
    %v2583 = vmul.f32 %v443, %v2571
    %v2584 = vmul.f32 %v448, %v2559
    %v2585 = vmul.f32 %v448, %v2563
    %v2586 = vmul.f32 %v448, %v2567
    %v2587 = vmul.f32 %v448, %v2571
    %v2588 = vadd.f32 %v165, %v2572
    %v2589 = vadd.f32 %v165, %v2573
    %v2590 = vadd.f32 %v165, %v2574
    %v2591 = vadd.f32 %v165, %v2575
    %v2592 = vadd.f32 %v170, %v2576
    %v2593 = vadd.f32 %v170, %v2577
    %v2594 = vadd.f32 %v170, %v2578
    %v2595 = vadd.f32 %v170, %v2579
    %v2596 = vadd.f32 %v175, %v2580
    %v2597 = vadd.f32 %v175, %v2581
    %v2598 = vadd.f32 %v175, %v2582
    %v2599 = vadd.f32 %v175, %v2583
    %v2600 = vadd.f32 %v180, %v2584
    %v2601 = vadd.f32 %v180, %v2585
    %v2602 = vadd.f32 %v180, %v2586
    %v2603 = vadd.f32 %v180, %v2587
    %v2604 = vlaneseq
    %v2605 = vshrl.u32 %v2604, 7
    %v2606 = vsub.s32 1, %v2605
    %v2607 = vrot.slane %v2552, %v2606
    %v2608 = vlaneseq
    %v2609 = vshrl.u32 %v2608, 7
    %v2610 = vsub.s32 1, %v2609
    %v2611 = vrot.slane %v2553, %v2610
    %v2612 = vlaneseq
    %v2613 = vshrl.u32 %v2612, 7
    %v2614 = vsub.s32 1, %v2613
    %v2615 = vrot.slane %v2554, %v2614
    %v2616 = vlaneseq
    %v2617 = vshrl.u32 %v2616, 7
    %v2618 = vsub.s32 1, %v2617
    %v2619 = vrot.slane %v2555, %v2618
    %v2620 = vmul.f32 %v501, %v2607
    %v2621 = vmul.f32 %v501, %v2611
    %v2622 = vmul.f32 %v501, %v2615
    %v2623 = vmul.f32 %v501, %v2619
    %v2624 = vmul.f32 %v506, %v2607
    %v2625 = vmul.f32 %v506, %v2611
    %v2626 = vmul.f32 %v506, %v2615
    %v2627 = vmul.f32 %v506, %v2619
    %v2628 = vmul.f32 %v511, %v2607
    %v2629 = vmul.f32 %v511, %v2611
    %v2630 = vmul.f32 %v511, %v2615
    %v2631 = vmul.f32 %v511, %v2619
    %v2632 = vmul.f32 %v516, %v2607
    %v2633 = vmul.f32 %v516, %v2611
    %v2634 = vmul.f32 %v516, %v2615
    %v2635 = vmul.f32 %v516, %v2619
    %v2636 = vadd.f32 %v2588, %v2620
    %v2637 = vadd.f32 %v2589, %v2621
    %v2638 = vadd.f32 %v2590, %v2622
    %v2639 = vadd.f32 %v2591, %v2623
    %v2640 = vadd.f32 %v2592, %v2624
    %v2641 = vadd.f32 %v2593, %v2625
    %v2642 = vadd.f32 %v2594, %v2626
    %v2643 = vadd.f32 %v2595, %v2627
    %v2644 = vadd.f32 %v2596, %v2628
    %v2645 = vadd.f32 %v2597, %v2629
    %v2646 = vadd.f32 %v2598, %v2630
    %v2647 = vadd.f32 %v2599, %v2631
    %v2648 = vadd.f32 %v2600, %v2632
    %v2649 = vadd.f32 %v2601, %v2633
    %v2650 = vadd.f32 %v2602, %v2634
    %v2651 = vadd.f32 %v2603, %v2635
    %v2652 = vlaneseq
    %v2653 = vshrl.u32 %v2652, 7
    %v2654 = vsub.s32 2, %v2653
    %v2655 = vrot.slane %v2552, %v2654
    %v2656 = vlaneseq
    %v2657 = vshrl.u32 %v2656, 7
    %v2658 = vsub.s32 2, %v2657
    %v2659 = vrot.slane %v2553, %v2658
    %v2660 = vlaneseq
    %v2661 = vshrl.u32 %v2660, 7
    %v2662 = vsub.s32 2, %v2661
    %v2663 = vrot.slane %v2554, %v2662
    %v2664 = vlaneseq
    %v2665 = vshrl.u32 %v2664, 7
    %v2666 = vsub.s32 2, %v2665
    %v2667 = vrot.slane %v2555, %v2666
    %v2668 = vmul.f32 %v569, %v2655
    %v2669 = vmul.f32 %v569, %v2659
    %v2670 = vmul.f32 %v569, %v2663
    %v2671 = vmul.f32 %v569, %v2667
    %v2672 = vmul.f32 %v574, %v2655
    %v2673 = vmul.f32 %v574, %v2659
    %v2674 = vmul.f32 %v574, %v2663
    %v2675 = vmul.f32 %v574, %v2667
    %v2676 = vmul.f32 %v579, %v2655
    %v2677 = vmul.f32 %v579, %v2659
    %v2678 = vmul.f32 %v579, %v2663
    %v2679 = vmul.f32 %v579, %v2667
    %v2680 = vmul.f32 %v584, %v2655
    %v2681 = vmul.f32 %v584, %v2659
    %v2682 = vmul.f32 %v584, %v2663
    %v2683 = vmul.f32 %v584, %v2667
    %v2684 = vadd.f32 %v2636, %v2668
    %v2685 = vadd.f32 %v2637, %v2669
    %v2686 = vadd.f32 %v2638, %v2670
    %v2687 = vadd.f32 %v2639, %v2671
    %v2688 = vadd.f32 %v2640, %v2672
    %v2689 = vadd.f32 %v2641, %v2673
    %v2690 = vadd.f32 %v2642, %v2674
    %v2691 = vadd.f32 %v2643, %v2675
    %v2692 = vadd.f32 %v2644, %v2676
    %v2693 = vadd.f32 %v2645, %v2677
    %v2694 = vadd.f32 %v2646, %v2678
    %v2695 = vadd.f32 %v2647, %v2679
    %v2696 = vadd.f32 %v2648, %v2680
    %v2697 = vadd.f32 %v2649, %v2681
    %v2698 = vadd.f32 %v2650, %v2682
    %v2699 = vadd.f32 %v2651, %v2683
    %v2700 = vlaneseq
    %v2701 = vshrl.u32 %v2700, 7
    %v2702 = vsub.s32 3, %v2701
    %v2703 = vrot.slane %v2552, %v2702
    %v2704 = vlaneseq
    %v2705 = vshrl.u32 %v2704, 7
    %v2706 = vsub.s32 3, %v2705
    %v2707 = vrot.slane %v2553, %v2706
    %v2708 = vlaneseq
    %v2709 = vshrl.u32 %v2708, 7
    %v2710 = vsub.s32 3, %v2709
    %v2711 = vrot.slane %v2554, %v2710
    %v2712 = vlaneseq
    %v2713 = vshrl.u32 %v2712, 7
    %v2714 = vsub.s32 3, %v2713
    %v2715 = vrot.slane %v2555, %v2714
    %v2716 = vmul.f32 %v637, %v2703
    %v2717 = vmul.f32 %v637, %v2707
    %v2718 = vmul.f32 %v637, %v2711
    %v2719 = vmul.f32 %v637, %v2715
    %v2720 = vmul.f32 %v642, %v2703
    %v2721 = vmul.f32 %v642, %v2707
    %v2722 = vmul.f32 %v642, %v2711
    %v2723 = vmul.f32 %v642, %v2715
    %v2724 = vmul.f32 %v647, %v2703
    %v2725 = vmul.f32 %v647, %v2707
    %v2726 = vmul.f32 %v647, %v2711
    %v2727 = vmul.f32 %v647, %v2715
    %v2728 = vmul.f32 %v652, %v2703
    %v2729 = vmul.f32 %v652, %v2707
    %v2730 = vmul.f32 %v652, %v2711
    %v2731 = vmul.f32 %v652, %v2715
    %v2732 = vadd.f32 %v2684, %v2716
    %v2733 = vadd.f32 %v2685, %v2717
    %v2734 = vadd.f32 %v2686, %v2718
    %v2735 = vadd.f32 %v2687, %v2719
    %v2736 = vadd.f32 %v2688, %v2720
    %v2737 = vadd.f32 %v2689, %v2721
    %v2738 = vadd.f32 %v2690, %v2722
    %v2739 = vadd.f32 %v2691, %v2723
    %v2740 = vadd.f32 %v2692, %v2724
    %v2741 = vadd.f32 %v2693, %v2725
    %v2742 = vadd.f32 %v2694, %v2726
    %v2743 = vadd.f32 %v2695, %v2727
    %v2744 = vadd.f32 %v2696, %v2728
    %v2745 = vadd.f32 %v2697, %v2729
    %v2746 = vadd.f32 %v2698, %v2730
    %v2747 = vadd.f32 %v2699, %v2731
    %v2748 = vmul.f32 %v705, %v2132
    %v2749 = vmul.f32 %v705, %v2136
    %v2750 = vmul.f32 %v705, %v2140
    %v2751 = vmul.f32 %v705, %v2144
    %v2752 = vmul.f32 %v710, %v2132
    %v2753 = vmul.f32 %v710, %v2136
    %v2754 = vmul.f32 %v710, %v2140
    %v2755 = vmul.f32 %v710, %v2144
    %v2756 = vmul.f32 %v715, %v2132
    %v2757 = vmul.f32 %v715, %v2136
    %v2758 = vmul.f32 %v715, %v2140
    %v2759 = vmul.f32 %v715, %v2144
    %v2760 = vmul.f32 %v720, %v2132
    %v2761 = vmul.f32 %v720, %v2136
    %v2762 = vmul.f32 %v720, %v2140
    %v2763 = vmul.f32 %v720, %v2144
    %v2764 = vadd.f32 %v2732, %v2748
    %v2765 = vadd.f32 %v2733, %v2749
    %v2766 = vadd.f32 %v2734, %v2750
    %v2767 = vadd.f32 %v2735, %v2751
    %v2768 = vadd.f32 %v2736, %v2752
    %v2769 = vadd.f32 %v2737, %v2753
    %v2770 = vadd.f32 %v2738, %v2754
    %v2771 = vadd.f32 %v2739, %v2755
    %v2772 = vadd.f32 %v2740, %v2756
    %v2773 = vadd.f32 %v2741, %v2757
    %v2774 = vadd.f32 %v2742, %v2758
    %v2775 = vadd.f32 %v2743, %v2759
    %v2776 = vadd.f32 %v2744, %v2760
    %v2777 = vadd.f32 %v2745, %v2761
    %v2778 = vadd.f32 %v2746, %v2762
    %v2779 = vadd.f32 %v2747, %v2763
    %v2780 = vmul.f32 %v745, %v2156
    %v2781 = vmul.f32 %v745, %v2160
    %v2782 = vmul.f32 %v745, %v2164
    %v2783 = vmul.f32 %v745, %v2168
    %v2784 = vmul.f32 %v750, %v2156
    %v2785 = vmul.f32 %v750, %v2160
    %v2786 = vmul.f32 %v750, %v2164
    %v2787 = vmul.f32 %v750, %v2168
    %v2788 = vmul.f32 %v755, %v2156
    %v2789 = vmul.f32 %v755, %v2160
    %v2790 = vmul.f32 %v755, %v2164
    %v2791 = vmul.f32 %v755, %v2168
    %v2792 = vmul.f32 %v760, %v2156
    %v2793 = vmul.f32 %v760, %v2160
    %v2794 = vmul.f32 %v760, %v2164
    %v2795 = vmul.f32 %v760, %v2168
    %v2796 = vadd.f32 %v2764, %v2780
    %v2797 = vadd.f32 %v2765, %v2781
    %v2798 = vadd.f32 %v2766, %v2782
    %v2799 = vadd.f32 %v2767, %v2783
    %v2800 = vadd.f32 %v2768, %v2784
    %v2801 = vadd.f32 %v2769, %v2785
    %v2802 = vadd.f32 %v2770, %v2786
    %v2803 = vadd.f32 %v2771, %v2787
    %v2804 = vadd.f32 %v2772, %v2788
    %v2805 = vadd.f32 %v2773, %v2789
    %v2806 = vadd.f32 %v2774, %v2790
    %v2807 = vadd.f32 %v2775, %v2791
    %v2808 = vadd.f32 %v2776, %v2792
    %v2809 = vadd.f32 %v2777, %v2793
    %v2810 = vadd.f32 %v2778, %v2794
    %v2811 = vadd.f32 %v2779, %v2795
    %v2812 = vmul.f32 %v785, %v2180
    %v2813 = vmul.f32 %v785, %v2184
    %v2814 = vmul.f32 %v785, %v2188
    %v2815 = vmul.f32 %v785, %v2192
    %v2816 = vmul.f32 %v790, %v2180
    %v2817 = vmul.f32 %v790, %v2184
    %v2818 = vmul.f32 %v790, %v2188
    %v2819 = vmul.f32 %v790, %v2192
    %v2820 = vmul.f32 %v795, %v2180
    %v2821 = vmul.f32 %v795, %v2184
    %v2822 = vmul.f32 %v795, %v2188
    %v2823 = vmul.f32 %v795, %v2192
    %v2824 = vmul.f32 %v800, %v2180
    %v2825 = vmul.f32 %v800, %v2184
    %v2826 = vmul.f32 %v800, %v2188
    %v2827 = vmul.f32 %v800, %v2192
    %v2828 = vadd.f32 %v2796, %v2812
    %v2829 = vadd.f32 %v2797, %v2813
    %v2830 = vadd.f32 %v2798, %v2814
    %v2831 = vadd.f32 %v2799, %v2815
    %v2832 = vadd.f32 %v2800, %v2816
    %v2833 = vadd.f32 %v2801, %v2817
    %v2834 = vadd.f32 %v2802, %v2818
    %v2835 = vadd.f32 %v2803, %v2819
    %v2836 = vadd.f32 %v2804, %v2820
    %v2837 = vadd.f32 %v2805, %v2821
    %v2838 = vadd.f32 %v2806, %v2822
    %v2839 = vadd.f32 %v2807, %v2823
    %v2840 = vadd.f32 %v2808, %v2824
    %v2841 = vadd.f32 %v2809, %v2825
    %v2842 = vadd.f32 %v2810, %v2826
    %v2843 = vadd.f32 %v2811, %v2827
    %v2844 = vmul.f32 %v825, %v2204
    %v2845 = vmul.f32 %v825, %v2208
    %v2846 = vmul.f32 %v825, %v2212
    %v2847 = vmul.f32 %v825, %v2216
    %v2848 = vmul.f32 %v830, %v2204
    %v2849 = vmul.f32 %v830, %v2208
    %v2850 = vmul.f32 %v830, %v2212
    %v2851 = vmul.f32 %v830, %v2216
    %v2852 = vmul.f32 %v835, %v2204
    %v2853 = vmul.f32 %v835, %v2208
    %v2854 = vmul.f32 %v835, %v2212
    %v2855 = vmul.f32 %v835, %v2216
    %v2856 = vmul.f32 %v840, %v2204
    %v2857 = vmul.f32 %v840, %v2208
    %v2858 = vmul.f32 %v840, %v2212
    %v2859 = vmul.f32 %v840, %v2216
    %v2860 = vadd.f32 %v2828, %v2844
    %v2861 = vadd.f32 %v2829, %v2845
    %v2862 = vadd.f32 %v2830, %v2846
    %v2863 = vadd.f32 %v2831, %v2847
    %v2864 = vadd.f32 %v2832, %v2848
    %v2865 = vadd.f32 %v2833, %v2849
    %v2866 = vadd.f32 %v2834, %v2850
    %v2867 = vadd.f32 %v2835, %v2851
    %v2868 = vadd.f32 %v2836, %v2852
    %v2869 = vadd.f32 %v2837, %v2853
    %v2870 = vadd.f32 %v2838, %v2854
    %v2871 = vadd.f32 %v2839, %v2855
    %v2872 = vadd.f32 %v2840, %v2856
    %v2873 = vadd.f32 %v2841, %v2857
    %v2874 = vadd.f32 %v2842, %v2858
    %v2875 = vadd.f32 %v2843, %v2859
    %v2876 = vmul.f32 %v865, %v2228
    %v2877 = vmul.f32 %v865, %v2232
    %v2878 = vmul.f32 %v865, %v2236
    %v2879 = vmul.f32 %v865, %v2240
    %v2880 = vmul.f32 %v870, %v2228
    %v2881 = vmul.f32 %v870, %v2232
    %v2882 = vmul.f32 %v870, %v2236
    %v2883 = vmul.f32 %v870, %v2240
    %v2884 = vmul.f32 %v875, %v2228
    %v2885 = vmul.f32 %v875, %v2232
    %v2886 = vmul.f32 %v875, %v2236
    %v2887 = vmul.f32 %v875, %v2240
    %v2888 = vmul.f32 %v880, %v2228
    %v2889 = vmul.f32 %v880, %v2232
    %v2890 = vmul.f32 %v880, %v2236
    %v2891 = vmul.f32 %v880, %v2240
    %v2892 = vadd.f32 %v2860, %v2876
    %v2893 = vadd.f32 %v2861, %v2877
    %v2894 = vadd.f32 %v2862, %v2878
    %v2895 = vadd.f32 %v2863, %v2879
    %v2896 = vadd.f32 %v2864, %v2880
    %v2897 = vadd.f32 %v2865, %v2881
    %v2898 = vadd.f32 %v2866, %v2882
    %v2899 = vadd.f32 %v2867, %v2883
    %v2900 = vadd.f32 %v2868, %v2884
    %v2901 = vadd.f32 %v2869, %v2885
    %v2902 = vadd.f32 %v2870, %v2886
    %v2903 = vadd.f32 %v2871, %v2887
    %v2904 = vadd.f32 %v2872, %v2888
    %v2905 = vadd.f32 %v2873, %v2889
    %v2906 = vadd.f32 %v2874, %v2890
    %v2907 = vadd.f32 %v2875, %v2891
    %v2908 = vmul.f32 %v905, %v2252
    %v2909 = vmul.f32 %v905, %v2256
    %v2910 = vmul.f32 %v905, %v2260
    %v2911 = vmul.f32 %v905, %v2264
    %v2912 = vmul.f32 %v910, %v2252
    %v2913 = vmul.f32 %v910, %v2256
    %v2914 = vmul.f32 %v910, %v2260
    %v2915 = vmul.f32 %v910, %v2264
    %v2916 = vmul.f32 %v915, %v2252
    %v2917 = vmul.f32 %v915, %v2256
    %v2918 = vmul.f32 %v915, %v2260
    %v2919 = vmul.f32 %v915, %v2264
    %v2920 = vmul.f32 %v920, %v2252
    %v2921 = vmul.f32 %v920, %v2256
    %v2922 = vmul.f32 %v920, %v2260
    %v2923 = vmul.f32 %v920, %v2264
    %v2924 = vadd.f32 %v2892, %v2908
    %v2925 = vadd.f32 %v2893, %v2909
    %v2926 = vadd.f32 %v2894, %v2910
    %v2927 = vadd.f32 %v2895, %v2911
    %v2928 = vadd.f32 %v2896, %v2912
    %v2929 = vadd.f32 %v2897, %v2913
    %v2930 = vadd.f32 %v2898, %v2914
    %v2931 = vadd.f32 %v2899, %v2915
    %v2932 = vadd.f32 %v2900, %v2916
    %v2933 = vadd.f32 %v2901, %v2917
    %v2934 = vadd.f32 %v2902, %v2918
    %v2935 = vadd.f32 %v2903, %v2919
    %v2936 = vadd.f32 %v2904, %v2920
    %v2937 = vadd.f32 %v2905, %v2921
    %v2938 = vadd.f32 %v2906, %v2922
    %v2939 = vadd.f32 %v2907, %v2923
    %v2940 = vmul.f32 %v945, %v2276
    %v2941 = vmul.f32 %v945, %v2280
    %v2942 = vmul.f32 %v945, %v2284
    %v2943 = vmul.f32 %v945, %v2288
    %v2944 = vmul.f32 %v950, %v2276
    %v2945 = vmul.f32 %v950, %v2280
    %v2946 = vmul.f32 %v950, %v2284
    %v2947 = vmul.f32 %v950, %v2288
    %v2948 = vmul.f32 %v955, %v2276
    %v2949 = vmul.f32 %v955, %v2280
    %v2950 = vmul.f32 %v955, %v2284
    %v2951 = vmul.f32 %v955, %v2288
    %v2952 = vmul.f32 %v960, %v2276
    %v2953 = vmul.f32 %v960, %v2280
    %v2954 = vmul.f32 %v960, %v2284
    %v2955 = vmul.f32 %v960, %v2288
    %v2956 = vadd.f32 %v2924, %v2940
    %v2957 = vadd.f32 %v2925, %v2941
    %v2958 = vadd.f32 %v2926, %v2942
    %v2959 = vadd.f32 %v2927, %v2943
    %v2960 = vadd.f32 %v2928, %v2944
    %v2961 = vadd.f32 %v2929, %v2945
    %v2962 = vadd.f32 %v2930, %v2946
    %v2963 = vadd.f32 %v2931, %v2947
    %v2964 = vadd.f32 %v2932, %v2948
    %v2965 = vadd.f32 %v2933, %v2949
    %v2966 = vadd.f32 %v2934, %v2950
    %v2967 = vadd.f32 %v2935, %v2951
    %v2968 = vadd.f32 %v2936, %v2952
    %v2969 = vadd.f32 %v2937, %v2953
    %v2970 = vadd.f32 %v2938, %v2954
    %v2971 = vadd.f32 %v2939, %v2955
    %v2972 = vmul.f32 %v985, %v2300
    %v2973 = vmul.f32 %v985, %v2304
    %v2974 = vmul.f32 %v985, %v2308
    %v2975 = vmul.f32 %v985, %v2312
    %v2976 = vmul.f32 %v990, %v2300
    %v2977 = vmul.f32 %v990, %v2304
    %v2978 = vmul.f32 %v990, %v2308
    %v2979 = vmul.f32 %v990, %v2312
    %v2980 = vmul.f32 %v995, %v2300
    %v2981 = vmul.f32 %v995, %v2304
    %v2982 = vmul.f32 %v995, %v2308
    %v2983 = vmul.f32 %v995, %v2312
    %v2984 = vmul.f32 %v1000, %v2300
    %v2985 = vmul.f32 %v1000, %v2304
    %v2986 = vmul.f32 %v1000, %v2308
    %v2987 = vmul.f32 %v1000, %v2312
    %v2988 = vadd.f32 %v2956, %v2972
    %v2989 = vadd.f32 %v2957, %v2973
    %v2990 = vadd.f32 %v2958, %v2974
    %v2991 = vadd.f32 %v2959, %v2975
    %v2992 = vadd.f32 %v2960, %v2976
    %v2993 = vadd.f32 %v2961, %v2977
    %v2994 = vadd.f32 %v2962, %v2978
    %v2995 = vadd.f32 %v2963, %v2979
    %v2996 = vadd.f32 %v2964, %v2980
    %v2997 = vadd.f32 %v2965, %v2981
    %v2998 = vadd.f32 %v2966, %v2982
    %v2999 = vadd.f32 %v2967, %v2983
    %v3000 = vadd.f32 %v2968, %v2984
    %v3001 = vadd.f32 %v2969, %v2985
    %v3002 = vadd.f32 %v2970, %v2986
    %v3003 = vadd.f32 %v2971, %v2987
    %v3004 = vxor.u32 %v2988, 2147483648
    %v3005 = vxor.u32 %v2989, 2147483648
    %v3006 = vxor.u32 %v2990, 2147483648
    %v3007 = vxor.u32 %v2991, 2147483648
    %v3008 = vmul.f32 %v3004, 1.442695
    %v3009 = vpow.pop %v3008
    %v3010 = vmul.f32 %v3005, 1.442695
    %v3011 = vpow.pop %v3010
    %v3012 = vmul.f32 %v3006, 1.442695
    %v3013 = vpow.pop %v3012
    %v3014 = vmul.f32 %v3007, 1.442695
    %v3015 = vpow.pop %v3014
    %v3016 = vadd.f32 %v3009, 1.0
    %v3017 = vadd.f32 %v3011, 1.0
    %v3018 = vadd.f32 %v3013, 1.0
    %v3019 = vadd.f32 %v3015, 1.0
    %v3020 = vrcp.pop %v3016
    %v3021 = vmul.f32 1.0, %v3020
    %v3022 = vrcp.pop %v3017
    %v3023 = vmul.f32 1.0, %v3022
    %v3024 = vrcp.pop %v3018
    %v3025 = vmul.f32 1.0, %v3024
    %v3026 = vrcp.pop %v3019
    %v3027 = vmul.f32 1.0, %v3026
    %v3028 = vxor.u32 %v2992, 2147483648
    %v3029 = vxor.u32 %v2993, 2147483648
    %v3030 = vxor.u32 %v2994, 2147483648
    %v3031 = vxor.u32 %v2995, 2147483648
    %v3032 = vmul.f32 %v3028, 1.442695
    %v3033 = vpow.pop %v3032
    %v3034 = vmul.f32 %v3029, 1.442695
    %v3035 = vpow.pop %v3034
    %v3036 = vmul.f32 %v3030, 1.442695
    %v3037 = vpow.pop %v3036
    %v3038 = vmul.f32 %v3031, 1.442695
    %v3039 = vpow.pop %v3038
    %v3040 = vadd.f32 %v3033, 1.0
    %v3041 = vadd.f32 %v3035, 1.0
    %v3042 = vadd.f32 %v3037, 1.0
    %v3043 = vadd.f32 %v3039, 1.0
    %v3044 = vrcp.pop %v3040
    %v3045 = vmul.f32 1.0, %v3044
    %v3046 = vrcp.pop %v3041
    %v3047 = vmul.f32 1.0, %v3046
    %v3048 = vrcp.pop %v3042
    %v3049 = vmul.f32 1.0, %v3048
    %v3050 = vrcp.pop %v3043
    %v3051 = vmul.f32 1.0, %v3050
    %v3052 = vtanh.pop %v2996
    %v3053 = vtanh.pop %v2997
    %v3054 = vtanh.pop %v2998
    %v3055 = vtanh.pop %v2999
    %v3056 = vxor.u32 %v3000, 2147483648
    %v3057 = vxor.u32 %v3001, 2147483648
    %v3058 = vxor.u32 %v3002, 2147483648
    %v3059 = vxor.u32 %v3003, 2147483648
    %v3060 = vmul.f32 %v3056, 1.442695
    %v3061 = vpow.pop %v3060
    %v3062 = vmul.f32 %v3057, 1.442695
    %v3063 = vpow.pop %v3062
    %v3064 = vmul.f32 %v3058, 1.442695
    %v3065 = vpow.pop %v3064
    %v3066 = vmul.f32 %v3059, 1.442695
    %v3067 = vpow.pop %v3066
    %v3068 = vadd.f32 %v3061, 1.0
    %v3069 = vadd.f32 %v3063, 1.0
    %v3070 = vadd.f32 %v3065, 1.0
    %v3071 = vadd.f32 %v3067, 1.0
    %v3072 = vrcp.pop %v3068
    %v3073 = vmul.f32 1.0, %v3072
    %v3074 = vrcp.pop %v3069
    %v3075 = vmul.f32 1.0, %v3074
    %v3076 = vrcp.pop %v3070
    %v3077 = vmul.f32 1.0, %v3076
    %v3078 = vrcp.pop %v3071
    %v3079 = vmul.f32 1.0, %v3078
    %v3080 = vmul.f32 %v3045, %v2117
    %v3081 = vmul.f32 %v3047, %v2118
    %v3082 = vmul.f32 %v3049, %v2119
    %v3083 = vmul.f32 %v3051, %v2120
    %v3084 = vmul.f32 %v3021, %v3052
    %v3085 = vmul.f32 %v3023, %v3053
    %v3086 = vmul.f32 %v3025, %v3054
    %v3087 = vmul.f32 %v3027, %v3055
    %v3088 = vadd.f32 %v3080, %v3084
    %v3089 = vadd.f32 %v3081, %v3085
    %v3090 = vadd.f32 %v3082, %v3086
    %v3091 = vadd.f32 %v3083, %v3087
    %v3092 = vtanh.pop %v3088
    %v3093 = vtanh.pop %v3089
    %v3094 = vtanh.pop %v3090
    %v3095 = vtanh.pop %v3091
    %v3096 = vmul.f32 %v3073, %v3092
    %v3097 = vmul.f32 %v3075, %v3093
    %v3098 = vmul.f32 %v3077, %v3094
    %v3099 = vmul.f32 %v3079, %v3095
    %v3100 = vlaneseq
    %v3101 = vshrl.u32 %v3100, 7
    %v3102 = vsub.s32 0, %v3101
    %v3103 = vrot.slane %v3096, %v3102
    %v3104 = vlaneseq
    %v3105 = vshrl.u32 %v3104, 7
    %v3106 = vsub.s32 0, %v3105
    %v3107 = vrot.slane %v3097, %v3106
    %v3108 = vlaneseq
    %v3109 = vshrl.u32 %v3108, 7
    %v3110 = vsub.s32 0, %v3109
    %v3111 = vrot.slane %v3098, %v3110
    %v3112 = vlaneseq
    %v3113 = vshrl.u32 %v3112, 7
    %v3114 = vsub.s32 0, %v3113
    %v3115 = vrot.slane %v3099, %v3114
    %v3116 = vmul.f32 %v1121, %v3103
    %v3117 = vmul.f32 %v1121, %v3107
    %v3118 = vmul.f32 %v1121, %v3111
    %v3119 = vmul.f32 %v1121, %v3115
    %v3120 = vadd.f32 %v186, %v3116
    %v3121 = vadd.f32 %v186, %v3117
    %v3122 = vadd.f32 %v186, %v3118
    %v3123 = vadd.f32 %v186, %v3119
    %v3124 = vlaneseq
    %v3125 = vshrl.u32 %v3124, 7
    %v3126 = vsub.s32 1, %v3125
    %v3127 = vrot.slane %v3096, %v3126
    %v3128 = vlaneseq
    %v3129 = vshrl.u32 %v3128, 7
    %v3130 = vsub.s32 1, %v3129
    %v3131 = vrot.slane %v3097, %v3130
    %v3132 = vlaneseq
    %v3133 = vshrl.u32 %v3132, 7
    %v3134 = vsub.s32 1, %v3133
    %v3135 = vrot.slane %v3098, %v3134
    %v3136 = vlaneseq
    %v3137 = vshrl.u32 %v3136, 7
    %v3138 = vsub.s32 1, %v3137
    %v3139 = vrot.slane %v3099, %v3138
    %v3140 = vmul.f32 %v1150, %v3127
    %v3141 = vmul.f32 %v1150, %v3131
    %v3142 = vmul.f32 %v1150, %v3135
    %v3143 = vmul.f32 %v1150, %v3139
    %v3144 = vadd.f32 %v3120, %v3140
    %v3145 = vadd.f32 %v3121, %v3141
    %v3146 = vadd.f32 %v3122, %v3142
    %v3147 = vadd.f32 %v3123, %v3143
    %v3148 = vlaneseq
    %v3149 = vshrl.u32 %v3148, 7
    %v3150 = vsub.s32 2, %v3149
    %v3151 = vrot.slane %v3096, %v3150
    %v3152 = vlaneseq
    %v3153 = vshrl.u32 %v3152, 7
    %v3154 = vsub.s32 2, %v3153
    %v3155 = vrot.slane %v3097, %v3154
    %v3156 = vlaneseq
    %v3157 = vshrl.u32 %v3156, 7
    %v3158 = vsub.s32 2, %v3157
    %v3159 = vrot.slane %v3098, %v3158
    %v3160 = vlaneseq
    %v3161 = vshrl.u32 %v3160, 7
    %v3162 = vsub.s32 2, %v3161
    %v3163 = vrot.slane %v3099, %v3162
    %v3164 = vmul.f32 %v1179, %v3151
    %v3165 = vmul.f32 %v1179, %v3155
    %v3166 = vmul.f32 %v1179, %v3159
    %v3167 = vmul.f32 %v1179, %v3163
    %v3168 = vadd.f32 %v3144, %v3164
    %v3169 = vadd.f32 %v3145, %v3165
    %v3170 = vadd.f32 %v3146, %v3166
    %v3171 = vadd.f32 %v3147, %v3167
    %v3172 = vlaneseq
    %v3173 = vshrl.u32 %v3172, 7
    %v3174 = vsub.s32 3, %v3173
    %v3175 = vrot.slane %v3096, %v3174
    %v3176 = vlaneseq
    %v3177 = vshrl.u32 %v3176, 7
    %v3178 = vsub.s32 3, %v3177
    %v3179 = vrot.slane %v3097, %v3178
    %v3180 = vlaneseq
    %v3181 = vshrl.u32 %v3180, 7
    %v3182 = vsub.s32 3, %v3181
    %v3183 = vrot.slane %v3098, %v3182
    %v3184 = vlaneseq
    %v3185 = vshrl.u32 %v3184, 7
    %v3186 = vsub.s32 3, %v3185
    %v3187 = vrot.slane %v3099, %v3186
    %v3188 = vmul.f32 %v1208, %v3175
    %v3189 = vmul.f32 %v1208, %v3179
    %v3190 = vmul.f32 %v1208, %v3183
    %v3191 = vmul.f32 %v1208, %v3187
    %v3192 = vadd.f32 %v3168, %v3188
    %v3193 = vadd.f32 %v3169, %v3189
    %v3194 = vadd.f32 %v3170, %v3190
    %v3195 = vadd.f32 %v3171, %v3191
    %v3196 = vlaneseq
    %v3197 = vshrl.u32 %v3196, 7
    %v3198 = vsub.s32 4, %v3197
    %v3199 = vrot.slane %v3096, %v3198
    %v3200 = vlaneseq
    %v3201 = vshrl.u32 %v3200, 7
    %v3202 = vsub.s32 4, %v3201
    %v3203 = vrot.slane %v3097, %v3202
    %v3204 = vlaneseq
    %v3205 = vshrl.u32 %v3204, 7
    %v3206 = vsub.s32 4, %v3205
    %v3207 = vrot.slane %v3098, %v3206
    %v3208 = vlaneseq
    %v3209 = vshrl.u32 %v3208, 7
    %v3210 = vsub.s32 4, %v3209
    %v3211 = vrot.slane %v3099, %v3210
    %v3212 = vmul.f32 %v1237, %v3199
    %v3213 = vmul.f32 %v1237, %v3203
    %v3214 = vmul.f32 %v1237, %v3207
    %v3215 = vmul.f32 %v1237, %v3211
    %v3216 = vadd.f32 %v3192, %v3212
    %v3217 = vadd.f32 %v3193, %v3213
    %v3218 = vadd.f32 %v3194, %v3214
    %v3219 = vadd.f32 %v3195, %v3215
    %v3220 = vlaneseq
    %v3221 = vshrl.u32 %v3220, 7
    %v3222 = vsub.s32 5, %v3221
    %v3223 = vrot.slane %v3096, %v3222
    %v3224 = vlaneseq
    %v3225 = vshrl.u32 %v3224, 7
    %v3226 = vsub.s32 5, %v3225
    %v3227 = vrot.slane %v3097, %v3226
    %v3228 = vlaneseq
    %v3229 = vshrl.u32 %v3228, 7
    %v3230 = vsub.s32 5, %v3229
    %v3231 = vrot.slane %v3098, %v3230
    %v3232 = vlaneseq
    %v3233 = vshrl.u32 %v3232, 7
    %v3234 = vsub.s32 5, %v3233
    %v3235 = vrot.slane %v3099, %v3234
    %v3236 = vmul.f32 %v1266, %v3223
    %v3237 = vmul.f32 %v1266, %v3227
    %v3238 = vmul.f32 %v1266, %v3231
    %v3239 = vmul.f32 %v1266, %v3235
    %v3240 = vadd.f32 %v3216, %v3236
    %v3241 = vadd.f32 %v3217, %v3237
    %v3242 = vadd.f32 %v3218, %v3238
    %v3243 = vadd.f32 %v3219, %v3239
    %v3244 = vlaneseq
    %v3245 = vshrl.u32 %v3244, 7
    %v3246 = vsub.s32 6, %v3245
    %v3247 = vrot.slane %v3096, %v3246
    %v3248 = vlaneseq
    %v3249 = vshrl.u32 %v3248, 7
    %v3250 = vsub.s32 6, %v3249
    %v3251 = vrot.slane %v3097, %v3250
    %v3252 = vlaneseq
    %v3253 = vshrl.u32 %v3252, 7
    %v3254 = vsub.s32 6, %v3253
    %v3255 = vrot.slane %v3098, %v3254
    %v3256 = vlaneseq
    %v3257 = vshrl.u32 %v3256, 7
    %v3258 = vsub.s32 6, %v3257
    %v3259 = vrot.slane %v3099, %v3258
    %v3260 = vmul.f32 %v1295, %v3247
    %v3261 = vmul.f32 %v1295, %v3251
    %v3262 = vmul.f32 %v1295, %v3255
    %v3263 = vmul.f32 %v1295, %v3259
    %v3264 = vadd.f32 %v3240, %v3260
    %v3265 = vadd.f32 %v3241, %v3261
    %v3266 = vadd.f32 %v3242, %v3262
    %v3267 = vadd.f32 %v3243, %v3263
    %v3268 = vlaneseq
    %v3269 = vshrl.u32 %v3268, 7
    %v3270 = vsub.s32 7, %v3269
    %v3271 = vrot.slane %v3096, %v3270
    %v3272 = vlaneseq
    %v3273 = vshrl.u32 %v3272, 7
    %v3274 = vsub.s32 7, %v3273
    %v3275 = vrot.slane %v3097, %v3274
    %v3276 = vlaneseq
    %v3277 = vshrl.u32 %v3276, 7
    %v3278 = vsub.s32 7, %v3277
    %v3279 = vrot.slane %v3098, %v3278
    %v3280 = vlaneseq
    %v3281 = vshrl.u32 %v3280, 7
    %v3282 = vsub.s32 7, %v3281
    %v3283 = vrot.slane %v3099, %v3282
    %v3284 = vmul.f32 %v1324, %v3271
    %v3285 = vmul.f32 %v1324, %v3275
    %v3286 = vmul.f32 %v1324, %v3279
    %v3287 = vmul.f32 %v1324, %v3283
    %v3288 = vadd.f32 %v3264, %v3284
    %v3289 = vadd.f32 %v3265, %v3285
    %v3290 = vadd.f32 %v3266, %v3286
    %v3291 = vadd.f32 %v3267, %v3287
    %v3292 = vmul.f32 %v3288, 0.25
    %v3293 = vmul.f32 %v3289, 0.25
    %v3294 = vmul.f32 %v3290, 0.25
    %v3295 = vmul.f32 %v3291, 0.25
    %v3300 = vcombine.low %v3292, %v3293
    %v3301 = vcombine.low %v3294, %v3295
    %v3304 = vsub.f32 %v2333, %v3300
    %v3305 = vsub.f32 %v2334, %v3301
    %v3308 = vcombine.high %v3304, %v3304
    %v3309 = vcombine.high %v3305, %v3305
    %v3312 = vmul.f32 %v64, %v3304
    %v3313 = vmul.f32 %v65, %v3308
    %v3314 = vmul.f32 %v66, %v3305
    %v3315 = vmul.f32 %v67, %v3309
    %v3316 = vsub.f32 %v3312, %v74
    %v3317 = vsub.f32 %v3313, %v75
    %v3318 = vsub.f32 %v3314, %v76
    %v3319 = vsub.f32 %v3315, %v77
    %v3320 = vlaneseq
    %v3321 = vshrl.u32 %v3320, 7
    %v3322 = vsub.s32 0, %v3321
    %v3323 = vrot.slane %v3304, %v3322
    %v3324 = vlaneseq
    %v3325 = vshrl.u32 %v3324, 7
    %v3326 = vsub.s32 4, %v3325
    %v3327 = vrot.slane %v3304, %v3326
    %v3328 = vlaneseq
    %v3329 = vshrl.u32 %v3328, 7
    %v3330 = vsub.s32 0, %v3329
    %v3331 = vrot.slane %v3305, %v3330
    %v3332 = vlaneseq
    %v3333 = vshrl.u32 %v3332, 7
    %v3334 = vsub.s32 4, %v3333
    %v3335 = vrot.slane %v3305, %v3334
    %v3340 = vlaneseq
    %v3341 = vshrl.u32 %v3340, 7
    %v3342 = vsub.s32 0, %v3341
    %v3343 = vrot.slane %v3323, %v3342
    %v3344 = vlaneseq
    %v3345 = vshrl.u32 %v3344, 7
    %v3346 = vsub.s32 0, %v3345
    %v3347 = vrot.slane %v3327, %v3346
    %v3348 = vlaneseq
    %v3349 = vshrl.u32 %v3348, 7
    %v3350 = vsub.s32 0, %v3349
    %v3351 = vrot.slane %v3331, %v3350
    %v3352 = vlaneseq
    %v3353 = vshrl.u32 %v3352, 7
    %v3354 = vsub.s32 0, %v3353
    %v3355 = vrot.slane %v3335, %v3354
    %v3356 = vmul.f32 %v205, %v3343
    %v3357 = vmul.f32 %v205, %v3347
    %v3358 = vmul.f32 %v205, %v3351
    %v3359 = vmul.f32 %v205, %v3355
    %v3360 = vadd.f32 %v3316, %v3356
    %v3361 = vadd.f32 %v3317, %v3357
    %v3362 = vadd.f32 %v3318, %v3358
    %v3363 = vadd.f32 %v3319, %v3359
    %v3364 = vlaneseq
    %v3365 = vshrl.u32 %v3364, 7
    %v3366 = vsub.s32 1, %v3365
    %v3367 = vrot.slane %v3304, %v3366
    %v3368 = vlaneseq
    %v3369 = vshrl.u32 %v3368, 7
    %v3370 = vsub.s32 5, %v3369
    %v3371 = vrot.slane %v3304, %v3370
    %v3372 = vlaneseq
    %v3373 = vshrl.u32 %v3372, 7
    %v3374 = vsub.s32 1, %v3373
    %v3375 = vrot.slane %v3305, %v3374
    %v3376 = vlaneseq
    %v3377 = vshrl.u32 %v3376, 7
    %v3378 = vsub.s32 5, %v3377
    %v3379 = vrot.slane %v3305, %v3378
    %v3384 = vlaneseq
    %v3385 = vshrl.u32 %v3384, 7
    %v3386 = vsub.s32 1, %v3385
    %v3387 = vrot.slane %v3367, %v3386
    %v3388 = vlaneseq
    %v3389 = vshrl.u32 %v3388, 7
    %v3390 = vsub.s32 1, %v3389
    %v3391 = vrot.slane %v3371, %v3390
    %v3392 = vlaneseq
    %v3393 = vshrl.u32 %v3392, 7
    %v3394 = vsub.s32 1, %v3393
    %v3395 = vrot.slane %v3375, %v3394
    %v3396 = vlaneseq
    %v3397 = vshrl.u32 %v3396, 7
    %v3398 = vsub.s32 1, %v3397
    %v3399 = vrot.slane %v3379, %v3398
    %v3400 = vmul.f32 %v254, %v3387
    %v3401 = vmul.f32 %v254, %v3391
    %v3402 = vmul.f32 %v254, %v3395
    %v3403 = vmul.f32 %v254, %v3399
    %v3404 = vadd.f32 %v3360, %v3400
    %v3405 = vadd.f32 %v3361, %v3401
    %v3406 = vadd.f32 %v3362, %v3402
    %v3407 = vadd.f32 %v3363, %v3403
    %v3408 = vlaneseq
    %v3409 = vshrl.u32 %v3408, 7
    %v3410 = vsub.s32 2, %v3409
    %v3411 = vrot.slane %v3304, %v3410
    %v3412 = vlaneseq
    %v3413 = vshrl.u32 %v3412, 7
    %v3414 = vsub.s32 6, %v3413
    %v3415 = vrot.slane %v3304, %v3414
    %v3416 = vlaneseq
    %v3417 = vshrl.u32 %v3416, 7
    %v3418 = vsub.s32 2, %v3417
    %v3419 = vrot.slane %v3305, %v3418
    %v3420 = vlaneseq
    %v3421 = vshrl.u32 %v3420, 7
    %v3422 = vsub.s32 6, %v3421
    %v3423 = vrot.slane %v3305, %v3422
    %v3428 = vlaneseq
    %v3429 = vshrl.u32 %v3428, 7
    %v3430 = vsub.s32 2, %v3429
    %v3431 = vrot.slane %v3411, %v3430
    %v3432 = vlaneseq
    %v3433 = vshrl.u32 %v3432, 7
    %v3434 = vsub.s32 2, %v3433
    %v3435 = vrot.slane %v3415, %v3434
    %v3436 = vlaneseq
    %v3437 = vshrl.u32 %v3436, 7
    %v3438 = vsub.s32 2, %v3437
    %v3439 = vrot.slane %v3419, %v3438
    %v3440 = vlaneseq
    %v3441 = vshrl.u32 %v3440, 7
    %v3442 = vsub.s32 2, %v3441
    %v3443 = vrot.slane %v3423, %v3442
    %v3444 = vmul.f32 %v303, %v3431
    %v3445 = vmul.f32 %v303, %v3435
    %v3446 = vmul.f32 %v303, %v3439
    %v3447 = vmul.f32 %v303, %v3443
    %v3448 = vadd.f32 %v3404, %v3444
    %v3449 = vadd.f32 %v3405, %v3445
    %v3450 = vadd.f32 %v3406, %v3446
    %v3451 = vadd.f32 %v3407, %v3447
    %v3452 = vlaneseq
    %v3453 = vshrl.u32 %v3452, 7
    %v3454 = vsub.s32 3, %v3453
    %v3455 = vrot.slane %v3304, %v3454
    %v3456 = vlaneseq
    %v3457 = vshrl.u32 %v3456, 7
    %v3458 = vsub.s32 7, %v3457
    %v3459 = vrot.slane %v3304, %v3458
    %v3460 = vlaneseq
    %v3461 = vshrl.u32 %v3460, 7
    %v3462 = vsub.s32 3, %v3461
    %v3463 = vrot.slane %v3305, %v3462
    %v3464 = vlaneseq
    %v3465 = vshrl.u32 %v3464, 7
    %v3466 = vsub.s32 7, %v3465
    %v3467 = vrot.slane %v3305, %v3466
    %v3472 = vlaneseq
    %v3473 = vshrl.u32 %v3472, 7
    %v3474 = vsub.s32 3, %v3473
    %v3475 = vrot.slane %v3455, %v3474
    %v3476 = vlaneseq
    %v3477 = vshrl.u32 %v3476, 7
    %v3478 = vsub.s32 3, %v3477
    %v3479 = vrot.slane %v3459, %v3478
    %v3480 = vlaneseq
    %v3481 = vshrl.u32 %v3480, 7
    %v3482 = vsub.s32 3, %v3481
    %v3483 = vrot.slane %v3463, %v3482
    %v3484 = vlaneseq
    %v3485 = vshrl.u32 %v3484, 7
    %v3486 = vsub.s32 3, %v3485
    %v3487 = vrot.slane %v3467, %v3486
    %v3488 = vmul.f32 %v352, %v3475
    %v3489 = vmul.f32 %v352, %v3479
    %v3490 = vmul.f32 %v352, %v3483
    %v3491 = vmul.f32 %v352, %v3487
    %v3492 = vadd.f32 %v3448, %v3488
    %v3493 = vadd.f32 %v3449, %v3489
    %v3494 = vadd.f32 %v3450, %v3490
    %v3495 = vadd.f32 %v3451, %v3491
    %v3496 = vmul.f32 %v3492, %v3492
    %v3497 = vmul.f32 %v3493, %v3493
    %v3498 = vmul.f32 %v3494, %v3494
    %v3499 = vmul.f32 %v3495, %v3495
    %v3500 = vsel %vm402, %v3496, 0.0
    %v3501 = vsel %vm402, %v3497, 0.0
    %v3502 = vadd.f32 %v3500, %v3501
    %v3503 = vsel %vm402, %v3498, 0.0
    %v3504 = vadd.f32 %v3502, %v3503
    %v3505 = vsel %vm402, %v3499, 0.0
    %v3506 = vadd.f32 %v3504, %v3505
    %3507 = vadd.xlane.f32.xlu0 %v3506
    %v3508 = vpop.xlane.xlu0 %3507
    %v3509 = vrot.slane %v3508, 4
    %v3510 = vadd.f32 %v3508, %v3509
    %v3511 = vrot.slane %v3510, 2
    %v3512 = vadd.f32 %v3510, %v3511
    %v3513 = vrot.slane %v3512, 1
    %v3514 = vadd.f32 %v3512, %v3513
    %s3515 = vtos %v3514
    %v3516 = vrcp.pop 2048.0
    %s3517 = vtos %v3516
    %s3518 = smul.f32 %s3515, %s3517
    %v3519 = vstv %s3518
    %v3520 = vrsqrt.pop %v3519
    %s3521 = vtos %v3520
    %v3522 = vstv %s3521
    %v3523 = vmul.f32 %v3492, %v3522
    %v3524 = vmul.f32 %v3493, %v3522
    %v3525 = vmul.f32 %v3494, %v3522
    %v3526 = vmul.f32 %v3495, %v3522
    %v3527 = vlaneseq
    %v3528 = vshrl.u32 %v3527, 7
    %v3529 = vsub.s32 0, %v3528
    %v3530 = vrot.slane %v3523, %v3529
    %v3531 = vlaneseq
    %v3532 = vshrl.u32 %v3531, 7
    %v3533 = vsub.s32 0, %v3532
    %v3534 = vrot.slane %v3524, %v3533
    %v3535 = vlaneseq
    %v3536 = vshrl.u32 %v3535, 7
    %v3537 = vsub.s32 0, %v3536
    %v3538 = vrot.slane %v3525, %v3537
    %v3539 = vlaneseq
    %v3540 = vshrl.u32 %v3539, 7
    %v3541 = vsub.s32 0, %v3540
    %v3542 = vrot.slane %v3526, %v3541
    %v3543 = vmul.f32 %v433, %v3530
    %v3544 = vmul.f32 %v433, %v3534
    %v3545 = vmul.f32 %v433, %v3538
    %v3546 = vmul.f32 %v433, %v3542
    %v3547 = vmul.f32 %v438, %v3530
    %v3548 = vmul.f32 %v438, %v3534
    %v3549 = vmul.f32 %v438, %v3538
    %v3550 = vmul.f32 %v438, %v3542
    %v3551 = vmul.f32 %v443, %v3530
    %v3552 = vmul.f32 %v443, %v3534
    %v3553 = vmul.f32 %v443, %v3538
    %v3554 = vmul.f32 %v443, %v3542
    %v3555 = vmul.f32 %v448, %v3530
    %v3556 = vmul.f32 %v448, %v3534
    %v3557 = vmul.f32 %v448, %v3538
    %v3558 = vmul.f32 %v448, %v3542
    %v3559 = vadd.f32 %v165, %v3543
    %v3560 = vadd.f32 %v165, %v3544
    %v3561 = vadd.f32 %v165, %v3545
    %v3562 = vadd.f32 %v165, %v3546
    %v3563 = vadd.f32 %v170, %v3547
    %v3564 = vadd.f32 %v170, %v3548
    %v3565 = vadd.f32 %v170, %v3549
    %v3566 = vadd.f32 %v170, %v3550
    %v3567 = vadd.f32 %v175, %v3551
    %v3568 = vadd.f32 %v175, %v3552
    %v3569 = vadd.f32 %v175, %v3553
    %v3570 = vadd.f32 %v175, %v3554
    %v3571 = vadd.f32 %v180, %v3555
    %v3572 = vadd.f32 %v180, %v3556
    %v3573 = vadd.f32 %v180, %v3557
    %v3574 = vadd.f32 %v180, %v3558
    %v3575 = vlaneseq
    %v3576 = vshrl.u32 %v3575, 7
    %v3577 = vsub.s32 1, %v3576
    %v3578 = vrot.slane %v3523, %v3577
    %v3579 = vlaneseq
    %v3580 = vshrl.u32 %v3579, 7
    %v3581 = vsub.s32 1, %v3580
    %v3582 = vrot.slane %v3524, %v3581
    %v3583 = vlaneseq
    %v3584 = vshrl.u32 %v3583, 7
    %v3585 = vsub.s32 1, %v3584
    %v3586 = vrot.slane %v3525, %v3585
    %v3587 = vlaneseq
    %v3588 = vshrl.u32 %v3587, 7
    %v3589 = vsub.s32 1, %v3588
    %v3590 = vrot.slane %v3526, %v3589
    %v3591 = vmul.f32 %v501, %v3578
    %v3592 = vmul.f32 %v501, %v3582
    %v3593 = vmul.f32 %v501, %v3586
    %v3594 = vmul.f32 %v501, %v3590
    %v3595 = vmul.f32 %v506, %v3578
    %v3596 = vmul.f32 %v506, %v3582
    %v3597 = vmul.f32 %v506, %v3586
    %v3598 = vmul.f32 %v506, %v3590
    %v3599 = vmul.f32 %v511, %v3578
    %v3600 = vmul.f32 %v511, %v3582
    %v3601 = vmul.f32 %v511, %v3586
    %v3602 = vmul.f32 %v511, %v3590
    %v3603 = vmul.f32 %v516, %v3578
    %v3604 = vmul.f32 %v516, %v3582
    %v3605 = vmul.f32 %v516, %v3586
    %v3606 = vmul.f32 %v516, %v3590
    %v3607 = vadd.f32 %v3559, %v3591
    %v3608 = vadd.f32 %v3560, %v3592
    %v3609 = vadd.f32 %v3561, %v3593
    %v3610 = vadd.f32 %v3562, %v3594
    %v3611 = vadd.f32 %v3563, %v3595
    %v3612 = vadd.f32 %v3564, %v3596
    %v3613 = vadd.f32 %v3565, %v3597
    %v3614 = vadd.f32 %v3566, %v3598
    %v3615 = vadd.f32 %v3567, %v3599
    %v3616 = vadd.f32 %v3568, %v3600
    %v3617 = vadd.f32 %v3569, %v3601
    %v3618 = vadd.f32 %v3570, %v3602
    %v3619 = vadd.f32 %v3571, %v3603
    %v3620 = vadd.f32 %v3572, %v3604
    %v3621 = vadd.f32 %v3573, %v3605
    %v3622 = vadd.f32 %v3574, %v3606
    %v3623 = vlaneseq
    %v3624 = vshrl.u32 %v3623, 7
    %v3625 = vsub.s32 2, %v3624
    %v3626 = vrot.slane %v3523, %v3625
    %v3627 = vlaneseq
    %v3628 = vshrl.u32 %v3627, 7
    %v3629 = vsub.s32 2, %v3628
    %v3630 = vrot.slane %v3524, %v3629
    %v3631 = vlaneseq
    %v3632 = vshrl.u32 %v3631, 7
    %v3633 = vsub.s32 2, %v3632
    %v3634 = vrot.slane %v3525, %v3633
    %v3635 = vlaneseq
    %v3636 = vshrl.u32 %v3635, 7
    %v3637 = vsub.s32 2, %v3636
    %v3638 = vrot.slane %v3526, %v3637
    %v3639 = vmul.f32 %v569, %v3626
    %v3640 = vmul.f32 %v569, %v3630
    %v3641 = vmul.f32 %v569, %v3634
    %v3642 = vmul.f32 %v569, %v3638
    %v3643 = vmul.f32 %v574, %v3626
    %v3644 = vmul.f32 %v574, %v3630
    %v3645 = vmul.f32 %v574, %v3634
    %v3646 = vmul.f32 %v574, %v3638
    %v3647 = vmul.f32 %v579, %v3626
    %v3648 = vmul.f32 %v579, %v3630
    %v3649 = vmul.f32 %v579, %v3634
    %v3650 = vmul.f32 %v579, %v3638
    %v3651 = vmul.f32 %v584, %v3626
    %v3652 = vmul.f32 %v584, %v3630
    %v3653 = vmul.f32 %v584, %v3634
    %v3654 = vmul.f32 %v584, %v3638
    %v3655 = vadd.f32 %v3607, %v3639
    %v3656 = vadd.f32 %v3608, %v3640
    %v3657 = vadd.f32 %v3609, %v3641
    %v3658 = vadd.f32 %v3610, %v3642
    %v3659 = vadd.f32 %v3611, %v3643
    %v3660 = vadd.f32 %v3612, %v3644
    %v3661 = vadd.f32 %v3613, %v3645
    %v3662 = vadd.f32 %v3614, %v3646
    %v3663 = vadd.f32 %v3615, %v3647
    %v3664 = vadd.f32 %v3616, %v3648
    %v3665 = vadd.f32 %v3617, %v3649
    %v3666 = vadd.f32 %v3618, %v3650
    %v3667 = vadd.f32 %v3619, %v3651
    %v3668 = vadd.f32 %v3620, %v3652
    %v3669 = vadd.f32 %v3621, %v3653
    %v3670 = vadd.f32 %v3622, %v3654
    %v3671 = vlaneseq
    %v3672 = vshrl.u32 %v3671, 7
    %v3673 = vsub.s32 3, %v3672
    %v3674 = vrot.slane %v3523, %v3673
    %v3675 = vlaneseq
    %v3676 = vshrl.u32 %v3675, 7
    %v3677 = vsub.s32 3, %v3676
    %v3678 = vrot.slane %v3524, %v3677
    %v3679 = vlaneseq
    %v3680 = vshrl.u32 %v3679, 7
    %v3681 = vsub.s32 3, %v3680
    %v3682 = vrot.slane %v3525, %v3681
    %v3683 = vlaneseq
    %v3684 = vshrl.u32 %v3683, 7
    %v3685 = vsub.s32 3, %v3684
    %v3686 = vrot.slane %v3526, %v3685
    %v3687 = vmul.f32 %v637, %v3674
    %v3688 = vmul.f32 %v637, %v3678
    %v3689 = vmul.f32 %v637, %v3682
    %v3690 = vmul.f32 %v637, %v3686
    %v3691 = vmul.f32 %v642, %v3674
    %v3692 = vmul.f32 %v642, %v3678
    %v3693 = vmul.f32 %v642, %v3682
    %v3694 = vmul.f32 %v642, %v3686
    %v3695 = vmul.f32 %v647, %v3674
    %v3696 = vmul.f32 %v647, %v3678
    %v3697 = vmul.f32 %v647, %v3682
    %v3698 = vmul.f32 %v647, %v3686
    %v3699 = vmul.f32 %v652, %v3674
    %v3700 = vmul.f32 %v652, %v3678
    %v3701 = vmul.f32 %v652, %v3682
    %v3702 = vmul.f32 %v652, %v3686
    %v3703 = vadd.f32 %v3655, %v3687
    %v3704 = vadd.f32 %v3656, %v3688
    %v3705 = vadd.f32 %v3657, %v3689
    %v3706 = vadd.f32 %v3658, %v3690
    %v3707 = vadd.f32 %v3659, %v3691
    %v3708 = vadd.f32 %v3660, %v3692
    %v3709 = vadd.f32 %v3661, %v3693
    %v3710 = vadd.f32 %v3662, %v3694
    %v3711 = vadd.f32 %v3663, %v3695
    %v3712 = vadd.f32 %v3664, %v3696
    %v3713 = vadd.f32 %v3665, %v3697
    %v3714 = vadd.f32 %v3666, %v3698
    %v3715 = vadd.f32 %v3667, %v3699
    %v3716 = vadd.f32 %v3668, %v3700
    %v3717 = vadd.f32 %v3669, %v3701
    %v3718 = vadd.f32 %v3670, %v3702
    %v3719 = vmul.f32 %v705, %v3103
    %v3720 = vmul.f32 %v705, %v3107
    %v3721 = vmul.f32 %v705, %v3111
    %v3722 = vmul.f32 %v705, %v3115
    %v3723 = vmul.f32 %v710, %v3103
    %v3724 = vmul.f32 %v710, %v3107
    %v3725 = vmul.f32 %v710, %v3111
    %v3726 = vmul.f32 %v710, %v3115
    %v3727 = vmul.f32 %v715, %v3103
    %v3728 = vmul.f32 %v715, %v3107
    %v3729 = vmul.f32 %v715, %v3111
    %v3730 = vmul.f32 %v715, %v3115
    %v3731 = vmul.f32 %v720, %v3103
    %v3732 = vmul.f32 %v720, %v3107
    %v3733 = vmul.f32 %v720, %v3111
    %v3734 = vmul.f32 %v720, %v3115
    %v3735 = vadd.f32 %v3703, %v3719
    %v3736 = vadd.f32 %v3704, %v3720
    %v3737 = vadd.f32 %v3705, %v3721
    %v3738 = vadd.f32 %v3706, %v3722
    %v3739 = vadd.f32 %v3707, %v3723
    %v3740 = vadd.f32 %v3708, %v3724
    %v3741 = vadd.f32 %v3709, %v3725
    %v3742 = vadd.f32 %v3710, %v3726
    %v3743 = vadd.f32 %v3711, %v3727
    %v3744 = vadd.f32 %v3712, %v3728
    %v3745 = vadd.f32 %v3713, %v3729
    %v3746 = vadd.f32 %v3714, %v3730
    %v3747 = vadd.f32 %v3715, %v3731
    %v3748 = vadd.f32 %v3716, %v3732
    %v3749 = vadd.f32 %v3717, %v3733
    %v3750 = vadd.f32 %v3718, %v3734
    %v3751 = vmul.f32 %v745, %v3127
    %v3752 = vmul.f32 %v745, %v3131
    %v3753 = vmul.f32 %v745, %v3135
    %v3754 = vmul.f32 %v745, %v3139
    %v3755 = vmul.f32 %v750, %v3127
    %v3756 = vmul.f32 %v750, %v3131
    %v3757 = vmul.f32 %v750, %v3135
    %v3758 = vmul.f32 %v750, %v3139
    %v3759 = vmul.f32 %v755, %v3127
    %v3760 = vmul.f32 %v755, %v3131
    %v3761 = vmul.f32 %v755, %v3135
    %v3762 = vmul.f32 %v755, %v3139
    %v3763 = vmul.f32 %v760, %v3127
    %v3764 = vmul.f32 %v760, %v3131
    %v3765 = vmul.f32 %v760, %v3135
    %v3766 = vmul.f32 %v760, %v3139
    %v3767 = vadd.f32 %v3735, %v3751
    %v3768 = vadd.f32 %v3736, %v3752
    %v3769 = vadd.f32 %v3737, %v3753
    %v3770 = vadd.f32 %v3738, %v3754
    %v3771 = vadd.f32 %v3739, %v3755
    %v3772 = vadd.f32 %v3740, %v3756
    %v3773 = vadd.f32 %v3741, %v3757
    %v3774 = vadd.f32 %v3742, %v3758
    %v3775 = vadd.f32 %v3743, %v3759
    %v3776 = vadd.f32 %v3744, %v3760
    %v3777 = vadd.f32 %v3745, %v3761
    %v3778 = vadd.f32 %v3746, %v3762
    %v3779 = vadd.f32 %v3747, %v3763
    %v3780 = vadd.f32 %v3748, %v3764
    %v3781 = vadd.f32 %v3749, %v3765
    %v3782 = vadd.f32 %v3750, %v3766
    %v3783 = vmul.f32 %v785, %v3151
    %v3784 = vmul.f32 %v785, %v3155
    %v3785 = vmul.f32 %v785, %v3159
    %v3786 = vmul.f32 %v785, %v3163
    %v3787 = vmul.f32 %v790, %v3151
    %v3788 = vmul.f32 %v790, %v3155
    %v3789 = vmul.f32 %v790, %v3159
    %v3790 = vmul.f32 %v790, %v3163
    %v3791 = vmul.f32 %v795, %v3151
    %v3792 = vmul.f32 %v795, %v3155
    %v3793 = vmul.f32 %v795, %v3159
    %v3794 = vmul.f32 %v795, %v3163
    %v3795 = vmul.f32 %v800, %v3151
    %v3796 = vmul.f32 %v800, %v3155
    %v3797 = vmul.f32 %v800, %v3159
    %v3798 = vmul.f32 %v800, %v3163
    %v3799 = vadd.f32 %v3767, %v3783
    %v3800 = vadd.f32 %v3768, %v3784
    %v3801 = vadd.f32 %v3769, %v3785
    %v3802 = vadd.f32 %v3770, %v3786
    %v3803 = vadd.f32 %v3771, %v3787
    %v3804 = vadd.f32 %v3772, %v3788
    %v3805 = vadd.f32 %v3773, %v3789
    %v3806 = vadd.f32 %v3774, %v3790
    %v3807 = vadd.f32 %v3775, %v3791
    %v3808 = vadd.f32 %v3776, %v3792
    %v3809 = vadd.f32 %v3777, %v3793
    %v3810 = vadd.f32 %v3778, %v3794
    %v3811 = vadd.f32 %v3779, %v3795
    %v3812 = vadd.f32 %v3780, %v3796
    %v3813 = vadd.f32 %v3781, %v3797
    %v3814 = vadd.f32 %v3782, %v3798
    %v3815 = vmul.f32 %v825, %v3175
    %v3816 = vmul.f32 %v825, %v3179
    %v3817 = vmul.f32 %v825, %v3183
    %v3818 = vmul.f32 %v825, %v3187
    %v3819 = vmul.f32 %v830, %v3175
    %v3820 = vmul.f32 %v830, %v3179
    %v3821 = vmul.f32 %v830, %v3183
    %v3822 = vmul.f32 %v830, %v3187
    %v3823 = vmul.f32 %v835, %v3175
    %v3824 = vmul.f32 %v835, %v3179
    %v3825 = vmul.f32 %v835, %v3183
    %v3826 = vmul.f32 %v835, %v3187
    %v3827 = vmul.f32 %v840, %v3175
    %v3828 = vmul.f32 %v840, %v3179
    %v3829 = vmul.f32 %v840, %v3183
    %v3830 = vmul.f32 %v840, %v3187
    %v3831 = vadd.f32 %v3799, %v3815
    %v3832 = vadd.f32 %v3800, %v3816
    %v3833 = vadd.f32 %v3801, %v3817
    %v3834 = vadd.f32 %v3802, %v3818
    %v3835 = vadd.f32 %v3803, %v3819
    %v3836 = vadd.f32 %v3804, %v3820
    %v3837 = vadd.f32 %v3805, %v3821
    %v3838 = vadd.f32 %v3806, %v3822
    %v3839 = vadd.f32 %v3807, %v3823
    %v3840 = vadd.f32 %v3808, %v3824
    %v3841 = vadd.f32 %v3809, %v3825
    %v3842 = vadd.f32 %v3810, %v3826
    %v3843 = vadd.f32 %v3811, %v3827
    %v3844 = vadd.f32 %v3812, %v3828
    %v3845 = vadd.f32 %v3813, %v3829
    %v3846 = vadd.f32 %v3814, %v3830
    %v3847 = vmul.f32 %v865, %v3199
    %v3848 = vmul.f32 %v865, %v3203
    %v3849 = vmul.f32 %v865, %v3207
    %v3850 = vmul.f32 %v865, %v3211
    %v3851 = vmul.f32 %v870, %v3199
    %v3852 = vmul.f32 %v870, %v3203
    %v3853 = vmul.f32 %v870, %v3207
    %v3854 = vmul.f32 %v870, %v3211
    %v3855 = vmul.f32 %v875, %v3199
    %v3856 = vmul.f32 %v875, %v3203
    %v3857 = vmul.f32 %v875, %v3207
    %v3858 = vmul.f32 %v875, %v3211
    %v3859 = vmul.f32 %v880, %v3199
    %v3860 = vmul.f32 %v880, %v3203
    %v3861 = vmul.f32 %v880, %v3207
    %v3862 = vmul.f32 %v880, %v3211
    %v3863 = vadd.f32 %v3831, %v3847
    %v3864 = vadd.f32 %v3832, %v3848
    %v3865 = vadd.f32 %v3833, %v3849
    %v3866 = vadd.f32 %v3834, %v3850
    %v3867 = vadd.f32 %v3835, %v3851
    %v3868 = vadd.f32 %v3836, %v3852
    %v3869 = vadd.f32 %v3837, %v3853
    %v3870 = vadd.f32 %v3838, %v3854
    %v3871 = vadd.f32 %v3839, %v3855
    %v3872 = vadd.f32 %v3840, %v3856
    %v3873 = vadd.f32 %v3841, %v3857
    %v3874 = vadd.f32 %v3842, %v3858
    %v3875 = vadd.f32 %v3843, %v3859
    %v3876 = vadd.f32 %v3844, %v3860
    %v3877 = vadd.f32 %v3845, %v3861
    %v3878 = vadd.f32 %v3846, %v3862
    %v3879 = vmul.f32 %v905, %v3223
    %v3880 = vmul.f32 %v905, %v3227
    %v3881 = vmul.f32 %v905, %v3231
    %v3882 = vmul.f32 %v905, %v3235
    %v3883 = vmul.f32 %v910, %v3223
    %v3884 = vmul.f32 %v910, %v3227
    %v3885 = vmul.f32 %v910, %v3231
    %v3886 = vmul.f32 %v910, %v3235
    %v3887 = vmul.f32 %v915, %v3223
    %v3888 = vmul.f32 %v915, %v3227
    %v3889 = vmul.f32 %v915, %v3231
    %v3890 = vmul.f32 %v915, %v3235
    %v3891 = vmul.f32 %v920, %v3223
    %v3892 = vmul.f32 %v920, %v3227
    %v3893 = vmul.f32 %v920, %v3231
    %v3894 = vmul.f32 %v920, %v3235
    %v3895 = vadd.f32 %v3863, %v3879
    %v3896 = vadd.f32 %v3864, %v3880
    %v3897 = vadd.f32 %v3865, %v3881
    %v3898 = vadd.f32 %v3866, %v3882
    %v3899 = vadd.f32 %v3867, %v3883
    %v3900 = vadd.f32 %v3868, %v3884
    %v3901 = vadd.f32 %v3869, %v3885
    %v3902 = vadd.f32 %v3870, %v3886
    %v3903 = vadd.f32 %v3871, %v3887
    %v3904 = vadd.f32 %v3872, %v3888
    %v3905 = vadd.f32 %v3873, %v3889
    %v3906 = vadd.f32 %v3874, %v3890
    %v3907 = vadd.f32 %v3875, %v3891
    %v3908 = vadd.f32 %v3876, %v3892
    %v3909 = vadd.f32 %v3877, %v3893
    %v3910 = vadd.f32 %v3878, %v3894
    %v3911 = vmul.f32 %v945, %v3247
    %v3912 = vmul.f32 %v945, %v3251
    %v3913 = vmul.f32 %v945, %v3255
    %v3914 = vmul.f32 %v945, %v3259
    %v3915 = vmul.f32 %v950, %v3247
    %v3916 = vmul.f32 %v950, %v3251
    %v3917 = vmul.f32 %v950, %v3255
    %v3918 = vmul.f32 %v950, %v3259
    %v3919 = vmul.f32 %v955, %v3247
    %v3920 = vmul.f32 %v955, %v3251
    %v3921 = vmul.f32 %v955, %v3255
    %v3922 = vmul.f32 %v955, %v3259
    %v3923 = vmul.f32 %v960, %v3247
    %v3924 = vmul.f32 %v960, %v3251
    %v3925 = vmul.f32 %v960, %v3255
    %v3926 = vmul.f32 %v960, %v3259
    %v3927 = vadd.f32 %v3895, %v3911
    %v3928 = vadd.f32 %v3896, %v3912
    %v3929 = vadd.f32 %v3897, %v3913
    %v3930 = vadd.f32 %v3898, %v3914
    %v3931 = vadd.f32 %v3899, %v3915
    %v3932 = vadd.f32 %v3900, %v3916
    %v3933 = vadd.f32 %v3901, %v3917
    %v3934 = vadd.f32 %v3902, %v3918
    %v3935 = vadd.f32 %v3903, %v3919
    %v3936 = vadd.f32 %v3904, %v3920
    %v3937 = vadd.f32 %v3905, %v3921
    %v3938 = vadd.f32 %v3906, %v3922
    %v3939 = vadd.f32 %v3907, %v3923
    %v3940 = vadd.f32 %v3908, %v3924
    %v3941 = vadd.f32 %v3909, %v3925
    %v3942 = vadd.f32 %v3910, %v3926
    %v3943 = vmul.f32 %v985, %v3271
    %v3944 = vmul.f32 %v985, %v3275
    %v3945 = vmul.f32 %v985, %v3279
    %v3946 = vmul.f32 %v985, %v3283
    %v3947 = vmul.f32 %v990, %v3271
    %v3948 = vmul.f32 %v990, %v3275
    %v3949 = vmul.f32 %v990, %v3279
    %v3950 = vmul.f32 %v990, %v3283
    %v3951 = vmul.f32 %v995, %v3271
    %v3952 = vmul.f32 %v995, %v3275
    %v3953 = vmul.f32 %v995, %v3279
    %v3954 = vmul.f32 %v995, %v3283
    %v3955 = vmul.f32 %v1000, %v3271
    %v3956 = vmul.f32 %v1000, %v3275
    %v3957 = vmul.f32 %v1000, %v3279
    %v3958 = vmul.f32 %v1000, %v3283
    %v3959 = vadd.f32 %v3927, %v3943
    %v3960 = vadd.f32 %v3928, %v3944
    %v3961 = vadd.f32 %v3929, %v3945
    %v3962 = vadd.f32 %v3930, %v3946
    %v3963 = vadd.f32 %v3931, %v3947
    %v3964 = vadd.f32 %v3932, %v3948
    %v3965 = vadd.f32 %v3933, %v3949
    %v3966 = vadd.f32 %v3934, %v3950
    %v3967 = vadd.f32 %v3935, %v3951
    %v3968 = vadd.f32 %v3936, %v3952
    %v3969 = vadd.f32 %v3937, %v3953
    %v3970 = vadd.f32 %v3938, %v3954
    %v3971 = vadd.f32 %v3939, %v3955
    %v3972 = vadd.f32 %v3940, %v3956
    %v3973 = vadd.f32 %v3941, %v3957
    %v3974 = vadd.f32 %v3942, %v3958
    %v3975 = vxor.u32 %v3959, 2147483648
    %v3976 = vxor.u32 %v3960, 2147483648
    %v3977 = vxor.u32 %v3961, 2147483648
    %v3978 = vxor.u32 %v3962, 2147483648
    %v3979 = vmul.f32 %v3975, 1.442695
    %v3980 = vpow.pop %v3979
    %v3981 = vmul.f32 %v3976, 1.442695
    %v3982 = vpow.pop %v3981
    %v3983 = vmul.f32 %v3977, 1.442695
    %v3984 = vpow.pop %v3983
    %v3985 = vmul.f32 %v3978, 1.442695
    %v3986 = vpow.pop %v3985
    %v3987 = vadd.f32 %v3980, 1.0
    %v3988 = vadd.f32 %v3982, 1.0
    %v3989 = vadd.f32 %v3984, 1.0
    %v3990 = vadd.f32 %v3986, 1.0
    %v3991 = vrcp.pop %v3987
    %v3992 = vmul.f32 1.0, %v3991
    %v3993 = vrcp.pop %v3988
    %v3994 = vmul.f32 1.0, %v3993
    %v3995 = vrcp.pop %v3989
    %v3996 = vmul.f32 1.0, %v3995
    %v3997 = vrcp.pop %v3990
    %v3998 = vmul.f32 1.0, %v3997
    %v3999 = vxor.u32 %v3963, 2147483648
    %v4000 = vxor.u32 %v3964, 2147483648
    %v4001 = vxor.u32 %v3965, 2147483648
    %v4002 = vxor.u32 %v3966, 2147483648
    %v4003 = vmul.f32 %v3999, 1.442695
    %v4004 = vpow.pop %v4003
    %v4005 = vmul.f32 %v4000, 1.442695
    %v4006 = vpow.pop %v4005
    %v4007 = vmul.f32 %v4001, 1.442695
    %v4008 = vpow.pop %v4007
    %v4009 = vmul.f32 %v4002, 1.442695
    %v4010 = vpow.pop %v4009
    %v4011 = vadd.f32 %v4004, 1.0
    %v4012 = vadd.f32 %v4006, 1.0
    %v4013 = vadd.f32 %v4008, 1.0
    %v4014 = vadd.f32 %v4010, 1.0
    %v4015 = vrcp.pop %v4011
    %v4016 = vmul.f32 1.0, %v4015
    %v4017 = vrcp.pop %v4012
    %v4018 = vmul.f32 1.0, %v4017
    %v4019 = vrcp.pop %v4013
    %v4020 = vmul.f32 1.0, %v4019
    %v4021 = vrcp.pop %v4014
    %v4022 = vmul.f32 1.0, %v4021
    %v4023 = vtanh.pop %v3967
    %v4024 = vtanh.pop %v3968
    %v4025 = vtanh.pop %v3969
    %v4026 = vtanh.pop %v3970
    %v4027 = vxor.u32 %v3971, 2147483648
    %v4028 = vxor.u32 %v3972, 2147483648
    %v4029 = vxor.u32 %v3973, 2147483648
    %v4030 = vxor.u32 %v3974, 2147483648
    %v4031 = vmul.f32 %v4027, 1.442695
    %v4032 = vpow.pop %v4031
    %v4033 = vmul.f32 %v4028, 1.442695
    %v4034 = vpow.pop %v4033
    %v4035 = vmul.f32 %v4029, 1.442695
    %v4036 = vpow.pop %v4035
    %v4037 = vmul.f32 %v4030, 1.442695
    %v4038 = vpow.pop %v4037
    %v4039 = vadd.f32 %v4032, 1.0
    %v4040 = vadd.f32 %v4034, 1.0
    %v4041 = vadd.f32 %v4036, 1.0
    %v4042 = vadd.f32 %v4038, 1.0
    %v4043 = vrcp.pop %v4039
    %v4044 = vmul.f32 1.0, %v4043
    %v4045 = vrcp.pop %v4040
    %v4046 = vmul.f32 1.0, %v4045
    %v4047 = vrcp.pop %v4041
    %v4048 = vmul.f32 1.0, %v4047
    %v4049 = vrcp.pop %v4042
    %v4050 = vmul.f32 1.0, %v4049
    %v4051 = vmul.f32 %v4016, %v3088
    %v4052 = vmul.f32 %v4018, %v3089
    %v4053 = vmul.f32 %v4020, %v3090
    %v4054 = vmul.f32 %v4022, %v3091
    %v4055 = vmul.f32 %v3992, %v4023
    %v4056 = vmul.f32 %v3994, %v4024
    %v4057 = vmul.f32 %v3996, %v4025
    %v4058 = vmul.f32 %v3998, %v4026
    %v4059 = vadd.f32 %v4051, %v4055
    %v4060 = vadd.f32 %v4052, %v4056
    %v4061 = vadd.f32 %v4053, %v4057
    %v4062 = vadd.f32 %v4054, %v4058
    %v4063 = vtanh.pop %v4059
    %v4064 = vtanh.pop %v4060
    %v4065 = vtanh.pop %v4061
    %v4066 = vtanh.pop %v4062
    %v4067 = vmul.f32 %v4044, %v4063
    %v4068 = vmul.f32 %v4046, %v4064
    %v4069 = vmul.f32 %v4048, %v4065
    %v4070 = vmul.f32 %v4050, %v4066
    %v4071 = vlaneseq
    %v4072 = vshrl.u32 %v4071, 7
    %v4073 = vsub.s32 0, %v4072
    %v4074 = vrot.slane %v4067, %v4073
    %v4075 = vlaneseq
    %v4076 = vshrl.u32 %v4075, 7
    %v4077 = vsub.s32 0, %v4076
    %v4078 = vrot.slane %v4068, %v4077
    %v4079 = vlaneseq
    %v4080 = vshrl.u32 %v4079, 7
    %v4081 = vsub.s32 0, %v4080
    %v4082 = vrot.slane %v4069, %v4081
    %v4083 = vlaneseq
    %v4084 = vshrl.u32 %v4083, 7
    %v4085 = vsub.s32 0, %v4084
    %v4086 = vrot.slane %v4070, %v4085
    %v4087 = vmul.f32 %v1121, %v4074
    %v4088 = vmul.f32 %v1121, %v4078
    %v4089 = vmul.f32 %v1121, %v4082
    %v4090 = vmul.f32 %v1121, %v4086
    %v4091 = vadd.f32 %v186, %v4087
    %v4092 = vadd.f32 %v186, %v4088
    %v4093 = vadd.f32 %v186, %v4089
    %v4094 = vadd.f32 %v186, %v4090
    %v4095 = vlaneseq
    %v4096 = vshrl.u32 %v4095, 7
    %v4097 = vsub.s32 1, %v4096
    %v4098 = vrot.slane %v4067, %v4097
    %v4099 = vlaneseq
    %v4100 = vshrl.u32 %v4099, 7
    %v4101 = vsub.s32 1, %v4100
    %v4102 = vrot.slane %v4068, %v4101
    %v4103 = vlaneseq
    %v4104 = vshrl.u32 %v4103, 7
    %v4105 = vsub.s32 1, %v4104
    %v4106 = vrot.slane %v4069, %v4105
    %v4107 = vlaneseq
    %v4108 = vshrl.u32 %v4107, 7
    %v4109 = vsub.s32 1, %v4108
    %v4110 = vrot.slane %v4070, %v4109
    %v4111 = vmul.f32 %v1150, %v4098
    %v4112 = vmul.f32 %v1150, %v4102
    %v4113 = vmul.f32 %v1150, %v4106
    %v4114 = vmul.f32 %v1150, %v4110
    %v4115 = vadd.f32 %v4091, %v4111
    %v4116 = vadd.f32 %v4092, %v4112
    %v4117 = vadd.f32 %v4093, %v4113
    %v4118 = vadd.f32 %v4094, %v4114
    %v4119 = vlaneseq
    %v4120 = vshrl.u32 %v4119, 7
    %v4121 = vsub.s32 2, %v4120
    %v4122 = vrot.slane %v4067, %v4121
    %v4123 = vlaneseq
    %v4124 = vshrl.u32 %v4123, 7
    %v4125 = vsub.s32 2, %v4124
    %v4126 = vrot.slane %v4068, %v4125
    %v4127 = vlaneseq
    %v4128 = vshrl.u32 %v4127, 7
    %v4129 = vsub.s32 2, %v4128
    %v4130 = vrot.slane %v4069, %v4129
    %v4131 = vlaneseq
    %v4132 = vshrl.u32 %v4131, 7
    %v4133 = vsub.s32 2, %v4132
    %v4134 = vrot.slane %v4070, %v4133
    %v4135 = vmul.f32 %v1179, %v4122
    %v4136 = vmul.f32 %v1179, %v4126
    %v4137 = vmul.f32 %v1179, %v4130
    %v4138 = vmul.f32 %v1179, %v4134
    %v4139 = vadd.f32 %v4115, %v4135
    %v4140 = vadd.f32 %v4116, %v4136
    %v4141 = vadd.f32 %v4117, %v4137
    %v4142 = vadd.f32 %v4118, %v4138
    %v4143 = vlaneseq
    %v4144 = vshrl.u32 %v4143, 7
    %v4145 = vsub.s32 3, %v4144
    %v4146 = vrot.slane %v4067, %v4145
    %v4147 = vlaneseq
    %v4148 = vshrl.u32 %v4147, 7
    %v4149 = vsub.s32 3, %v4148
    %v4150 = vrot.slane %v4068, %v4149
    %v4151 = vlaneseq
    %v4152 = vshrl.u32 %v4151, 7
    %v4153 = vsub.s32 3, %v4152
    %v4154 = vrot.slane %v4069, %v4153
    %v4155 = vlaneseq
    %v4156 = vshrl.u32 %v4155, 7
    %v4157 = vsub.s32 3, %v4156
    %v4158 = vrot.slane %v4070, %v4157
    %v4159 = vmul.f32 %v1208, %v4146
    %v4160 = vmul.f32 %v1208, %v4150
    %v4161 = vmul.f32 %v1208, %v4154
    %v4162 = vmul.f32 %v1208, %v4158
    %v4163 = vadd.f32 %v4139, %v4159
    %v4164 = vadd.f32 %v4140, %v4160
    %v4165 = vadd.f32 %v4141, %v4161
    %v4166 = vadd.f32 %v4142, %v4162
    %v4167 = vlaneseq
    %v4168 = vshrl.u32 %v4167, 7
    %v4169 = vsub.s32 4, %v4168
    %v4170 = vrot.slane %v4067, %v4169
    %v4171 = vlaneseq
    %v4172 = vshrl.u32 %v4171, 7
    %v4173 = vsub.s32 4, %v4172
    %v4174 = vrot.slane %v4068, %v4173
    %v4175 = vlaneseq
    %v4176 = vshrl.u32 %v4175, 7
    %v4177 = vsub.s32 4, %v4176
    %v4178 = vrot.slane %v4069, %v4177
    %v4179 = vlaneseq
    %v4180 = vshrl.u32 %v4179, 7
    %v4181 = vsub.s32 4, %v4180
    %v4182 = vrot.slane %v4070, %v4181
    %v4183 = vmul.f32 %v1237, %v4170
    %v4184 = vmul.f32 %v1237, %v4174
    %v4185 = vmul.f32 %v1237, %v4178
    %v4186 = vmul.f32 %v1237, %v4182
    %v4187 = vadd.f32 %v4163, %v4183
    %v4188 = vadd.f32 %v4164, %v4184
    %v4189 = vadd.f32 %v4165, %v4185
    %v4190 = vadd.f32 %v4166, %v4186
    %v4191 = vlaneseq
    %v4192 = vshrl.u32 %v4191, 7
    %v4193 = vsub.s32 5, %v4192
    %v4194 = vrot.slane %v4067, %v4193
    %v4195 = vlaneseq
    %v4196 = vshrl.u32 %v4195, 7
    %v4197 = vsub.s32 5, %v4196
    %v4198 = vrot.slane %v4068, %v4197
    %v4199 = vlaneseq
    %v4200 = vshrl.u32 %v4199, 7
    %v4201 = vsub.s32 5, %v4200
    %v4202 = vrot.slane %v4069, %v4201
    %v4203 = vlaneseq
    %v4204 = vshrl.u32 %v4203, 7
    %v4205 = vsub.s32 5, %v4204
    %v4206 = vrot.slane %v4070, %v4205
    %v4207 = vmul.f32 %v1266, %v4194
    %v4208 = vmul.f32 %v1266, %v4198
    %v4209 = vmul.f32 %v1266, %v4202
    %v4210 = vmul.f32 %v1266, %v4206
    %v4211 = vadd.f32 %v4187, %v4207
    %v4212 = vadd.f32 %v4188, %v4208
    %v4213 = vadd.f32 %v4189, %v4209
    %v4214 = vadd.f32 %v4190, %v4210
    %v4215 = vlaneseq
    %v4216 = vshrl.u32 %v4215, 7
    %v4217 = vsub.s32 6, %v4216
    %v4218 = vrot.slane %v4067, %v4217
    %v4219 = vlaneseq
    %v4220 = vshrl.u32 %v4219, 7
    %v4221 = vsub.s32 6, %v4220
    %v4222 = vrot.slane %v4068, %v4221
    %v4223 = vlaneseq
    %v4224 = vshrl.u32 %v4223, 7
    %v4225 = vsub.s32 6, %v4224
    %v4226 = vrot.slane %v4069, %v4225
    %v4227 = vlaneseq
    %v4228 = vshrl.u32 %v4227, 7
    %v4229 = vsub.s32 6, %v4228
    %v4230 = vrot.slane %v4070, %v4229
    %v4231 = vmul.f32 %v1295, %v4218
    %v4232 = vmul.f32 %v1295, %v4222
    %v4233 = vmul.f32 %v1295, %v4226
    %v4234 = vmul.f32 %v1295, %v4230
    %v4235 = vadd.f32 %v4211, %v4231
    %v4236 = vadd.f32 %v4212, %v4232
    %v4237 = vadd.f32 %v4213, %v4233
    %v4238 = vadd.f32 %v4214, %v4234
    %v4239 = vlaneseq
    %v4240 = vshrl.u32 %v4239, 7
    %v4241 = vsub.s32 7, %v4240
    %v4242 = vrot.slane %v4067, %v4241
    %v4243 = vlaneseq
    %v4244 = vshrl.u32 %v4243, 7
    %v4245 = vsub.s32 7, %v4244
    %v4246 = vrot.slane %v4068, %v4245
    %v4247 = vlaneseq
    %v4248 = vshrl.u32 %v4247, 7
    %v4249 = vsub.s32 7, %v4248
    %v4250 = vrot.slane %v4069, %v4249
    %v4251 = vlaneseq
    %v4252 = vshrl.u32 %v4251, 7
    %v4253 = vsub.s32 7, %v4252
    %v4254 = vrot.slane %v4070, %v4253
    %v4255 = vmul.f32 %v1324, %v4242
    %v4256 = vmul.f32 %v1324, %v4246
    %v4257 = vmul.f32 %v1324, %v4250
    %v4258 = vmul.f32 %v1324, %v4254
    %v4259 = vadd.f32 %v4235, %v4255
    %v4260 = vadd.f32 %v4236, %v4256
    %v4261 = vadd.f32 %v4237, %v4257
    %v4262 = vadd.f32 %v4238, %v4258
    %v4263 = vmul.f32 %v4259, 0.25
    %v4264 = vmul.f32 %v4260, 0.25
    %v4265 = vmul.f32 %v4261, 0.25
    %v4266 = vmul.f32 %v4262, 0.25
    %v4271 = vcombine.low %v4263, %v4264
    %v4272 = vcombine.low %v4265, %v4266
    %v4275 = vsub.f32 %v3304, %v4271
    %v4276 = vsub.f32 %v3305, %v4272
    %4277 = vst [vmem:[#allocation2] sm:$0xff] %v4275
    %4278 = vst [vmem:[#allocation2 + $0x8] sm:$0xff] %v4276
    %4279 = vst [vmem:[#allocation4] sm:$0xff] %v4067
    %4280 = vst [vmem:[#allocation4 + $0x8] sm:$0xff] %v4068
    %4281 = vst [vmem:[#allocation4 + $0x10] sm:$0xff] %v4069
    %4282 = vst [vmem:[#allocation4 + $0x18] sm:$0xff] %v4070
    %4283 = vst [vmem:[#allocation6] sm:$0xff] %v4059
    %4284 = vst [vmem:[#allocation6 + $0x8] sm:$0xff] %v4060
    %4285 = vst [vmem:[#allocation6 + $0x10] sm:$0xff] %v4061
    %4286 = vst [vmem:[#allocation6 + $0x18] sm:$0xff] %v4062
    %v4287 = vstv %s3518
    %v4288 = vrsqrt.pop %v4287
    %v4289 = vmul.f32 %v4287, %v4288
    %vm4290 = vcmp.eq.f32.partialorder %v4287, inf
    %v4291 = vsel %vm4290, %v4287, %v4289
    %vm4292 = vcmp.eq.f32.partialorder %v4287, 0.0
    %v4293 = vand.u32 %v4287, 2147483648
    %v4294 = vsel %vm4292, %v4293, %v4291
    %s4295 = vtos %v4294
    %v4296 = vstv %s4295
    %vm4297 = vcmask 0
    %4298 = vst.msk [vmem:[#allocation7] sm:$0x1] %vm4297, %v4296
    // Predicated region
    $region42: #{tpu_custom_call.1} parent=1 // pred_check
      _
    $region43: #{tpu_custom_call.1} parent=1 // pred_check_branch
      %4300 = sbr.rel (0) target = $region45
    $region44: #{tpu_custom_call.1} parent=1 // pred_region
      %s4302 = ssub.s32 256, 256
      %4303 = vsyncadd [#allocation3], %s4302
      %s4305 = sshll.u32 [#allocation2], 4
      %s4306 = int_to_ptr.vmem [resolvable:$true] %s4305
      %4308 = dma.vmem_to_hbm [thread:$0]  %s4306, 256, %s10, [#allocation3]
    $region45: #{tpu_custom_call.1} parent=1 // pred_fallthru
      _
    // Predicated region
    $region46: #{tpu_custom_call.1} parent=1 // pred_check
      _
    $region47: #{tpu_custom_call.1} parent=1 // pred_check_branch
      %4310 = sbr.rel (0) target = $region49
    $region48: #{tpu_custom_call.1} parent=1 // pred_region
      %s4312 = ssub.s32 512, 512
      %4313 = vsyncadd [#allocation5], %s4312
      %s4315 = sshll.u32 [#allocation4], 4
      %s4316 = int_to_ptr.vmem [resolvable:$true] %s4315
      %4318 = dma.vmem_to_hbm [thread:$0]  %s4316, 512, %s11, [#allocation5]
    $region49: #{tpu_custom_call.1} parent=1 // pred_fallthru
      _
    // Predicated region
    $region50: #{tpu_custom_call.1} parent=1 // pred_check
      _
    $region51: #{tpu_custom_call.1} parent=1 // pred_check_branch
      %4320 = sbr.rel (0) target = $region53
    $region52: #{tpu_custom_call.1} parent=1 // pred_region
      %s4322 = ssub.s32 512, 512
      %4323 = vsyncadd [#allocation5], %s4322
      %s4325 = sshll.u32 [#allocation6], 4
      %s4326 = int_to_ptr.vmem [resolvable:$true] %s4325
      %4328 = dma.vmem_to_hbm [thread:$0]  %s4326, 512, %s12, [#allocation5]
    $region53: #{tpu_custom_call.1} parent=1 // pred_fallthru
      _
    // Predicated region
    $region54: #{tpu_custom_call.1} parent=1 // pred_check
      _
    $region55: #{tpu_custom_call.1} parent=1 // pred_check_branch
      %4330 = sbr.rel (0) target = $region57
    $region56: #{tpu_custom_call.1} parent=1 // pred_region
      %s4332 = ssub.s32 16, 16
      %4333 = vsyncadd [#allocation8], %s4332
      %s4335 = sshll.u32 [#allocation7], 4
      %s4336 = int_to_ptr.vmem [resolvable:$true] %s4335
      %4338 = dma.vmem_to_hbm [thread:$0]  %s4336, 16, %s13, [#allocation8]
    $region57: #{tpu_custom_call.1} parent=1 // pred_fallthru
      _
    // Predicated region
    $region58: #{tpu_custom_call.1} parent=1 // pred_check
      _
    $region59: #{tpu_custom_call.1} parent=1 // pred_check_branch
      %4340 = sbr.rel (0) target = $region61
    $region60: #{tpu_custom_call.1} parent=1 // pred_region
      %4341 = dma.done [#allocation3], 256
    $region61: #{tpu_custom_call.1} parent=1 // pred_fallthru
      _
    // Predicated region
    $region62: #{tpu_custom_call.1} parent=1 // pred_check
      _
    $region63: #{tpu_custom_call.1} parent=1 // pred_check_branch
      %4343 = sbr.rel (0) target = $region65
    $region64: #{tpu_custom_call.1} parent=1 // pred_region
      %4344 = dma.done [#allocation5], 512
    $region65: #{tpu_custom_call.1} parent=1 // pred_fallthru
      _
    // Predicated region
    $region66: #{tpu_custom_call.1} parent=1 // pred_check
      _
    $region67: #{tpu_custom_call.1} parent=1 // pred_check_branch
      %4346 = sbr.rel (0) target = $region69
    $region68: #{tpu_custom_call.1} parent=1 // pred_region
      %4347 = dma.done [#allocation5], 512
    $region69: #{tpu_custom_call.1} parent=1 // pred_fallthru
      _
    // Predicated region
    $region70: #{tpu_custom_call.1} parent=1 // pred_check
      _
    $region71: #{tpu_custom_call.1} parent=1 // pred_check_branch
      %4349 = sbr.rel (0) target = $region73
    $region72: #{tpu_custom_call.1} parent=1 // pred_region
      %4350 = dma.done [#allocation8], 16
    $region73: #{tpu_custom_call.1} parent=1 // pred_fallthru
      _
    %4351 = vsyncpa [#allocation3], 1
    %4352 = vsyncpa [#allocation5], 1
    %4353 = vsyncpa [#allocation8], 1

</llo_original>
